<compile_context>
chip_gen: v5e
topology: v5e:2x2
jax: 0.10.0
libtpu: 0.0.40
codegen_flags: <defaults>
</compile_context>

<pallas_src>
import functools

import jax
import jax.numpy as jnp
from jax import lax
from jax.experimental import pallas as pl
from jax.experimental.pallas import tpu as pltpu

EPS = 1e-5
# MXU operand dtype AND inter-pass activation storage dtype (accumulation, BN and
# statistics are always f32).  Set to jnp.float32 for bit-faithful f32 convs.
MXU_DTYPE = jnp.bfloat16


@functools.lru_cache(maxsize=None)
def _hw_tuning():
    """(vmem_limit_bytes, tile_m target) per TPU generation."""
    try:
        kind = jax.devices()[0].device_kind.lower()
    except Exception:  # pragma: no cover - defensive
        kind = ""
    if ("v5" in kind) or ("v6" in kind):
        # 128 MiB physical VMEM and lower HBM BW: bigger budget + deeper tiles.
        return 100 * 1024 * 1024, 1024
    # v7x (64 MiB physical VMEM) and unknown chips: conservative.
    return 48 * 1024 * 1024, 512


def _cparams(semantics):
    return pltpu.CompilerParams(dimension_semantics=semantics,
                                vmem_limit_bytes=_hw_tuning()[0])


def _round_up(x, m):
    return (x + m - 1) // m * m


def _pick_tile_m(m):
    """Return (tile_m, m_padded): tile divides m_padded, both multiples of 16."""
    target = _hw_tuning()[1]
    if m <= target:
        t = _round_up(m, 16)
        return t, t
    for t in range(target, 15, -16):            # prefer an exact divisor: no padding
        if m % t == 0:
            return t, m
    # No friendly divisor: pad M up to a multiple of the target tile instead of
    # falling back to one whole-array tile (keeps VMEM bounded at real shapes).
    return target, _round_up(m, target)


def _fold_bn(stats, gamma, beta, count):
    """Fold batch statistics (sum, sumsq) + affine params into per-channel scale/shift."""
    mean = stats[0] / count
    var = jnp.maximum(stats[1] / count - mean * mean, 0.0)   # biased variance
    scale = gamma * lax.rsqrt(var + EPS)
    shift = beta - mean * scale
    return (scale.reshape(1, -1).astype(jnp.float32),
            shift.reshape(1, -1).astype(jnp.float32))


# ---------------------------------------------------------------------------
# Pass A: fused conv1 (1x1, stride folded into x_rows) + shortcut conv (1x1),
#         sharing the x-row tile, plus per-tile partial BN statistics.
# ---------------------------------------------------------------------------
def conv1_shortcut_stats(x_rows, w1m, wsm, tile_m):
    M, Cin = x_rows.shape
    F1 = w1m.shape[1]
    F3 = wsm.shape[1]
    nt = M // tile_m

    def kernel(x_ref, w1_ref, ws_ref, y1_ref, ys_ref, st1_ref, sts_ref):
        xb = x_ref[...]                                   # already MXU_DTYPE (cast in wrapper)
        y1 = jnp.dot(xb, w1_ref[...], preferred_element_type=jnp.float32)
        ys = jnp.dot(xb, ws_ref[...], preferred_element_type=jnp.float32)
        y1_ref[...] = y1.astype(y1_ref.dtype)
        ys_ref[...] = ys.astype(ys_ref.dtype)
        # Per-tile partial statistics (write-only blocks, reduced in the wrapper):
        # keeps the grid fully parallel and avoids a cross-step accumulator.
        st1_ref[0, 0:1, :] = jnp.sum(y1, axis=0, keepdims=True)
        st1_ref[0, 1:2, :] = jnp.sum(y1 * y1, axis=0, keepdims=True)
        sts_ref[0, 0:1, :] = jnp.sum(ys, axis=0, keepdims=True)
        sts_ref[0, 1:2, :] = jnp.sum(ys * ys, axis=0, keepdims=True)

    return pl.pallas_call(
        kernel,
        grid=(nt,),
        in_specs=[pl.BlockSpec((tile_m, Cin), lambda i: (i, 0)),
                  pl.BlockSpec((Cin, F1), lambda i: (0, 0)),
                  pl.BlockSpec((Cin, F3), lambda i: (0, 0))],
        out_specs=[pl.BlockSpec((tile_m, F1), lambda i: (i, 0)),
                   pl.BlockSpec((tile_m, F3), lambda i: (i, 0)),
                   pl.BlockSpec((1, 2, F1), lambda i: (i, 0, 0)),
                   pl.BlockSpec((1, 2, F3), lambda i: (i, 0, 0))],
        out_shape=[jax.ShapeDtypeStruct((M, F1), MXU_DTYPE),
                   jax.ShapeDtypeStruct((M, F3), MXU_DTYPE),
                   jax.ShapeDtypeStruct((nt, 2, F1), jnp.float32),
                   jax.ShapeDtypeStruct((nt, 2, F3), jnp.float32)],
        compiler_params=_cparams(("parallel",)),
    )(x_rows, w1m, wsm)


# ---------------------------------------------------------------------------
# Pass B: BN1 + ReLU fused into the fxf conv (pad=1).  Per image, the normalized
#         activations are written contiguously into an H-padded VMEM scratch; row
#         taps are contiguous dim-0 slices, column taps are 1-sublane shifts of the
#         flattened slab (zero-fill + edge mask) -- no strided whole-image copies.
# ---------------------------------------------------------------------------
def conv2_stats(y1_img, scale1, shift1, w2_taps, f, pad):
    N, Ho, Wo, F1 = y1_img.shape
    F2 = w2_taps.shape[-1]
    HW = Ho * Wo

    def kernel(y1_ref, s1_ref, b1_ref, w2_ref, y2_ref, st_ref, hpad_ref):
        # Zero only the 1-row top/bottom halo.  Re-zeroed every step (2 tiny rows)
        # so the grid stays correct when sharded across TensorCores.
        zhalo = jnp.zeros((pad, Wo, F1), jnp.float32)
        hpad_ref[0:pad, :, :] = zhalo
        hpad_ref[pad + Ho:pad + Ho + pad, :, :] = zhalo

        # BN1 (folded scale/shift, f32 math on the bf16 input) + ReLU, contiguous write.
        h1 = jnp.maximum(
            y1_ref[0].astype(jnp.float32) * s1_ref[...].reshape(1, 1, F1)
            + b1_ref[...].reshape(1, 1, F1), 0.0)
        hpad_ref[pad:pad + Ho, :, :] = h1

        col = lax.broadcasted_iota(jnp.int32, (HW, 1), 0) % Wo
        zrow = jnp.zeros((1, F1), jnp.float32)
        acc = jnp.zeros((HW, F2), jnp.float32)
        for ki in range(f):
            # Contiguous row-slab for kernel row ki (dim-0 slice of the scratch).
            slab = hpad_ref[ki:ki + Ho, :, :].reshape(HW, F1)
            # Column taps: shift the flattened row-major slab by +-1 with zero fill
            # and mask the column that wrapped across an image row boundary.
            left = jnp.where(col == 0, 0.0,
                             jnp.concatenate([zrow, slab[:HW - 1, :]], axis=0))
            right = jnp.where(col == Wo - 1, 0.0,
                              jnp.concatenate([slab[1:, :], zrow], axis=0))
            acc = acc + jnp.dot(left.astype(MXU_DTYPE), w2_ref[ki * f + 0],
                                preferred_element_type=jnp.float32)
            acc = acc + jnp.dot(slab.astype(MXU_DTYPE), w2_ref[ki * f + 1],
                                preferred_element_type=jnp.float32)
            acc = acc + jnp.dot(right.astype(MXU_DTYPE), w2_ref[ki * f + 2],
                                preferred_element_type=jnp.float32)
        y2_ref[...] = acc.astype(y2_ref.dtype)

        st_ref[0, 0:1, :] = jnp.sum(acc, axis=0, keepdims=True)
        st_ref[0, 1:2, :] = jnp.sum(acc * acc, axis=0, keepdims=True)

    return pl.pallas_call(
        kernel,
        grid=(N,),
        in_specs=[pl.BlockSpec((1, Ho, Wo, F1), lambda n: (n, 0, 0, 0)),
                  pl.BlockSpec((1, F1), lambda n: (0, 0)),
                  pl.BlockSpec((1, F1), lambda n: (0, 0)),
                  pl.BlockSpec((f * f, F1, F2), lambda n: (0, 0, 0))],
        out_specs=[pl.BlockSpec((HW, F2), lambda n: (n, 0)),
                   pl.BlockSpec((1, 2, F2), lambda n: (n, 0, 0))],
        out_shape=[jax.ShapeDtypeStruct((N * HW, F2), MXU_DTYPE),
                   jax.ShapeDtypeStruct((N, 2, F2), jnp.float32)],
        scratch_shapes=[pltpu.VMEM((Ho + 2 * pad, Wo, F1), jnp.float32)],
        compiler_params=_cparams(("parallel",)),
    )(y1_img, scale1, shift1, w2_taps)


# ---------------------------------------------------------------------------
# Pass C: BN2 + ReLU fused into conv3 (1x1), plus per-tile partial BN3 statistics.
#         Padded tail rows (if M was padded to the tile) are masked out of the stats.
# ---------------------------------------------------------------------------
def conv3_stats(y2_rows, scale2, shift2, w3m, tile_m, m_true):
    M, F2 = y2_rows.shape
    F3 = w3m.shape[-1]
    nt = M // tile_m

    def kernel(y2_ref, s2_ref, b2_ref, w3_ref, y3_ref, st_ref):
        h2 = jnp.maximum(
            y2_ref[...].astype(jnp.float32) * s2_ref[...] + b2_ref[...], 0.0)
        y3 = jnp.dot(h2.astype(MXU_DTYPE), w3_ref[...],
                     preferred_element_type=jnp.float32)
        y3_ref[...] = y3.astype(y3_ref.dtype)
        y3s = y3
        if M > m_true:   # static: keep padded tail rows out of the BN3 statistics
            row = (pl.program_id(0) * tile_m
                   + lax.broadcasted_iota(jnp.int32, (tile_m, 1), 0))
            y3s = jnp.where(row < m_true, y3, 0.0)
        st_ref[0, 0:1, :] = jnp.sum(y3s, axis=0, keepdims=True)
        st_ref[0, 1:2, :] = jnp.sum(y3s * y3s, axis=0, keepdims=True)

    return pl.pallas_call(
        kernel,
        grid=(nt,),
        in_specs=[pl.BlockSpec((tile_m, F2), lambda i: (i, 0)),
                  pl.BlockSpec((1, F2), lambda i: (0, 0)),
                  pl.BlockSpec((1, F2), lambda i: (0, 0)),
                  pl.BlockSpec((F2, F3), lambda i: (0, 0))],
        out_specs=[pl.BlockSpec((tile_m, F3), lambda i: (i, 0)),
                   pl.BlockSpec((1, 2, F3), lambda i: (i, 0, 0))],
        out_shape=[jax.ShapeDtypeStruct((M, F3), MXU_DTYPE),
                   jax.ShapeDtypeStruct((nt, 2, F3), jnp.float32)],
        compiler_params=_cparams(("parallel",)),
    )(y2_rows, scale2, shift2, w3m)


# ---------------------------------------------------------------------------
# Pass D: BN3(main) + BNs(shortcut) + add + ReLU.  No cross-tile state -> "parallel".
# ---------------------------------------------------------------------------
def bn_add_relu(y3, ys, scale3, shift3, scale_s, shift_s, tile_m):
    M, F3 = y3.shape
    nt = M // tile_m

    def kernel(y3_ref, ys_ref, s3_ref, b3_ref, ss_ref, bs_ref, o_ref):
        main = y3_ref[...].astype(jnp.float32) * s3_ref[...] + b3_ref[...]
        short = ys_ref[...].astype(jnp.float32) * ss_ref[...] + bs_ref[...]
        o_ref[...] = jnp.maximum(main + short, 0.0)

    vec = lambda i: (i, 0)
    row = lambda i: (0, 0)
    return pl.pallas_call(
        kernel,
        grid=(nt,),
        in_specs=[pl.BlockSpec((tile_m, F3), vec),
                  pl.BlockSpec((tile_m, F3), vec),
                  pl.BlockSpec((1, F3), row),
                  pl.BlockSpec((1, F3), row),
                  pl.BlockSpec((1, F3), row),
                  pl.BlockSpec((1, F3), row)],
        out_specs=pl.BlockSpec((tile_m, F3), vec),
        out_shape=jax.ShapeDtypeStruct((M, F3), jnp.float32),
        compiler_params=_cparams(("parallel",)),
    )(y3, ys, scale3, shift3, scale_s, shift_s)


# ---------------------------------------------------------------------------
# Parameter init (matches the PyTorch module's parameter shapes).
# ---------------------------------------------------------------------------
def init_conv_block_params(key, in_channel, f, filters):
    F1, F2, F3 = filters
    ks = jax.random.split(key, 4)

    def conv_w(k, cout, cin, kh, kw):
        fan_in = cin * kh * kw
        return (jax.random.normal(k, (cout, cin, kh, kw), jnp.float32)
                * (1.0 / jnp.sqrt(fan_in)))

    def bn_params(k, c):
        kg, kb = jax.random.split(k)
        gamma = 1.0 + 0.1 * jax.random.normal(kg, (c,), jnp.float32)
        beta = 0.1 * jax.random.normal(kb, (c,), jnp.float32)
        return gamma, beta

    p = {}
    p["w1"] = conv_w(ks[0], F1, in_channel, 1, 1)
    p["w2"] = conv_w(ks[1], F2, F1, f, f)
    p["w3"] = conv_w(ks[2], F3, F2, 1, 1)
    p["ws"] = conv_w(ks[3], F3, in_channel, 1, 1)
    kb = jax.random.split(jax.random.fold_in(key, 7), 4)
    p["g1"], p["b1"] = bn_params(kb[0], F1)
    p["g2"], p["b2"] = bn_params(kb[1], F2)
    p["g3"], p["b3"] = bn_params(kb[2], F3)
    p["gs"], p["bs"] = bn_params(kb[3], F3)
    return p


# ---------------------------------------------------------------------------
# Forward pass.
# ---------------------------------------------------------------------------
@functools.partial(jax.jit, static_argnames=("f", "s"))
def conv_block_forward(x_nchw, params, *, f, s):
    """x_nchw: (N, Cin, H, W) float32  ->  (N, F3, H//s, W//s) float32."""
    N, Cin, H, W = x_nchw.shape
    F1 = params["w1"].shape[0]
    F2 = params["w2"].shape[0]
    F3 = params["w3"].shape[0]
    # The PyTorch module hard-codes padding=1; the residual add only shape-checks for f=3.
    assert f == 3, "ConvBlock's fixed padding=1 requires f == 3"
    assert H % s == 0 and W % s == 0
    Ho, Wo = H // s, W // s
    M = N * Ho * Wo
    tile_m, M_pad = _pick_tile_m(M)
    count = float(M)

    # --- XLA glue: NCHW boundary + stride-s pixel sampling, weights to matmul form ---
    # TODO(synk): with NHWC inputs, fold the stride-s sampling into Pass A's BlockSpec.
    x_rows = jnp.transpose(x_nchw[:, :, ::s, ::s], (0, 2, 3, 1)).reshape(M, Cin)
    x_rows = x_rows.astype(MXU_DTYPE)     # cast once here -> half-width HBM read in Pass A
    if M_pad > M:
        x_rows = jnp.pad(x_rows, ((0, M_pad - M), (0, 0)))   # zero rows: stats unaffected

    w1m = params["w1"].reshape(F1, Cin).T.astype(MXU_DTYPE)                   # (Cin, F1)
    wsm = params["ws"].reshape(F3, Cin).T.astype(MXU_DTYPE)                   # (Cin, F3)
    w2_taps = jnp.transpose(params["w2"], (2, 3, 1, 0)).reshape(f * f, F1, F2)
    w2_taps = w2_taps.astype(MXU_DTYPE)                                       # (f*f, F1, F2)
    w3m = params["w3"].reshape(F3, F2).T.astype(MXU_DTYPE)                    # (F2, F3)

    # Pass A: fused conv1 + shortcut matmuls, partial BN1/BNs statistics.
    y1, ys, st1p, stsp = conv1_shortcut_stats(x_rows, w1m, wsm, tile_m)
    scale1, shift1 = _fold_bn(jnp.sum(st1p, axis=0), params["g1"], params["b1"], count)
    scale_s, shift_s = _fold_bn(jnp.sum(stsp, axis=0), params["gs"], params["bs"], count)

    # Pass B: BN1+ReLU fused into the fxf conv (in-VMEM tap accumulation), BN2 stats.
    y1_img = y1[:M].reshape(N, Ho, Wo, F1)
    y2, st2p = conv2_stats(y1_img, scale1, shift1, w2_taps, f, pad=1)
    scale2, shift2 = _fold_bn(jnp.sum(st2p, axis=0), params["g2"], params["b2"], count)

    # Pass C: BN2+ReLU fused into conv3, BN3 stats (padded tail masked).
    y2p = jnp.pad(y2, ((0, M_pad - M), (0, 0))) if M_pad > M else y2
    y3, st3p = conv3_stats(y2p, scale2, shift2, w3m, tile_m, M)
    scale3, shift3 = _fold_bn(jnp.sum(st3p, axis=0), params["g3"], params["b3"], count)

    # Pass D: BN3(main) + BNs(shortcut) + add + ReLU.
    out_rows = bn_add_relu(y3, ys, scale3, shift3, scale_s, shift_s, tile_m)

    out = out_rows[:M].reshape(N, Ho, Wo, F3)
    return jnp.transpose(out, (0, 3, 1, 2))


# ---------------------------------------------------------------------------
# Pure-JAX reference (XLA convolutions) for a sanity check.
# ---------------------------------------------------------------------------
def _bn_ref(y, gamma, beta):
    mean = jnp.mean(y, axis=(0, 2, 3), keepdims=True)
    var = jnp.mean((y - mean) ** 2, axis=(0, 2, 3), keepdims=True)
    g = gamma.reshape(1, -1, 1, 1)
    b = beta.reshape(1, -1, 1, 1)
    return g * (y - mean) * lax.rsqrt(var + EPS) + b


def _reference_forward(x, p, f, s):
    def conv(h, w, stride, pad):
        return lax.conv_general_dilated(
            h, w, (stride, stride), [(pad, pad), (pad, pad)],
            dimension_numbers=("NCHW", "OIHW", "NCHW"))
    h = jax.nn.relu(_bn_ref(conv(x, p["w1"], s, 0), p["g1"], p["b1"]))
    h = jax.nn.relu(_bn_ref(conv(h, p["w2"], 1, 1), p["g2"], p["b2"]))
    h = _bn_ref(conv(h, p["w3"], 1, 0), p["g3"], p["b3"])
    sc = _bn_ref(conv(x, p["ws"], s, 0), p["gs"], p["bs"])
    return jax.nn.relu(h + sc)


if __name__ == "__main__":
    # Small shapes consistent with the module: ConvBlock(in_channel=4, f=3, filters=(8,8,16), s=2)
    in_channel, f, filters, s = 4, 3, (8, 8, 16), 2
    N, H, W = 2, 16, 16

    key = jax.random.PRNGKey(0)
    kx, kp = jax.random.split(key)
    x = jax.random.normal(kx, (N, in_channel, H, W), jnp.float32)
    params = init_conv_block_params(kp, in_channel, f, filters)

    y = conv_block_forward(x, params, f=f, s=s)
    y = jax.block_until_ready(y)

    assert y.shape == (N, filters[2], H // s, W // s), y.shape
    assert bool(jnp.all(y >= 0.0))          # post-ReLU
    # Sanity check vs. pure-JAX reference (tolerance sized for bf16 MXU + bf16 storage).
    y_ref = _reference_forward(x, params, f, s)
    max_err = float(jnp.max(jnp.abs(y - y_ref)))
    assert max_err < 0.3, f"max abs err vs reference: {max_err}"
    print("KERNEL_OK")
</pallas_src>

<mosaic_0001>
module attributes {stable_mosaic.version = 11 : i64} {
  func.func @kernel(%arg0: i32, %arg1: memref<128x4xbf16, #tpu.memory_space<vmem>>, %arg2: memref<4x8xbf16, #tpu.memory_space<vmem>>, %arg3: memref<4x16xbf16, #tpu.memory_space<vmem>>, %arg4: memref<128x8xbf16, #tpu.memory_space<vmem>>, %arg5: memref<128x16xbf16, #tpu.memory_space<vmem>>, %arg6: memref<1x2x8xf32, #tpu.memory_space<vmem>>, %arg7: memref<1x2x16xf32, #tpu.memory_space<vmem>>) attributes {dimension_semantics = [#tpu.dimension_semantics<parallel>], iteration_bounds = array<i64: 1>, scalar_prefetch = 0 : i64, scratch_operands = 0 : i64, tpu.core_type = #tpu.core_type<tc>, window_params = [{transform_indices = @transform_0, window_bounds = array<i64: 128, 4>}, {pipeline_mode = #tpu.pipeline_mode<synchronous>, transform_indices = @transform_1, window_bounds = array<i64: 4, 8>}, {pipeline_mode = #tpu.pipeline_mode<synchronous>, transform_indices = @transform_2, window_bounds = array<i64: 4, 16>}, {transform_indices = @transform_3, window_bounds = array<i64: 128, 8>}, {transform_indices = @transform_4, window_bounds = array<i64: 128, 16>}, {transform_indices = @transform_5, window_bounds = array<i64: 1, 2, 8>}, {transform_indices = @transform_6, window_bounds = array<i64: 1, 2, 16>}]} {
    %c0 = arith.constant 0 : index
    %c0_0 = arith.constant 0 : index
    %0 = vector.load %arg1[%c0, %c0_0] : memref<128x4xbf16, #tpu.memory_space<vmem>>, vector<128x4xbf16>
    %c0_1 = arith.constant 0 : index
    %c0_2 = arith.constant 0 : index
    %1 = vector.load %arg2[%c0_1, %c0_2] : memref<4x8xbf16, #tpu.memory_space<vmem>>, vector<4x8xbf16>
    %cst = arith.constant dense<0.000000e+00> : vector<128x8xf32>
    %2 = tpu.matmul %0, %1, %cst {dimension_numbers = #tpu.dot_dimension_numbers<[1], [0], [0], [1], [0, 0, 1, 1], [], []>} : vector<128x4xbf16>, vector<4x8xbf16>, vector<128x8xf32> -> vector<128x8xf32>
    %c0_3 = arith.constant 0 : index
    %c0_4 = arith.constant 0 : index
    %3 = vector.load %arg3[%c0_3, %c0_4] : memref<4x16xbf16, #tpu.memory_space<vmem>>, vector<4x16xbf16>
    %cst_5 = arith.constant dense<0.000000e+00> : vector<128x16xf32>
    %4 = tpu.matmul %0, %3, %cst_5 {dimension_numbers = #tpu.dot_dimension_numbers<[1], [0], [0], [1], [0, 0, 1, 1], [], []>} : vector<128x4xbf16>, vector<4x16xbf16>, vector<128x16xf32> -> vector<128x16xf32>
    %5 = arith.truncf %2 : vector<128x8xf32> to vector<128x8xbf16>
    %c0_6 = arith.constant 0 : index
    %c0_7 = arith.constant 0 : index
    %6 = vector.load %arg4[%c0_6, %c0_7] : memref<128x8xbf16, #tpu.memory_space<vmem>>, vector<128x8xbf16>
    tpu.vector_store %arg4[%c0_6, %c0_7], %5 {strides = array<i32>} : memref<128x8xbf16, #tpu.memory_space<vmem>>, vector<128x8xbf16>,
    %7 = arith.truncf %4 : vector<128x16xf32> to vector<128x16xbf16>
    %c0_8 = arith.constant 0 : index
    %c0_9 = arith.constant 0 : index
    %8 = vector.load %arg5[%c0_8, %c0_9] : memref<128x16xbf16, #tpu.memory_space<vmem>>, vector<128x16xbf16>
    tpu.vector_store %arg5[%c0_8, %c0_9], %7 {strides = array<i32>} : memref<128x16xbf16, #tpu.memory_space<vmem>>, vector<128x16xbf16>,
    %cst_10 = arith.constant dense<0.000000e+00> : vector<8xf32>
    %9 = vector.multi_reduction <add>, %2, %cst_10 [0] : vector<128x8xf32> to vector<8xf32>
    %10 = vector.shape_cast %9 : vector<8xf32> to vector<1x8xf32>
    %c0_11 = arith.constant 0 : index
    %c0_12 = arith.constant 0 : index
    %c0_13 = arith.constant 0 : index
    %11 = vector.load %arg6[%c0_11, %c0_12, %c0_13] : memref<1x2x8xf32, #tpu.memory_space<vmem>>, vector<1x1x8xf32>
    %12 = vector.shape_cast %11 : vector<1x1x8xf32> to vector<1x8xf32>
    %13 = vector.shape_cast %10 : vector<1x8xf32> to vector<1x1x8xf32>
    tpu.vector_store %arg6[%c0_11, %c0_12, %c0_13], %13 {strides = array<i32>} : memref<1x2x8xf32, #tpu.memory_space<vmem>>, vector<1x1x8xf32>,
    %14 = arith.mulf %2, %2 : vector<128x8xf32>
    %cst_14 = arith.constant dense<0.000000e+00> : vector<8xf32>
    %15 = vector.multi_reduction <add>, %14, %cst_14 [0] : vector<128x8xf32> to vector<8xf32>
    %16 = vector.shape_cast %15 : vector<8xf32> to vector<1x8xf32>
    %c0_15 = arith.constant 0 : index
    %c1 = arith.constant 1 : index
    %c0_16 = arith.constant 0 : index
    %17 = vector.load %arg6[%c0_15, %c1, %c0_16] : memref<1x2x8xf32, #tpu.memory_space<vmem>>, vector<1x1x8xf32>
    %18 = vector.shape_cast %17 : vector<1x1x8xf32> to vector<1x8xf32>
    %19 = vector.shape_cast %16 : vector<1x8xf32> to vector<1x1x8xf32>
    tpu.vector_store %arg6[%c0_15, %c1, %c0_16], %19 {strides = array<i32>} : memref<1x2x8xf32, #tpu.memory_space<vmem>>, vector<1x1x8xf32>,
    %cst_17 = arith.constant dense<0.000000e+00> : vector<16xf32>
    %20 = vector.multi_reduction <add>, %4, %cst_17 [0] : vector<128x16xf32> to vector<16xf32>
    %21 = vector.shape_cast %20 : vector<16xf32> to vector<1x16xf32>
    %c0_18 = arith.constant 0 : index
    %c0_19 = arith.constant 0 : index
    %c0_20 = arith.constant 0 : index
    %22 = vector.load %arg7[%c0_18, %c0_19, %c0_20] : memref<1x2x16xf32, #tpu.memory_space<vmem>>, vector<1x1x16xf32>
    %23 = vector.shape_cast %22 : vector<1x1x16xf32> to vector<1x16xf32>
    %24 = vector.shape_cast %21 : vector<1x16xf32> to vector<1x1x16xf32>
    tpu.vector_store %arg7[%c0_18, %c0_19, %c0_20], %24 {strides = array<i32>} : memref<1x2x16xf32, #tpu.memory_space<vmem>>, vector<1x1x16xf32>,
    %25 = arith.mulf %4, %4 : vector<128x16xf32>
    %cst_21 = arith.constant dense<0.000000e+00> : vector<16xf32>
    %26 = vector.multi_reduction <add>, %25, %cst_21 [0] : vector<128x16xf32> to vector<16xf32>
    %27 = vector.shape_cast %26 : vector<16xf32> to vector<1x16xf32>
    %c0_22 = arith.constant 0 : index
    %c1_23 = arith.constant 1 : index
    %c0_24 = arith.constant 0 : index
    %28 = vector.load %arg7[%c0_22, %c1_23, %c0_24] : memref<1x2x16xf32, #tpu.memory_space<vmem>>, vector<1x1x16xf32>
    %29 = vector.shape_cast %28 : vector<1x1x16xf32> to vector<1x16xf32>
    %30 = vector.shape_cast %27 : vector<1x16xf32> to vector<1x1x16xf32>
    tpu.vector_store %arg7[%c0_22, %c1_23, %c0_24], %30 {strides = array<i32>} : memref<1x2x16xf32, #tpu.memory_space<vmem>>, vector<1x1x16xf32>,
    return
  }
  func.func @transform_0(%arg0: i32) -> (i32, i32) {
    %c0_i32 = arith.constant 0 : i32
    %c0_i32_0 = arith.constant 0 : i32
    return %arg0, %c0_i32 : i32, i32
  }
  func.func @transform_1(%arg0: i32) -> (i32, i32) {
    %c0_i32 = arith.constant 0 : i32
    %c0_i32_0 = arith.constant 0 : i32
    %c0_i32_1 = arith.constant 0 : i32
    return %c0_i32, %c0_i32_0 : i32, i32
  }
  func.func @transform_2(%arg0: i32) -> (i32, i32) {
    %c0_i32 = arith.constant 0 : i32
    %c0_i32_0 = arith.constant 0 : i32
    %c0_i32_1 = arith.constant 0 : i32
    return %c0_i32, %c0_i32_0 : i32, i32
  }
  func.func @transform_3(%arg0: i32) -> (i32, i32) {
    %c0_i32 = arith.constant 0 : i32
    %c0_i32_0 = arith.constant 0 : i32
    return %arg0, %c0_i32 : i32, i32
  }
  func.func @transform_4(%arg0: i32) -> (i32, i32) {
    %c0_i32 = arith.constant 0 : i32
    %c0_i32_0 = arith.constant 0 : i32
    return %arg0, %c0_i32 : i32, i32
  }
  func.func @transform_5(%arg0: i32) -> (i32, i32, i32) {
    %c0_i32 = arith.constant 0 : i32
    %c0_i32_0 = arith.constant 0 : i32
    %c0_i32_1 = arith.constant 0 : i32
    return %arg0, %c0_i32, %c0_i32_0 : i32, i32, i32
  }
  func.func @transform_6(%arg0: i32) -> (i32, i32, i32) {
    %c0_i32 = arith.constant 0 : i32
    %c0_i32_0 = arith.constant 0 : i32
    %c0_i32_1 = arith.constant 0 : i32
    return %arg0, %c0_i32, %c0_i32_0 : i32, i32, i32
  }
}

module attributes {stable_mosaic.version = 11 : i64} {
  func.func @kernel(%arg0: i32, %arg1: memref<128x16xbf16, #tpu.memory_space<vmem>>, %arg2: memref<128x16xbf16, #tpu.memory_space<vmem>>, %arg3: memref<1x16xf32, #tpu.memory_space<vmem>>, %arg4: memref<1x16xf32, #tpu.memory_space<vmem>>, %arg5: memref<1x16xf32, #tpu.memory_space<vmem>>, %arg6: memref<1x16xf32, #tpu.memory_space<vmem>>, %arg7: memref<128x16xf32, #tpu.memory_space<vmem>>) attributes {dimension_semantics = [#tpu.dimension_semantics<parallel>], iteration_bounds = array<i64: 1>, scalar_prefetch = 0 : i64, scratch_operands = 0 : i64, tpu.core_type = #tpu.core_type<tc>, window_params = [{transform_indices = @transform_0, window_bounds = array<i64: 128, 16>}, {transform_indices = @transform_1, window_bounds = array<i64: 128, 16>}, {pipeline_mode = #tpu.pipeline_mode<synchronous>, transform_indices = @transform_2, window_bounds = array<i64: 1, 16>}, {pipeline_mode = #tpu.pipeline_mode<synchronous>, transform_indices = @transform_3, window_bounds = array<i64: 1, 16>}, {pipeline_mode = #tpu.pipeline_mode<synchronous>, transform_indices = @transform_4, window_bounds = array<i64: 1, 16>}, {pipeline_mode = #tpu.pipeline_mode<synchronous>, transform_indices = @transform_5, window_bounds = array<i64: 1, 16>}, {transform_indices = @transform_6, window_bounds = array<i64: 128, 16>}]} {
    %c0 = arith.constant 0 : index
    %c0_0 = arith.constant 0 : index
    %0 = vector.load %arg1[%c0, %c0_0] : memref<128x16xbf16, #tpu.memory_space<vmem>>, vector<128x16xbf16>
    %1 = arith.extf %0 : vector<128x16xbf16> to vector<128x16xf32>
    %c0_1 = arith.constant 0 : index
    %c0_2 = arith.constant 0 : index
    %2 = vector.load %arg3[%c0_1, %c0_2] : memref<1x16xf32, #tpu.memory_space<vmem>>, vector<1x16xf32>
    %3 = vector.broadcast %2 : vector<1x16xf32> to vector<128x16xf32>
    %4 = arith.mulf %1, %3 : vector<128x16xf32>
    %c0_3 = arith.constant 0 : index
    %c0_4 = arith.constant 0 : index
    %5 = vector.load %arg4[%c0_3, %c0_4] : memref<1x16xf32, #tpu.memory_space<vmem>>, vector<1x16xf32>
    %6 = vector.broadcast %5 : vector<1x16xf32> to vector<128x16xf32>
    %7 = arith.addf %4, %6 : vector<128x16xf32>
    %c0_5 = arith.constant 0 : index
    %c0_6 = arith.constant 0 : index
    %8 = vector.load %arg2[%c0_5, %c0_6] : memref<128x16xbf16, #tpu.memory_space<vmem>>, vector<128x16xbf16>
    %9 = arith.extf %8 : vector<128x16xbf16> to vector<128x16xf32>
    %c0_7 = arith.constant 0 : index
    %c0_8 = arith.constant 0 : index
    %10 = vector.load %arg5[%c0_7, %c0_8] : memref<1x16xf32, #tpu.memory_space<vmem>>, vector<1x16xf32>
    %11 = vector.broadcast %10 : vector<1x16xf32> to vector<128x16xf32>
    %12 = arith.mulf %9, %11 : vector<128x16xf32>
    %c0_9 = arith.constant 0 : index
    %c0_10 = arith.constant 0 : index
    %13 = vector.load %arg6[%c0_9, %c0_10] : memref<1x16xf32, #tpu.memory_space<vmem>>, vector<1x16xf32>
    %14 = vector.broadcast %13 : vector<1x16xf32> to vector<128x16xf32>
    %15 = arith.addf %12, %14 : vector<128x16xf32>
    %16 = arith.addf %7, %15 : vector<128x16xf32>
    %cst = arith.constant 0.000000e+00 : f32
    %17 = vector.broadcast %cst : f32 to vector<128x16xf32>
    %18 = arith.maximumf %16, %17 : vector<128x16xf32>
    %c0_11 = arith.constant 0 : index
    %c0_12 = arith.constant 0 : index
    %19 = vector.load %arg7[%c0_11, %c0_12] : memref<128x16xf32, #tpu.memory_space<vmem>>, vector<128x16xf32>
    tpu.vector_store %arg7[%c0_11, %c0_12], %18 {strides = array<i32>} : memref<128x16xf32, #tpu.memory_space<vmem>>, vector<128x16xf32>,
    return
  }
  func.func @transform_0(%arg0: i32) -> (i32, i32) {
    %c0_i32 = arith.constant 0 : i32
    %c0_i32_0 = arith.constant 0 : i32
    return %arg0, %c0_i32 : i32, i32
  }
  func.func @transform_1(%arg0: i32) -> (i32, i32) {
    %c0_i32 = arith.constant 0 : i32
    %c0_i32_0 = arith.constant 0 : i32
    return %arg0, %c0_i32 : i32, i32
  }
  func.func @transform_2(%arg0: i32) -> (i32, i32) {
    %c0_i32 = arith.constant 0 : i32
    %c0_i32_0 = arith.constant 0 : i32
    %c0_i32_1 = arith.constant 0 : i32
    return %c0_i32, %c0_i32_0 : i32, i32
  }
  func.func @transform_3(%arg0: i32) -> (i32, i32) {
    %c0_i32 = arith.constant 0 : i32
    %c0_i32_0 = arith.constant 0 : i32
    %c0_i32_1 = arith.constant 0 : i32
    return %c0_i32, %c0_i32_0 : i32, i32
  }
  func.func @transform_4(%arg0: i32) -> (i32, i32) {
    %c0_i32 = arith.constant 0 : i32
    %c0_i32_0 = arith.constant 0 : i32
    %c0_i32_1 = arith.constant 0 : i32
    return %c0_i32, %c0_i32_0 : i32, i32
  }
  func.func @transform_5(%arg0: i32) -> (i32, i32) {
    %c0_i32 = arith.constant 0 : i32
    %c0_i32_0 = arith.constant 0 : i32
    %c0_i32_1 = arith.constant 0 : i32
    return %c0_i32, %c0_i32_0 : i32, i32
  }
  func.func @transform_6(%arg0: i32) -> (i32, i32) {
    %c0_i32 = arith.constant 0 : i32
    %c0_i32_0 = arith.constant 0 : i32
    return %arg0, %c0_i32 : i32, i32
  }
}

module attributes {stable_mosaic.version = 11 : i64} {
  func.func @kernel(%arg0: i32, %arg1: memref<1x8x8x8xbf16, #tpu.memory_space<vmem>>, %arg2: memref<1x8xf32, #tpu.memory_space<vmem>>, %arg3: memref<1x8xf32, #tpu.memory_space<vmem>>, %arg4: memref<9x8x8xbf16, #tpu.memory_space<vmem>>, %arg5: memref<64x8xbf16, #tpu.memory_space<vmem>>, %arg6: memref<1x2x8xf32, #tpu.memory_space<vmem>>, %arg7: memref<10x8x8xf32, #tpu.memory_space<vmem>>) attributes {dimension_semantics = [#tpu.dimension_semantics<parallel>], iteration_bounds = array<i64: 2>, scalar_prefetch = 0 : i64, scratch_operands = 1 : i64, tpu.core_type = #tpu.core_type<tc>, window_params = [{transform_indices = @transform_0, window_bounds = array<i64: 1, 8, 8, 8>}, {pipeline_mode = #tpu.pipeline_mode<synchronous>, transform_indices = @transform_1, window_bounds = array<i64: 1, 8>}, {pipeline_mode = #tpu.pipeline_mode<synchronous>, transform_indices = @transform_2, window_bounds = array<i64: 1, 8>}, {pipeline_mode = #tpu.pipeline_mode<synchronous>, transform_indices = @transform_3, window_bounds = array<i64: 9, 8, 8>}, {transform_indices = @transform_4, window_bounds = array<i64: 64, 8>}, {transform_indices = @transform_5, window_bounds = array<i64: 1, 2, 8>}]} {
    %cst = arith.constant 0.000000e+00 : f32
    %0 = vector.broadcast %cst : f32 to vector<1x8x8xf32>
    %c0 = arith.constant 0 : index
    %c0_0 = arith.constant 0 : index
    %c0_1 = arith.constant 0 : index
    %1 = vector.load %arg7[%c0, %c0_0, %c0_1] : memref<10x8x8xf32, #tpu.memory_space<vmem>>, vector<1x8x8xf32>
    tpu.vector_store %arg7[%c0, %c0_0, %c0_1], %0 {strides = array<i32>} : memref<10x8x8xf32, #tpu.memory_space<vmem>>, vector<1x8x8xf32>,
    %c9 = arith.constant 9 : index
    %c0_2 = arith.constant 0 : index
    %c0_3 = arith.constant 0 : index
    %2 = vector.load %arg7[%c9, %c0_2, %c0_3] : memref<10x8x8xf32, #tpu.memory_space<vmem>>, vector<1x8x8xf32>
    tpu.vector_store %arg7[%c9, %c0_2, %c0_3], %0 {strides = array<i32>} : memref<10x8x8xf32, #tpu.memory_space<vmem>>, vector<1x8x8xf32>,
    %c0_4 = arith.constant 0 : index
    %c0_5 = arith.constant 0 : index
    %c0_6 = arith.constant 0 : index
    %c0_7 = arith.constant 0 : index
    %3 = vector.load %arg1[%c0_4, %c0_5, %c0_6, %c0_7] : memref<1x8x8x8xbf16, #tpu.memory_space<vmem>>, vector<1x8x8x8xbf16>
    %4 = vector.shape_cast %3 : vector<1x8x8x8xbf16> to vector<8x8x8xbf16>
    %5 = arith.extf %4 : vector<8x8x8xbf16> to vector<8x8x8xf32>
    %c0_8 = arith.constant 0 : index
    %c0_9 = arith.constant 0 : index
    %6 = vector.load %arg2[%c0_8, %c0_9] : memref<1x8xf32, #tpu.memory_space<vmem>>, vector<1x8xf32>
    %7 = vector.shape_cast %6 : vector<1x8xf32> to vector<1x1x8xf32>
    %8 = vector.broadcast %7 : vector<1x1x8xf32> to vector<8x8x8xf32>
    %9 = arith.mulf %5, %8 : vector<8x8x8xf32>
    %c0_10 = arith.constant 0 : index
    %c0_11 = arith.constant 0 : index
    %10 = vector.load %arg3[%c0_10, %c0_11] : memref<1x8xf32, #tpu.memory_space<vmem>>, vector<1x8xf32>
    %11 = vector.shape_cast %10 : vector<1x8xf32> to vector<1x1x8xf32>
    %12 = vector.broadcast %11 : vector<1x1x8xf32> to vector<8x8x8xf32>
    %13 = arith.addf %9, %12 : vector<8x8x8xf32>
    %cst_12 = arith.constant 0.000000e+00 : f32
    %14 = vector.broadcast %cst_12 : f32 to vector<8x8x8xf32>
    %15 = arith.maximumf %13, %14 : vector<8x8x8xf32>
    %c1 = arith.constant 1 : index
    %c0_13 = arith.constant 0 : index
    %c0_14 = arith.constant 0 : index
    %16 = vector.load %arg7[%c1, %c0_13, %c0_14] : memref<10x8x8xf32, #tpu.memory_space<vmem>>, vector<8x8x8xf32>
    tpu.vector_store %arg7[%c1, %c0_13, %c0_14], %15 {strides = array<i32>} : memref<10x8x8xf32, #tpu.memory_space<vmem>>, vector<8x8x8xf32>,
    %17 = tpu.iota {dimensions = array<i32: 0>} : vector<64x1xi32>
    %c8_i32 = arith.constant 8 : i32
    %c0_i32 = arith.constant 0 : i32
    %18 = arith.cmpi eq, %c8_i32, %c0_i32 : i32
    %c1_i32 = arith.constant 1 : i32
    %19 = arith.select %18, %c1_i32, %c8_i32 : i32
    %20 = vector.broadcast %19 : i32 to vector<64x1xi32>
    %21 = arith.remsi %17, %20 : vector<64x1xi32>
    %c0_i32_15 = arith.constant 0 : i32
    %22 = vector.broadcast %c0_i32_15 : i32 to vector<64x1xi32>
    %23 = arith.cmpi ne, %21, %22 : vector<64x1xi32>
    %c0_i32_16 = arith.constant 0 : i32
    %24 = vector.broadcast %c0_i32_16 : i32 to vector<64x1xi32>
    %25 = arith.cmpi slt, %21, %24 : vector<64x1xi32>
    %c0_i32_17 = arith.constant 0 : i32
    %26 = arith.cmpi slt, %19, %c0_i32_17 : i32
    %27 = vector.broadcast %26 : i1 to vector<64x1xi1>
    %28 = vector.broadcast %27 : vector<64x1xi1> to vector<64x1xi1>
    %29 = arith.xori %25, %28 : vector<64x1xi1>
    %30 = arith.andi %29, %23 : vector<64x1xi1>
    %31 = vector.broadcast %19 : i32 to vector<64x1xi32>
    %32 = arith.addi %21, %31 : vector<64x1xi32>
    %33 = arith.select %30, %32, %21 : vector<64x1xi1>, vector<64x1xi32>
    %cst_18 = arith.constant 0.000000e+00 : f32
    %34 = vector.broadcast %cst_18 : f32 to vector<1x8xf32>
    %cst_19 = arith.constant 0.000000e+00 : f32
    %35 = vector.broadcast %cst_19 : f32 to vector<64x8xf32>
    %c0_20 = arith.constant 0 : index
    %c0_21 = arith.constant 0 : index
    %c0_22 = arith.constant 0 : index
    %36 = vector.load %arg7[%c0_20, %c0_21, %c0_22] : memref<10x8x8xf32, #tpu.memory_space<vmem>>, vector<8x8x8xf32>
    %37 = vector.shape_cast %36 : vector<8x8x8xf32> to vector<64x8xf32>
    %c0_i32_23 = arith.constant 0 : i32
    %38 = vector.broadcast %c0_i32_23 : i32 to vector<64x1xi32>
    %39 = arith.cmpi eq, %33, %38 : vector<64x1xi32>
    %40 = vector.extract_strided_slice %37 {offsets = [0, 0], sizes = [63, 8], strides = [1, 1]} : vector<64x8xf32> to vector<63x8xf32>
    %41 = tpu.concatenate %34, %40 in 0 : vector<1x8xf32>, vector<63x8xf32> -> vector<64x8xf32>
    %cst_24 = arith.constant 0.000000e+00 : f32
    %42 = vector.shape_cast %39 : vector<64x1xi1> to vector<64x1xi1>
    %43 = vector.broadcast %42 : vector<64x1xi1> to vector<64x8xi1>
    %44 = vector.broadcast %cst_24 : f32 to vector<64x8xf32>
    %45 = arith.select %43, %44, %41 : vector<64x8xi1>, vector<64x8xf32>
    %c7_i32 = arith.constant 7 : i32
    %46 = vector.broadcast %c7_i32 : i32 to vector<64x1xi32>
    %47 = arith.cmpi eq, %33, %46 : vector<64x1xi32>
    %48 = vector.extract_strided_slice %37 {offsets = [1, 0], sizes = [63, 8], strides = [1, 1]} : vector<64x8xf32> to vector<63x8xf32>
    %49 = tpu.concatenate %48, %34 in 0 : vector<63x8xf32>, vector<1x8xf32> -> vector<64x8xf32>
    %cst_25 = arith.constant 0.000000e+00 : f32
    %50 = vector.shape_cast %47 : vector<64x1xi1> to vector<64x1xi1>
    %51 = vector.broadcast %50 : vector<64x1xi1> to vector<64x8xi1>
    %52 = vector.broadcast %cst_25 : f32 to vector<64x8xf32>
    %53 = arith.select %51, %52, %49 : vector<64x8xi1>, vector<64x8xf32>
    %54 = arith.truncf %45 : vector<64x8xf32> to vector<64x8xbf16>
    %c0_26 = arith.constant 0 : index
    %c0_27 = arith.constant 0 : index
    %c0_28 = arith.constant 0 : index
    %55 = vector.load %arg4[%c0_26, %c0_27, %c0_28] : memref<9x8x8xbf16, #tpu.memory_space<vmem>>, vector<1x8x8xbf16>
    %56 = vector.shape_cast %55 : vector<1x8x8xbf16> to vector<8x8xbf16>
    %cst_29 = arith.constant dense<0.000000e+00> : vector<64x8xf32>
    %57 = tpu.matmul %54, %56, %cst_29 {dimension_numbers = #tpu.dot_dimension_numbers<[1], [0], [0], [1], [0, 0, 1, 1], [], []>} : vector<64x8xbf16>, vector<8x8xbf16>, vector<64x8xf32> -> vector<64x8xf32>
    %58 = arith.addf %35, %57 : vector<64x8xf32>
    %59 = arith.truncf %37 : vector<64x8xf32> to vector<64x8xbf16>
    %c1_30 = arith.constant 1 : index
    %c0_31 = arith.constant 0 : index
    %c0_32 = arith.constant 0 : index
    %60 = vector.load %arg4[%c1_30, %c0_31, %c0_32] : memref<9x8x8xbf16, #tpu.memory_space<vmem>>, vector<1x8x8xbf16>
    %61 = vector.shape_cast %60 : vector<1x8x8xbf16> to vector<8x8xbf16>
    %cst_33 = arith.constant dense<0.000000e+00> : vector<64x8xf32>
    %62 = tpu.matmul %59, %61, %cst_33 {dimension_numbers = #tpu.dot_dimension_numbers<[1], [0], [0], [1], [0, 0, 1, 1], [], []>} : vector<64x8xbf16>, vector<8x8xbf16>, vector<64x8xf32> -> vector<64x8xf32>
    %63 = arith.addf %58, %62 : vector<64x8xf32>
    %64 = arith.truncf %53 : vector<64x8xf32> to vector<64x8xbf16>
    %c2 = arith.constant 2 : index
    %c0_34 = arith.constant 0 : index
    %c0_35 = arith.constant 0 : index
    %65 = vector.load %arg4[%c2, %c0_34, %c0_35] : memref<9x8x8xbf16, #tpu.memory_space<vmem>>, vector<1x8x8xbf16>
    %66 = vector.shape_cast %65 : vector<1x8x8xbf16> to vector<8x8xbf16>
    %cst_36 = arith.constant dense<0.000000e+00> : vector<64x8xf32>
    %67 = tpu.matmul %64, %66, %cst_36 {dimension_numbers = #tpu.dot_dimension_numbers<[1], [0], [0], [1], [0, 0, 1, 1], [], []>} : vector<64x8xbf16>, vector<8x8xbf16>, vector<64x8xf32> -> vector<64x8xf32>
    %68 = arith.addf %63, %67 : vector<64x8xf32>
    %c1_37 = arith.constant 1 : index
    %c0_38 = arith.constant 0 : index
    %c0_39 = arith.constant 0 : index
    %69 = vector.load %arg7[%c1_37, %c0_38, %c0_39] : memref<10x8x8xf32, #tpu.memory_space<vmem>>, vector<8x8x8xf32>
    %70 = vector.shape_cast %69 : vector<8x8x8xf32> to vector<64x8xf32>
    %c0_i32_40 = arith.constant 0 : i32
    %71 = vector.broadcast %c0_i32_40 : i32 to vector<64x1xi32>
    %72 = arith.cmpi eq, %33, %71 : vector<64x1xi32>
    %73 = vector.extract_strided_slice %70 {offsets = [0, 0], sizes = [63, 8], strides = [1, 1]} : vector<64x8xf32> to vector<63x8xf32>
    %74 = tpu.concatenate %34, %73 in 0 : vector<1x8xf32>, vector<63x8xf32> -> vector<64x8xf32>
    %cst_41 = arith.constant 0.000000e+00 : f32
    %75 = vector.shape_cast %72 : vector<64x1xi1> to vector<64x1xi1>
    %76 = vector.broadcast %75 : vector<64x1xi1> to vector<64x8xi1>
    %77 = vector.broadcast %cst_41 : f32 to vector<64x8xf32>
    %78 = arith.select %76, %77, %74 : vector<64x8xi1>, vector<64x8xf32>
    %c7_i32_42 = arith.constant 7 : i32
    %79 = vector.broadcast %c7_i32_42 : i32 to vector<64x1xi32>
    %80 = arith.cmpi eq, %33, %79 : vector<64x1xi32>
    %81 = vector.extract_strided_slice %70 {offsets = [1, 0], sizes = [63, 8], strides = [1, 1]} : vector<64x8xf32> to vector<63x8xf32>
    %82 = tpu.concatenate %81, %34 in 0 : vector<63x8xf32>, vector<1x8xf32> -> vector<64x8xf32>
    %cst_43 = arith.constant 0.000000e+00 : f32
    %83 = vector.shape_cast %80 : vector<64x1xi1> to vector<64x1xi1>
    %84 = vector.broadcast %83 : vector<64x1xi1> to vector<64x8xi1>
    %85 = vector.broadcast %cst_43 : f32 to vector<64x8xf32>
    %86 = arith.select %84, %85, %82 : vector<64x8xi1>, vector<64x8xf32>
    %87 = arith.truncf %78 : vector<64x8xf32> to vector<64x8xbf16>
    %c3 = arith.constant 3 : index
    %c0_44 = arith.constant 0 : index
    %c0_45 = arith.constant 0 : index
    %88 = vector.load %arg4[%c3, %c0_44, %c0_45] : memref<9x8x8xbf16, #tpu.memory_space<vmem>>, vector<1x8x8xbf16>
    %89 = vector.shape_cast %88 : vector<1x8x8xbf16> to vector<8x8xbf16>
    %cst_46 = arith.constant dense<0.000000e+00> : vector<64x8xf32>
    %90 = tpu.matmul %87, %89, %cst_46 {dimension_numbers = #tpu.dot_dimension_numbers<[1], [0], [0], [1], [0, 0, 1, 1], [], []>} : vector<64x8xbf16>, vector<8x8xbf16>, vector<64x8xf32> -> vector<64x8xf32>
    %91 = arith.addf %68, %90 : vector<64x8xf32>
    %92 = arith.truncf %70 : vector<64x8xf32> to vector<64x8xbf16>
    %c4 = arith.constant 4 : index
    %c0_47 = arith.constant 0 : index
    %c0_48 = arith.constant 0 : index
    %93 = vector.load %arg4[%c4, %c0_47, %c0_48] : memref<9x8x8xbf16, #tpu.memory_space<vmem>>, vector<1x8x8xbf16>
    %94 = vector.shape_cast %93 : vector<1x8x8xbf16> to vector<8x8xbf16>
    %cst_49 = arith.constant dense<0.000000e+00> : vector<64x8xf32>
    %95 = tpu.matmul %92, %94, %cst_49 {dimension_numbers = #tpu.dot_dimension_numbers<[1], [0], [0], [1], [0, 0, 1, 1], [], []>} : vector<64x8xbf16>, vector<8x8xbf16>, vector<64x8xf32> -> vector<64x8xf32>
    %96 = arith.addf %91, %95 : vector<64x8xf32>
    %97 = arith.truncf %86 : vector<64x8xf32> to vector<64x8xbf16>
    %c5 = arith.constant 5 : index
    %c0_50 = arith.constant 0 : index
    %c0_51 = arith.constant 0 : index
    %98 = vector.load %arg4[%c5, %c0_50, %c0_51] : memref<9x8x8xbf16, #tpu.memory_space<vmem>>, vector<1x8x8xbf16>
    %99 = vector.shape_cast %98 : vector<1x8x8xbf16> to vector<8x8xbf16>
    %cst_52 = arith.constant dense<0.000000e+00> : vector<64x8xf32>
    %100 = tpu.matmul %97, %99, %cst_52 {dimension_numbers = #tpu.dot_dimension_numbers<[1], [0], [0], [1], [0, 0, 1, 1], [], []>} : vector<64x8xbf16>, vector<8x8xbf16>, vector<64x8xf32> -> vector<64x8xf32>
    %101 = arith.addf %96, %100 : vector<64x8xf32>
    %c2_53 = arith.constant 2 : index
    %c0_54 = arith.constant 0 : index
    %c0_55 = arith.constant 0 : index
    %102 = vector.load %arg7[%c2_53, %c0_54, %c0_55] : memref<10x8x8xf32, #tpu.memory_space<vmem>>, vector<8x8x8xf32>
    %103 = vector.shape_cast %102 : vector<8x8x8xf32> to vector<64x8xf32>
    %c0_i32_56 = arith.constant 0 : i32
    %104 = vector.broadcast %c0_i32_56 : i32 to vector<64x1xi32>
    %105 = arith.cmpi eq, %33, %104 : vector<64x1xi32>
    %106 = vector.extract_strided_slice %103 {offsets = [0, 0], sizes = [63, 8], strides = [1, 1]} : vector<64x8xf32> to vector<63x8xf32>
    %107 = tpu.concatenate %34, %106 in 0 : vector<1x8xf32>, vector<63x8xf32> -> vector<64x8xf32>
    %cst_57 = arith.constant 0.000000e+00 : f32
    %108 = vector.shape_cast %105 : vector<64x1xi1> to vector<64x1xi1>
    %109 = vector.broadcast %108 : vector<64x1xi1> to vector<64x8xi1>
    %110 = vector.broadcast %cst_57 : f32 to vector<64x8xf32>
    %111 = arith.select %109, %110, %107 : vector<64x8xi1>, vector<64x8xf32>
    %c7_i32_58 = arith.constant 7 : i32
    %112 = vector.broadcast %c7_i32_58 : i32 to vector<64x1xi32>
    %113 = arith.cmpi eq, %33, %112 : vector<64x1xi32>
    %114 = vector.extract_strided_slice %103 {offsets = [1, 0], sizes = [63, 8], strides = [1, 1]} : vector<64x8xf32> to vector<63x8xf32>
    %115 = tpu.concatenate %114, %34 in 0 : vector<63x8xf32>, vector<1x8xf32> -> vector<64x8xf32>
    %cst_59 = arith.constant 0.000000e+00 : f32
    %116 = vector.shape_cast %113 : vector<64x1xi1> to vector<64x1xi1>
    %117 = vector.broadcast %116 : vector<64x1xi1> to vector<64x8xi1>
    %118 = vector.broadcast %cst_59 : f32 to vector<64x8xf32>
    %119 = arith.select %117, %118, %115 : vector<64x8xi1>, vector<64x8xf32>
    %120 = arith.truncf %111 : vector<64x8xf32> to vector<64x8xbf16>
    %c6 = arith.constant 6 : index
    %c0_60 = arith.constant 0 : index
    %c0_61 = arith.constant 0 : index
    %121 = vector.load %arg4[%c6, %c0_60, %c0_61] : memref<9x8x8xbf16, #tpu.memory_space<vmem>>, vector<1x8x8xbf16>
    %122 = vector.shape_cast %121 : vector<1x8x8xbf16> to vector<8x8xbf16>
    %cst_62 = arith.constant dense<0.000000e+00> : vector<64x8xf32>
    %123 = tpu.matmul %120, %122, %cst_62 {dimension_numbers = #tpu.dot_dimension_numbers<[1], [0], [0], [1], [0, 0, 1, 1], [], []>} : vector<64x8xbf16>, vector<8x8xbf16>, vector<64x8xf32> -> vector<64x8xf32>
    %124 = arith.addf %101, %123 : vector<64x8xf32>
    %125 = arith.truncf %103 : vector<64x8xf32> to vector<64x8xbf16>
    %c7 = arith.constant 7 : index
    %c0_63 = arith.constant 0 : index
    %c0_64 = arith.constant 0 : index
    %126 = vector.load %arg4[%c7, %c0_63, %c0_64] : memref<9x8x8xbf16, #tpu.memory_space<vmem>>, vector<1x8x8xbf16>
    %127 = vector.shape_cast %126 : vector<1x8x8xbf16> to vector<8x8xbf16>
    %cst_65 = arith.constant dense<0.000000e+00> : vector<64x8xf32>
    %128 = tpu.matmul %125, %127, %cst_65 {dimension_numbers = #tpu.dot_dimension_numbers<[1], [0], [0], [1], [0, 0, 1, 1], [], []>} : vector<64x8xbf16>, vector<8x8xbf16>, vector<64x8xf32> -> vector<64x8xf32>
    %129 = arith.addf %124, %128 : vector<64x8xf32>
    %130 = arith.truncf %119 : vector<64x8xf32> to vector<64x8xbf16>
    %c8 = arith.constant 8 : index
    %c0_66 = arith.constant 0 : index
    %c0_67 = arith.constant 0 : index
    %131 = vector.load %arg4[%c8, %c0_66, %c0_67] : memref<9x8x8xbf16, #tpu.memory_space<vmem>>, vector<1x8x8xbf16>
    %132 = vector.shape_cast %131 : vector<1x8x8xbf16> to vector<8x8xbf16>
    %cst_68 = arith.constant dense<0.000000e+00> : vector<64x8xf32>
    %133 = tpu.matmul %130, %132, %cst_68 {dimension_numbers = #tpu.dot_dimension_numbers<[1], [0], [0], [1], [0, 0, 1, 1], [], []>} : vector<64x8xbf16>, vector<8x8xbf16>, vector<64x8xf32> -> vector<64x8xf32>
    %134 = arith.addf %129, %133 : vector<64x8xf32>
    %135 = arith.truncf %134 : vector<64x8xf32> to vector<64x8xbf16>
    %c0_69 = arith.constant 0 : index
    %c0_70 = arith.constant 0 : index
    %136 = vector.load %arg5[%c0_69, %c0_70] : memref<64x8xbf16, #tpu.memory_space<vmem>>, vector<64x8xbf16>
    tpu.vector_store %arg5[%c0_69, %c0_70], %135 {strides = array<i32>} : memref<64x8xbf16, #tpu.memory_space<vmem>>, vector<64x8xbf16>,
    %cst_71 = arith.constant dense<0.000000e+00> : vector<8xf32>
    %137 = vector.multi_reduction <add>, %134, %cst_71 [0] : vector<64x8xf32> to vector<8xf32>
    %138 = vector.shape_cast %137 : vector<8xf32> to vector<1x8xf32>
    %c0_72 = arith.constant 0 : index
    %c0_73 = arith.constant 0 : index
    %c0_74 = arith.constant 0 : index
    %139 = vector.load %arg6[%c0_72, %c0_73, %c0_74] : memref<1x2x8xf32, #tpu.memory_space<vmem>>, vector<1x1x8xf32>
    %140 = vector.shape_cast %139 : vector<1x1x8xf32> to vector<1x8xf32>
    %141 = vector.shape_cast %138 : vector<1x8xf32> to vector<1x1x8xf32>
    tpu.vector_store %arg6[%c0_72, %c0_73, %c0_74], %141 {strides = array<i32>} : memref<1x2x8xf32, #tpu.memory_space<vmem>>, vector<1x1x8xf32>,
    %142 = arith.mulf %134, %134 : vector<64x8xf32>
    %cst_75 = arith.constant dense<0.000000e+00> : vector<8xf32>
    %143 = vector.multi_reduction <add>, %142, %cst_75 [0] : vector<64x8xf32> to vector<8xf32>
    %144 = vector.shape_cast %143 : vector<8xf32> to vector<1x8xf32>
    %c0_76 = arith.constant 0 : index
    %c1_77 = arith.constant 1 : index
    %c0_78 = arith.constant 0 : index
    %145 = vector.load %arg6[%c0_76, %c1_77, %c0_78] : memref<1x2x8xf32, #tpu.memory_space<vmem>>, vector<1x1x8xf32>
    %146 = vector.shape_cast %145 : vector<1x1x8xf32> to vector<1x8xf32>
    %147 = vector.shape_cast %144 : vector<1x8xf32> to vector<1x1x8xf32>
    tpu.vector_store %arg6[%c0_76, %c1_77, %c0_78], %147 {strides = array<i32>} : memref<1x2x8xf32, #tpu.memory_space<vmem>>, vector<1x1x8xf32>,
    return
  }
  func.func @transform_0(%arg0: i32) -> (i32, i32, i32, i32) {
    %c0_i32 = arith.constant 0 : i32
    %c0_i32_0 = arith.constant 0 : i32
    %c0_i32_1 = arith.constant 0 : i32
    %c0_i32_2 = arith.constant 0 : i32
    return %arg0, %c0_i32, %c0_i32_0, %c0_i32_1 : i32, i32, i32, i32
  }
  func.func @transform_1(%arg0: i32) -> (i32, i32) {
    %c0_i32 = arith.constant 0 : i32
    %c0_i32_0 = arith.constant 0 : i32
    %c0_i32_1 = arith.constant 0 : i32
    return %c0_i32, %c0_i32_0 : i32, i32
  }
  func.func @transform_2(%arg0: i32) -> (i32, i32) {
    %c0_i32 = arith.constant 0 : i32
    %c0_i32_0 = arith.constant 0 : i32
    %c0_i32_1 = arith.constant 0 : i32
    return %c0_i32, %c0_i32_0 : i32, i32
  }
  func.func @transform_3(%arg0: i32) -> (i32, i32, i32) {
    %c0_i32 = arith.constant 0 : i32
    %c0_i32_0 = arith.constant 0 : i32
    %c0_i32_1 = arith.constant 0 : i32
    %c0_i32_2 = arith.constant 0 : i32
    return %c0_i32, %c0_i32_0, %c0_i32_1 : i32, i32, i32
  }
  func.func @transform_4(%arg0: i32) -> (i32, i32) {
    %c0_i32 = arith.constant 0 : i32
    %c0_i32_0 = arith.constant 0 : i32
    return %arg0, %c0_i32 : i32, i32
  }
  func.func @transform_5(%arg0: i32) -> (i32, i32, i32) {
    %c0_i32 = arith.constant 0 : i32
    %c0_i32_0 = arith.constant 0 : i32
    %c0_i32_1 = arith.constant 0 : i32
    return %arg0, %c0_i32, %c0_i32_0 : i32, i32, i32
  }
}

module attributes {stable_mosaic.version = 11 : i64} {
  func.func @kernel(%arg0: i32, %arg1: memref<128x8xbf16, #tpu.memory_space<vmem>>, %arg2: memref<1x8xf32, #tpu.memory_space<vmem>>, %arg3: memref<1x8xf32, #tpu.memory_space<vmem>>, %arg4: memref<8x16xbf16, #tpu.memory_space<vmem>>, %arg5: memref<128x16xbf16, #tpu.memory_space<vmem>>, %arg6: memref<1x2x16xf32, #tpu.memory_space<vmem>>) attributes {dimension_semantics = [#tpu.dimension_semantics<parallel>], iteration_bounds = array<i64: 1>, scalar_prefetch = 0 : i64, scratch_operands = 0 : i64, tpu.core_type = #tpu.core_type<tc>, window_params = [{transform_indices = @transform_0, window_bounds = array<i64: 128, 8>}, {pipeline_mode = #tpu.pipeline_mode<synchronous>, transform_indices = @transform_1, window_bounds = array<i64: 1, 8>}, {pipeline_mode = #tpu.pipeline_mode<synchronous>, transform_indices = @transform_2, window_bounds = array<i64: 1, 8>}, {pipeline_mode = #tpu.pipeline_mode<synchronous>, transform_indices = @transform_3, window_bounds = array<i64: 8, 16>}, {transform_indices = @transform_4, window_bounds = array<i64: 128, 16>}, {transform_indices = @transform_5, window_bounds = array<i64: 1, 2, 16>}]} {
    %c0 = arith.constant 0 : index
    %c0_0 = arith.constant 0 : index
    %0 = vector.load %arg1[%c0, %c0_0] : memref<128x8xbf16, #tpu.memory_space<vmem>>, vector<128x8xbf16>
    %1 = arith.extf %0 : vector<128x8xbf16> to vector<128x8xf32>
    %c0_1 = arith.constant 0 : index
    %c0_2 = arith.constant 0 : index
    %2 = vector.load %arg2[%c0_1, %c0_2] : memref<1x8xf32, #tpu.memory_space<vmem>>, vector<1x8xf32>
    %3 = vector.broadcast %2 : vector<1x8xf32> to vector<128x8xf32>
    %4 = arith.mulf %1, %3 : vector<128x8xf32>
    %c0_3 = arith.constant 0 : index
    %c0_4 = arith.constant 0 : index
    %5 = vector.load %arg3[%c0_3, %c0_4] : memref<1x8xf32, #tpu.memory_space<vmem>>, vector<1x8xf32>
    %6 = vector.broadcast %5 : vector<1x8xf32> to vector<128x8xf32>
    %7 = arith.addf %4, %6 : vector<128x8xf32>
    %cst = arith.constant 0.000000e+00 : f32
    %8 = vector.broadcast %cst : f32 to vector<128x8xf32>
    %9 = arith.maximumf %7, %8 : vector<128x8xf32>
    %10 = arith.truncf %9 : vector<128x8xf32> to vector<128x8xbf16>
    %c0_5 = arith.constant 0 : index
    %c0_6 = arith.constant 0 : index
    %11 = vector.load %arg4[%c0_5, %c0_6] : memref<8x16xbf16, #tpu.memory_space<vmem>>, vector<8x16xbf16>
    %cst_7 = arith.constant dense<0.000000e+00> : vector<128x16xf32>
    %12 = tpu.matmul %10, %11, %cst_7 {dimension_numbers = #tpu.dot_dimension_numbers<[1], [0], [0], [1], [0, 0, 1, 1], [], []>} : vector<128x8xbf16>, vector<8x16xbf16>, vector<128x16xf32> -> vector<128x16xf32>
    %13 = arith.truncf %12 : vector<128x16xf32> to vector<128x16xbf16>
    %c0_8 = arith.constant 0 : index
    %c0_9 = arith.constant 0 : index
    %14 = vector.load %arg5[%c0_8, %c0_9] : memref<128x16xbf16, #tpu.memory_space<vmem>>, vector<128x16xbf16>
    tpu.vector_store %arg5[%c0_8, %c0_9], %13 {strides = array<i32>} : memref<128x16xbf16, #tpu.memory_space<vmem>>, vector<128x16xbf16>,
    %cst_10 = arith.constant dense<0.000000e+00> : vector<16xf32>
    %15 = vector.multi_reduction <add>, %12, %cst_10 [0] : vector<128x16xf32> to vector<16xf32>
    %16 = vector.shape_cast %15 : vector<16xf32> to vector<1x16xf32>
    %c0_11 = arith.constant 0 : index
    %c0_12 = arith.constant 0 : index
    %c0_13 = arith.constant 0 : index
    %17 = vector.load %arg6[%c0_11, %c0_12, %c0_13] : memref<1x2x16xf32, #tpu.memory_space<vmem>>, vector<1x1x16xf32>
    %18 = vector.shape_cast %17 : vector<1x1x16xf32> to vector<1x16xf32>
    %19 = vector.shape_cast %16 : vector<1x16xf32> to vector<1x1x16xf32>
    tpu.vector_store %arg6[%c0_11, %c0_12, %c0_13], %19 {strides = array<i32>} : memref<1x2x16xf32, #tpu.memory_space<vmem>>, vector<1x1x16xf32>,
    %20 = arith.mulf %12, %12 : vector<128x16xf32>
    %cst_14 = arith.constant dense<0.000000e+00> : vector<16xf32>
    %21 = vector.multi_reduction <add>, %20, %cst_14 [0] : vector<128x16xf32> to vector<16xf32>
    %22 = vector.shape_cast %21 : vector<16xf32> to vector<1x16xf32>
    %c0_15 = arith.constant 0 : index
    %c1 = arith.constant 1 : index
    %c0_16 = arith.constant 0 : index
    %23 = vector.load %arg6[%c0_15, %c1, %c0_16] : memref<1x2x16xf32, #tpu.memory_space<vmem>>, vector<1x1x16xf32>
    %24 = vector.shape_cast %23 : vector<1x1x16xf32> to vector<1x16xf32>
    %25 = vector.shape_cast %22 : vector<1x16xf32> to vector<1x1x16xf32>
    tpu.vector_store %arg6[%c0_15, %c1, %c0_16], %25 {strides = array<i32>} : memref<1x2x16xf32, #tpu.memory_space<vmem>>, vector<1x1x16xf32>,
    return
  }
  func.func @transform_0(%arg0: i32) -> (i32, i32) {
    %c0_i32 = arith.constant 0 : i32
    %c0_i32_0 = arith.constant 0 : i32
    return %arg0, %c0_i32 : i32, i32
  }
  func.func @transform_1(%arg0: i32) -> (i32, i32) {
    %c0_i32 = arith.constant 0 : i32
    %c0_i32_0 = arith.constant 0 : i32
    %c0_i32_1 = arith.constant 0 : i32
    return %c0_i32, %c0_i32_0 : i32, i32
  }
  func.func @transform_2(%arg0: i32) -> (i32, i32) {
    %c0_i32 = arith.constant 0 : i32
    %c0_i32_0 = arith.constant 0 : i32
    %c0_i32_1 = arith.constant 0 : i32
    return %c0_i32, %c0_i32_0 : i32, i32
  }
  func.func @transform_3(%arg0: i32) -> (i32, i32) {
    %c0_i32 = arith.constant 0 : i32
    %c0_i32_0 = arith.constant 0 : i32
    %c0_i32_1 = arith.constant 0 : i32
    return %c0_i32, %c0_i32_0 : i32, i32
  }
  func.func @transform_4(%arg0: i32) -> (i32, i32) {
    %c0_i32 = arith.constant 0 : i32
    %c0_i32_0 = arith.constant 0 : i32
    return %arg0, %c0_i32 : i32, i32
  }
  func.func @transform_5(%arg0: i32) -> (i32, i32, i32) {
    %c0_i32 = arith.constant 0 : i32
    %c0_i32_0 = arith.constant 0 : i32
    %c0_i32_1 = arith.constant 0 : i32
    return %arg0, %c0_i32, %c0_i32_0 : i32, i32, i32
  }
}

</mosaic_0001>

<llo_original>
// kernel: conv_block_forward.7
$region0: #{conv_block_forward.7}
  #allocation0 [shape = 'u32[]', space=smem, size = 0x4, offset = 0x4, fixed_abs, tag = 'smem constant byte address 0x4 - core index']
  #allocation1 [shape = 'u32[72,128]{1,0:T(1,128)}', space=vmem, size = 0x9000, scoped, tag = 'internal scratch']
  %s0 = inlined_call_operand.vmem [shape: bf16[128,16], index: 0, kind: input, shape index: {}]
  %s1 = inlined_call_operand.vmem [shape: bf16[128,16], index: 1, kind: input, shape index: {}]
  %s2 = inlined_call_operand.vmem [shape: f32[1,16], index: 2, kind: input, shape index: {}]
  %s3 = inlined_call_operand.vmem [shape: f32[1,16], index: 3, kind: input, shape index: {}]
  %s4 = inlined_call_operand.vmem [shape: f32[1,16], index: 4, kind: input, shape index: {}]
  %s5 = inlined_call_operand.vmem [shape: f32[1,16], index: 5, kind: input, shape index: {}]
  %s6 = inlined_call_operand.hbm [shape: f32[128,16], index: 6, kind: output, shape index: {}]
  %s7 = sld [smem:[#allocation0]]
  $region34: #{conv_block_forward.7} parent=0
    _
  %s9 = ssub.s32 1, %s7
  %s10 = scalar_select 0, %s9, %s7
  $region1: #{conv_block_forward.7} parent=0
    #allocation2 [shape = 'u8[65536]{0}', space=vmem, size = 0x10000, scoped, tag = 'output window, operand 0, single buffered']
    #allocation3 [shape = 's32[1]{0}', space=sflag, size = 0x4, scoped, tag = 'scoped memory for conv_block_forward.7']
    %11 = vsyncpa [#allocation3], 0
    // Predicated region
    $region2: #{conv_block_forward.7} parent=1 // pred_check
      _
    $region3: #{conv_block_forward.7} parent=1 // pred_check_branch
      %13 = sbr.rel (0) target = $region5
    $region4: #{conv_block_forward.7} parent=1 // pred_region
      _
    $region5: #{conv_block_forward.7} parent=1 // pred_fallthru
      _
    // Predicated region
    $region6: #{conv_block_forward.7} parent=1 // pred_check
      _
    $region7: #{conv_block_forward.7} parent=1 // pred_check_branch
      %15 = sbr.rel (0) target = $region9
    $region8: #{conv_block_forward.7} parent=1 // pred_region
      _
    $region9: #{conv_block_forward.7} parent=1 // pred_fallthru
      _
    // Predicated region
    $region10: #{conv_block_forward.7} parent=1 // pred_check
      _
    $region11: #{conv_block_forward.7} parent=1 // pred_check_branch
      %17 = sbr.rel (0) target = $region13
    $region12: #{conv_block_forward.7} parent=1 // pred_region
      _
    $region13: #{conv_block_forward.7} parent=1 // pred_fallthru
      _
    // Predicated region
    $region14: #{conv_block_forward.7} parent=1 // pred_check
      _
    $region15: #{conv_block_forward.7} parent=1 // pred_check_branch
      %19 = sbr.rel (0) target = $region17
    $region16: #{conv_block_forward.7} parent=1 // pred_region
      _
    $region17: #{conv_block_forward.7} parent=1 // pred_fallthru
      _
    // Predicated region
    $region18: #{conv_block_forward.7} parent=1 // pred_check
      _
    $region19: #{conv_block_forward.7} parent=1 // pred_check_branch
      %21 = sbr.rel (0) target = $region21
    $region20: #{conv_block_forward.7} parent=1 // pred_region
      _
    $region21: #{conv_block_forward.7} parent=1 // pred_fallthru
      _
    // Predicated region
    $region22: #{conv_block_forward.7} parent=1 // pred_check
      _
    $region23: #{conv_block_forward.7} parent=1 // pred_check_branch
      %23 = sbr.rel (0) target = $region25
    $region24: #{conv_block_forward.7} parent=1 // pred_region
      _
    $region25: #{conv_block_forward.7} parent=1 // pred_fallthru
      _
    %v24 = vld [vmem:[%s0] sm:$0xf]
    %v25 = vld [vmem:[%s0 + $0x4] sm:$0xf]
    %v26 = vld [vmem:[%s0 + $0x8] sm:$0xf]
    %v27 = vld [vmem:[%s0 + $0xc] sm:$0xf]
    %v28 = vld [vmem:[%s0 + $0x10] sm:$0xf]
    %v29 = vld [vmem:[%s0 + $0x14] sm:$0xf]
    %v30 = vld [vmem:[%s0 + $0x18] sm:$0xf]
    %v31 = vld [vmem:[%s0 + $0x1c] sm:$0xf]
    %v32 = vld [vmem:[%s0 + $0x20] sm:$0xf]
    %v33 = vld [vmem:[%s0 + $0x24] sm:$0xf]
    %v34 = vld [vmem:[%s0 + $0x28] sm:$0xf]
    %v35 = vld [vmem:[%s0 + $0x2c] sm:$0xf]
    %v36 = vld [vmem:[%s0 + $0x30] sm:$0xf]
    %v37 = vld [vmem:[%s0 + $0x34] sm:$0xf]
    %v38 = vld [vmem:[%s0 + $0x38] sm:$0xf]
    %v39 = vld [vmem:[%s0 + $0x3c] sm:$0xf]
    %v40 = vunpack.c.l.bf16 %v24
    %v41 = vunpack.c.l.bf16 %v25
    %v42 = vunpack.c.l.bf16 %v26
    %v43 = vunpack.c.l.bf16 %v27
    %v44 = vunpack.c.l.bf16 %v28
    %v45 = vunpack.c.l.bf16 %v29
    %v46 = vunpack.c.l.bf16 %v30
    %v47 = vunpack.c.l.bf16 %v31
    %v48 = vunpack.c.l.bf16 %v32
    %v49 = vunpack.c.l.bf16 %v33
    %v50 = vunpack.c.l.bf16 %v34
    %v51 = vunpack.c.l.bf16 %v35
    %v52 = vunpack.c.l.bf16 %v36
    %v53 = vunpack.c.l.bf16 %v37
    %v54 = vunpack.c.l.bf16 %v38
    %v55 = vunpack.c.l.bf16 %v39
    %v56 = vld [vmem:[%s2] sm:$0x1]
    %v58 = vperm.slane %v56, 0
    %v60 = vmul.f32 %v40, %v58
    %v61 = vmul.f32 %v41, %v58
    %v62 = vmul.f32 %v42, %v58
    %v63 = vmul.f32 %v43, %v58
    %v64 = vmul.f32 %v44, %v58
    %v65 = vmul.f32 %v45, %v58
    %v66 = vmul.f32 %v46, %v58
    %v67 = vmul.f32 %v47, %v58
    %v68 = vmul.f32 %v48, %v58
    %v69 = vmul.f32 %v49, %v58
    %v70 = vmul.f32 %v50, %v58
    %v71 = vmul.f32 %v51, %v58
    %v72 = vmul.f32 %v52, %v58
    %v73 = vmul.f32 %v53, %v58
    %v74 = vmul.f32 %v54, %v58
    %v75 = vmul.f32 %v55, %v58
    %v76 = vld [vmem:[%s3] sm:$0x1]
    %v78 = vperm.slane %v76, 0
    %v80 = vadd.f32 %v60, %v78
    %v81 = vadd.f32 %v61, %v78
    %v82 = vadd.f32 %v62, %v78
    %v83 = vadd.f32 %v63, %v78
    %v84 = vadd.f32 %v64, %v78
    %v85 = vadd.f32 %v65, %v78
    %v86 = vadd.f32 %v66, %v78
    %v87 = vadd.f32 %v67, %v78
    %v88 = vadd.f32 %v68, %v78
    %v89 = vadd.f32 %v69, %v78
    %v90 = vadd.f32 %v70, %v78
    %v91 = vadd.f32 %v71, %v78
    %v92 = vadd.f32 %v72, %v78
    %v93 = vadd.f32 %v73, %v78
    %v94 = vadd.f32 %v74, %v78
    %v95 = vadd.f32 %v75, %v78
    %v96 = vld [vmem:[%s1] sm:$0xf]
    %v97 = vld [vmem:[%s1 + $0x4] sm:$0xf]
    %v98 = vld [vmem:[%s1 + $0x8] sm:$0xf]
    %v99 = vld [vmem:[%s1 + $0xc] sm:$0xf]
    %v100 = vld [vmem:[%s1 + $0x10] sm:$0xf]
    %v101 = vld [vmem:[%s1 + $0x14] sm:$0xf]
    %v102 = vld [vmem:[%s1 + $0x18] sm:$0xf]
    %v103 = vld [vmem:[%s1 + $0x1c] sm:$0xf]
    %v104 = vld [vmem:[%s1 + $0x20] sm:$0xf]
    %v105 = vld [vmem:[%s1 + $0x24] sm:$0xf]
    %v106 = vld [vmem:[%s1 + $0x28] sm:$0xf]
    %v107 = vld [vmem:[%s1 + $0x2c] sm:$0xf]
    %v108 = vld [vmem:[%s1 + $0x30] sm:$0xf]
    %v109 = vld [vmem:[%s1 + $0x34] sm:$0xf]
    %v110 = vld [vmem:[%s1 + $0x38] sm:$0xf]
    %v111 = vld [vmem:[%s1 + $0x3c] sm:$0xf]
    %v112 = vunpack.c.l.bf16 %v96
    %v113 = vunpack.c.l.bf16 %v97
    %v114 = vunpack.c.l.bf16 %v98
    %v115 = vunpack.c.l.bf16 %v99
    %v116 = vunpack.c.l.bf16 %v100
    %v117 = vunpack.c.l.bf16 %v101
    %v118 = vunpack.c.l.bf16 %v102
    %v119 = vunpack.c.l.bf16 %v103
    %v120 = vunpack.c.l.bf16 %v104
    %v121 = vunpack.c.l.bf16 %v105
    %v122 = vunpack.c.l.bf16 %v106
    %v123 = vunpack.c.l.bf16 %v107
    %v124 = vunpack.c.l.bf16 %v108
    %v125 = vunpack.c.l.bf16 %v109
    %v126 = vunpack.c.l.bf16 %v110
    %v127 = vunpack.c.l.bf16 %v111
    %v128 = vld [vmem:[%s4] sm:$0x1]
    %v130 = vperm.slane %v128, 0
    %v132 = vmul.f32 %v112, %v130
    %v133 = vmul.f32 %v113, %v130
    %v134 = vmul.f32 %v114, %v130
    %v135 = vmul.f32 %v115, %v130
    %v136 = vmul.f32 %v116, %v130
    %v137 = vmul.f32 %v117, %v130
    %v138 = vmul.f32 %v118, %v130
    %v139 = vmul.f32 %v119, %v130
    %v140 = vmul.f32 %v120, %v130
    %v141 = vmul.f32 %v121, %v130
    %v142 = vmul.f32 %v122, %v130
    %v143 = vmul.f32 %v123, %v130
    %v144 = vmul.f32 %v124, %v130
    %v145 = vmul.f32 %v125, %v130
    %v146 = vmul.f32 %v126, %v130
    %v147 = vmul.f32 %v127, %v130
    %v148 = vld [vmem:[%s5] sm:$0x1]
    %v150 = vperm.slane %v148, 0
    %v152 = vadd.f32 %v132, %v150
    %v153 = vadd.f32 %v133, %v150
    %v154 = vadd.f32 %v134, %v150
    %v155 = vadd.f32 %v135, %v150
    %v156 = vadd.f32 %v136, %v150
    %v157 = vadd.f32 %v137, %v150
    %v158 = vadd.f32 %v138, %v150
    %v159 = vadd.f32 %v139, %v150
    %v160 = vadd.f32 %v140, %v150
    %v161 = vadd.f32 %v141, %v150
    %v162 = vadd.f32 %v142, %v150
    %v163 = vadd.f32 %v143, %v150
    %v164 = vadd.f32 %v144, %v150
    %v165 = vadd.f32 %v145, %v150
    %v166 = vadd.f32 %v146, %v150
    %v167 = vadd.f32 %v147, %v150
    %v168 = vadd.f32 %v80, %v152
    %v169 = vadd.f32 %v81, %v153
    %v170 = vadd.f32 %v82, %v154
    %v171 = vadd.f32 %v83, %v155
    %v172 = vadd.f32 %v84, %v156
    %v173 = vadd.f32 %v85, %v157
    %v174 = vadd.f32 %v86, %v158
    %v175 = vadd.f32 %v87, %v159
    %v176 = vadd.f32 %v88, %v160
    %v177 = vadd.f32 %v89, %v161
    %v178 = vadd.f32 %v90, %v162
    %v179 = vadd.f32 %v91, %v163
    %v180 = vadd.f32 %v92, %v164
    %v181 = vadd.f32 %v93, %v165
    %v182 = vadd.f32 %v94, %v166
    %v183 = vadd.f32 %v95, %v167
    %v184 = vmax.f32 %v168, 0.0
    %v185 = vmax.f32 %v169, 0.0
    %v186 = vmax.f32 %v170, 0.0
    %v187 = vmax.f32 %v171, 0.0
    %v188 = vmax.f32 %v172, 0.0
    %v189 = vmax.f32 %v173, 0.0
    %v190 = vmax.f32 %v174, 0.0
    %v191 = vmax.f32 %v175, 0.0
    %v192 = vmax.f32 %v176, 0.0
    %v193 = vmax.f32 %v177, 0.0
    %v194 = vmax.f32 %v178, 0.0
    %v195 = vmax.f32 %v179, 0.0
    %v196 = vmax.f32 %v180, 0.0
    %v197 = vmax.f32 %v181, 0.0
    %v198 = vmax.f32 %v182, 0.0
    %v199 = vmax.f32 %v183, 0.0
    %vm200 = vcmask 130048
    %201 = vst.msk [vmem:[#allocation2] sm:$0xff] %vm200, %v184
    %202 = vst.msk [vmem:[#allocation2 + $0x8] sm:$0xff] %vm200, %v185
    %203 = vst.msk [vmem:[#allocation2 + $0x10] sm:$0xff] %vm200, %v186
    %204 = vst.msk [vmem:[#allocation2 + $0x18] sm:$0xff] %vm200, %v187
    %205 = vst.msk [vmem:[#allocation2 + $0x20] sm:$0xff] %vm200, %v188
    %206 = vst.msk [vmem:[#allocation2 + $0x28] sm:$0xff] %vm200, %v189
    %207 = vst.msk [vmem:[#allocation2 + $0x30] sm:$0xff] %vm200, %v190
    %208 = vst.msk [vmem:[#allocation2 + $0x38] sm:$0xff] %vm200, %v191
    %209 = vst.msk [vmem:[#allocation2 + $0x40] sm:$0xff] %vm200, %v192
    %210 = vst.msk [vmem:[#allocation2 + $0x48] sm:$0xff] %vm200, %v193
    %211 = vst.msk [vmem:[#allocation2 + $0x50] sm:$0xff] %vm200, %v194
    %212 = vst.msk [vmem:[#allocation2 + $0x58] sm:$0xff] %vm200, %v195
    %213 = vst.msk [vmem:[#allocation2 + $0x60] sm:$0xff] %vm200, %v196
    %214 = vst.msk [vmem:[#allocation2 + $0x68] sm:$0xff] %vm200, %v197
    %215 = vst.msk [vmem:[#allocation2 + $0x70] sm:$0xff] %vm200, %v198
    %216 = vst.msk [vmem:[#allocation2 + $0x78] sm:$0xff] %vm200, %v199
    // Predicated region
    $region26: #{conv_block_forward.7} parent=1 // pred_check
      _
    $region27: #{conv_block_forward.7} parent=1 // pred_check_branch
      %218 = sbr.rel (0) target = $region29
    $region28: #{conv_block_forward.7} parent=1 // pred_region
      %220 = vsyncadd [#allocation3], 0
      %s221 = sshll.u32 [#allocation2], 4
      %s222 = int_to_ptr.vmem [resolvable:$true] %s221
      %s223 = sshll.u32 %s6, 4
      %s224 = int_to_ptr.hbm [resolvable:$true] %s223
      %229 = dma.vmem_to_hbm [thread:$0]  %s222, 2048, %s224, [#allocation3], 128, 128, 8
    $region29: #{conv_block_forward.7} parent=1 // pred_fallthru
      _
    // Predicated region
    $region30: #{conv_block_forward.7} parent=1 // pred_check
      _
    $region31: #{conv_block_forward.7} parent=1 // pred_check_branch
      %231 = sbr.rel (0) target = $region33
    $region32: #{conv_block_forward.7} parent=1 // pred_region
      %233 = dma.done [#allocation3], 2048
    $region33: #{conv_block_forward.7} parent=1 // pred_fallthru
      _
    %234 = vsyncpa [#allocation3], 1

// kernel: conv_block_forward.4
$region0: #{conv_block_forward.4}
  #allocation0 [shape = 'u32[]', space=smem, size = 0x4, offset = 0x4, fixed_abs, tag = 'smem constant byte address 0x4 - core index']
  #allocation1 [shape = 'u32[72,128]{1,0:T(1,128)}', space=vmem, size = 0x9000, scoped, tag = 'internal scratch']
  %s0 = inlined_call_operand.vmem [shape: bf16[128,4], index: 0, kind: input, shape index: {}]
  %s1 = inlined_call_operand.vmem [shape: bf16[4,8], index: 1, kind: input, shape index: {}]
  %s2 = inlined_call_operand.vmem [shape: bf16[4,16], index: 2, kind: input, shape index: {}]
  %s3 = inlined_call_operand.vmem [shape: bf16[128,8], index: 3, kind: output, shape index: {0}]
  %s4 = inlined_call_operand.vmem [shape: bf16[128,16], index: 4, kind: output, shape index: {1}]
  %s5 = inlined_call_operand.vmem [shape: f32[1,2,8], index: 5, kind: output, shape index: {2}]
  %s6 = inlined_call_operand.vmem [shape: f32[1,2,16], index: 6, kind: output, shape index: {3}]
  %7 = xla_tuple %s3, %s4, %s5, %s6
  %s8 = sld [smem:[#allocation0]]
  $region46: #{conv_block_forward.4} parent=0
    _
  %s10 = ssub.s32 1, %s8
  %s11 = scalar_select 0, %s10, %s8
  // Predicated region
  $region2: #{conv_block_forward.4} parent=0 // pred_check
    _
  $region3: #{conv_block_forward.4} parent=0 // pred_check_branch
    %13 = sbr.rel (0) target = $region5
  $region4: #{conv_block_forward.4} parent=0 // pred_region
    _
  $region5: #{conv_block_forward.4} parent=0 // pred_fallthru
    _
  // Predicated region
  $region6: #{conv_block_forward.4} parent=0 // pred_check
    _
  $region7: #{conv_block_forward.4} parent=0 // pred_check_branch
    %15 = sbr.rel (0) target = $region9
  $region8: #{conv_block_forward.4} parent=0 // pred_region
    _
  $region9: #{conv_block_forward.4} parent=0 // pred_fallthru
    _
  // Predicated region
  $region10: #{conv_block_forward.4} parent=0 // pred_check
    _
  $region11: #{conv_block_forward.4} parent=0 // pred_check_branch
    %17 = sbr.rel (0) target = $region13
  $region12: #{conv_block_forward.4} parent=0 // pred_region
    _
  $region13: #{conv_block_forward.4} parent=0 // pred_fallthru
    _
  %v19 = vld [vmem:[%s0] sm:$0xf]
  %v20 = vld [vmem:[%s0 + $0x4] sm:$0xf]
  %v21 = vld [vmem:[%s0 + $0x8] sm:$0xf]
  %v22 = vld [vmem:[%s0 + $0xc] sm:$0xf]
  %v23 = vld [vmem:[%s0 + $0x10] sm:$0xf]
  %v24 = vld [vmem:[%s0 + $0x14] sm:$0xf]
  %v25 = vld [vmem:[%s0 + $0x18] sm:$0xf]
  %v26 = vld [vmem:[%s0 + $0x1c] sm:$0xf]
  %v27 = vld [vmem:[%s0 + $0x20] sm:$0xf]
  %v28 = vld [vmem:[%s0 + $0x24] sm:$0xf]
  %v29 = vld [vmem:[%s0 + $0x28] sm:$0xf]
  %v30 = vld [vmem:[%s0 + $0x2c] sm:$0xf]
  %v31 = vld [vmem:[%s0 + $0x30] sm:$0xf]
  %v32 = vld [vmem:[%s0 + $0x34] sm:$0xf]
  %v33 = vld [vmem:[%s0 + $0x38] sm:$0xf]
  %v34 = vld [vmem:[%s0 + $0x3c] sm:$0xf]
  %v35 = vld [vmem:[%s1] sm:$0x3]
  %v52 = vunpack.c.l.b16 %v19
  %v53 = vunpack.c.l.b16 %v20
  %v54 = vunpack.c.l.b16 %v21
  %v55 = vunpack.c.l.b16 %v22
  %v56 = vunpack.c.l.b16 %v23
  %v57 = vunpack.c.l.b16 %v24
  %v58 = vunpack.c.l.b16 %v25
  %v59 = vunpack.c.l.b16 %v26
  %v60 = vunpack.c.l.b16 %v27
  %v61 = vunpack.c.l.b16 %v28
  %v62 = vunpack.c.l.b16 %v29
  %v63 = vunpack.c.l.b16 %v30
  %v64 = vunpack.c.l.b16 %v31
  %v65 = vunpack.c.l.b16 %v32
  %v66 = vunpack.c.l.b16 %v33
  %v67 = vunpack.c.l.b16 %v34
  %v68 = vpack.c.b16 %v53, %v52
  %v69 = vpack.c.b16 %v55, %v54
  %v70 = vpack.c.b16 %v57, %v56
  %v71 = vpack.c.b16 %v59, %v58
  %v72 = vpack.c.b16 %v61, %v60
  %v73 = vpack.c.b16 %v63, %v62
  %v74 = vpack.c.b16 %v65, %v64
  %v75 = vpack.c.b16 %v67, %v66
  %vm76 = vcmask 31744
  %v78 = vsel %vm76, %v68, 0
  %v81 = vsel %vm76, %v69, 0
  %v84 = vsel %vm76, %v70, 0
  %v87 = vsel %vm76, %v71, 0
  %v90 = vsel %vm76, %v72, 0
  %v93 = vsel %vm76, %v73, 0
  %v96 = vsel %vm76, %v74, 0
  %v99 = vsel %vm76, %v75, 0
  %vm101 = vcmask 1041408
  %v103 = vsel %vm101, %v35, 0
  %105 = vmatpush.bf16.msra.mxu0 0
  %106 = vmatpush.bf16.msra.mxu0 0
  %107 = vmatpush.bf16.msra.mxu0 0
  %108 = vmatpush.bf16.msra.mxu0 0
  %109 = vmatpush.bf16.msra.mxu0 0
  %110 = vmatpush.bf16.msra.mxu0 0
  %111 = vmatpush.bf16.msra.mxu0 0
  %112 = vmatpush.bf16.msra.mxu0 %v103
  %113 = vmatmul.bf16.gmra.mxu0 %v78
  %v114 = vpop.f32.mrf.mxu0
  %v115 = vadd.f32 0.0, %v114
  %v116 = vpop.f32.mrf.mxu0
  %v117 = vadd.f32 0.0, %v116
  %118 = vmatmul.bf16.gmra.mxu0 %v81
  %v119 = vpop.f32.mrf.mxu0
  %v120 = vadd.f32 0.0, %v119
  %v121 = vpop.f32.mrf.mxu0
  %v122 = vadd.f32 0.0, %v121
  %123 = vmatmul.bf16.gmra.mxu0 %v84
  %v124 = vpop.f32.mrf.mxu0
  %v125 = vadd.f32 0.0, %v124
  %v126 = vpop.f32.mrf.mxu0
  %v127 = vadd.f32 0.0, %v126
  %128 = vmatmul.bf16.gmra.mxu0 %v87
  %v129 = vpop.f32.mrf.mxu0
  %v130 = vadd.f32 0.0, %v129
  %v131 = vpop.f32.mrf.mxu0
  %v132 = vadd.f32 0.0, %v131
  %133 = vmatmul.bf16.gmra.mxu0 %v90
  %v134 = vpop.f32.mrf.mxu0
  %v135 = vadd.f32 0.0, %v134
  %v136 = vpop.f32.mrf.mxu0
  %v137 = vadd.f32 0.0, %v136
  %138 = vmatmul.bf16.gmra.mxu0 %v93
  %v139 = vpop.f32.mrf.mxu0
  %v140 = vadd.f32 0.0, %v139
  %v141 = vpop.f32.mrf.mxu0
  %v142 = vadd.f32 0.0, %v141
  %143 = vmatmul.bf16.gmra.mxu0 %v96
  %v144 = vpop.f32.mrf.mxu0
  %v145 = vadd.f32 0.0, %v144
  %v146 = vpop.f32.mrf.mxu0
  %v147 = vadd.f32 0.0, %v146
  %148 = vmatmul.bf16.gmra.mxu0 %v99
  %v149 = vpop.f32.mrf.mxu0
  %v150 = vadd.f32 0.0, %v149
  %v151 = vpop.f32.mrf.mxu0
  %v152 = vadd.f32 0.0, %v151
  %153 = vdwg.mxu0
  %v154 = vld [vmem:[%s2] sm:$0x3]
  %v156 = vsel %vm101, %v154, 0
  %158 = vmatpush.bf16.msra.mxu0 0
  %159 = vmatpush.bf16.msra.mxu0 0
  %160 = vmatpush.bf16.msra.mxu0 0
  %161 = vmatpush.bf16.msra.mxu0 0
  %162 = vmatpush.bf16.msra.mxu0 0
  %163 = vmatpush.bf16.msra.mxu0 0
  %164 = vmatpush.bf16.msra.mxu0 0
  %165 = vmatpush.bf16.msra.mxu0 %v156
  %166 = vmatmul.bf16.gmra.mxu0 %v78
  %v167 = vpop.f32.mrf.mxu0
  %v168 = vadd.f32 0.0, %v167
  %v169 = vpop.f32.mrf.mxu0
  %v170 = vadd.f32 0.0, %v169
  %171 = vmatmul.bf16.gmra.mxu0 %v81
  %v172 = vpop.f32.mrf.mxu0
  %v173 = vadd.f32 0.0, %v172
  %v174 = vpop.f32.mrf.mxu0
  %v175 = vadd.f32 0.0, %v174
  %176 = vmatmul.bf16.gmra.mxu0 %v84
  %v177 = vpop.f32.mrf.mxu0
  %v178 = vadd.f32 0.0, %v177
  %v179 = vpop.f32.mrf.mxu0
  %v180 = vadd.f32 0.0, %v179
  %181 = vmatmul.bf16.gmra.mxu0 %v87
  %v182 = vpop.f32.mrf.mxu0
  %v183 = vadd.f32 0.0, %v182
  %v184 = vpop.f32.mrf.mxu0
  %v185 = vadd.f32 0.0, %v184
  %186 = vmatmul.bf16.gmra.mxu0 %v90
  %v187 = vpop.f32.mrf.mxu0
  %v188 = vadd.f32 0.0, %v187
  %v189 = vpop.f32.mrf.mxu0
  %v190 = vadd.f32 0.0, %v189
  %191 = vmatmul.bf16.gmra.mxu0 %v93
  %v192 = vpop.f32.mrf.mxu0
  %v193 = vadd.f32 0.0, %v192
  %v194 = vpop.f32.mrf.mxu0
  %v195 = vadd.f32 0.0, %v194
  %196 = vmatmul.bf16.gmra.mxu0 %v96
  %v197 = vpop.f32.mrf.mxu0
  %v198 = vadd.f32 0.0, %v197
  %v199 = vpop.f32.mrf.mxu0
  %v200 = vadd.f32 0.0, %v199
  %201 = vmatmul.bf16.gmra.mxu0 %v99
  %v202 = vpop.f32.mrf.mxu0
  %v203 = vadd.f32 0.0, %v202
  %v204 = vpop.f32.mrf.mxu0
  %v205 = vadd.f32 0.0, %v204
  %206 = vdwg.mxu0
  %v207 = vpack.c.bf16 %v115, %v115
  %v208 = vpack.c.bf16 %v117, %v117
  %v209 = vpack.c.bf16 %v120, %v120
  %v210 = vpack.c.bf16 %v122, %v122
  %v211 = vpack.c.bf16 %v125, %v125
  %v212 = vpack.c.bf16 %v127, %v127
  %v213 = vpack.c.bf16 %v130, %v130
  %v214 = vpack.c.bf16 %v132, %v132
  %v215 = vpack.c.bf16 %v135, %v135
  %v216 = vpack.c.bf16 %v137, %v137
  %v217 = vpack.c.bf16 %v140, %v140
  %v218 = vpack.c.bf16 %v142, %v142
  %v219 = vpack.c.bf16 %v145, %v145
  %v220 = vpack.c.bf16 %v147, %v147
  %v221 = vpack.c.bf16 %v150, %v150
  %v222 = vpack.c.bf16 %v152, %v152
  %vm223 = vcmask 60416
  %224 = vst.msk [vmem:[%s3] sm:$0xf] %vm223, %v207
  %225 = vst.msk [vmem:[%s3 + $0x4] sm:$0xf] %vm223, %v208
  %226 = vst.msk [vmem:[%s3 + $0x8] sm:$0xf] %vm223, %v209
  %227 = vst.msk [vmem:[%s3 + $0xc] sm:$0xf] %vm223, %v210
  %228 = vst.msk [vmem:[%s3 + $0x10] sm:$0xf] %vm223, %v211
  %229 = vst.msk [vmem:[%s3 + $0x14] sm:$0xf] %vm223, %v212
  %230 = vst.msk [vmem:[%s3 + $0x18] sm:$0xf] %vm223, %v213
  %231 = vst.msk [vmem:[%s3 + $0x1c] sm:$0xf] %vm223, %v214
  %232 = vst.msk [vmem:[%s3 + $0x20] sm:$0xf] %vm223, %v215
  %233 = vst.msk [vmem:[%s3 + $0x24] sm:$0xf] %vm223, %v216
  %234 = vst.msk [vmem:[%s3 + $0x28] sm:$0xf] %vm223, %v217
  %235 = vst.msk [vmem:[%s3 + $0x2c] sm:$0xf] %vm223, %v218
  %236 = vst.msk [vmem:[%s3 + $0x30] sm:$0xf] %vm223, %v219
  %237 = vst.msk [vmem:[%s3 + $0x34] sm:$0xf] %vm223, %v220
  %238 = vst.msk [vmem:[%s3 + $0x38] sm:$0xf] %vm223, %v221
  %239 = vst.msk [vmem:[%s3 + $0x3c] sm:$0xf] %vm223, %v222
  %v240 = vpack.c.bf16 %v168, %v168
  %v241 = vpack.c.bf16 %v170, %v170
  %v242 = vpack.c.bf16 %v173, %v173
  %v243 = vpack.c.bf16 %v175, %v175
  %v244 = vpack.c.bf16 %v178, %v178
  %v245 = vpack.c.bf16 %v180, %v180
  %v246 = vpack.c.bf16 %v183, %v183
  %v247 = vpack.c.bf16 %v185, %v185
  %v248 = vpack.c.bf16 %v188, %v188
  %v249 = vpack.c.bf16 %v190, %v190
  %v250 = vpack.c.bf16 %v193, %v193
  %v251 = vpack.c.bf16 %v195, %v195
  %v252 = vpack.c.bf16 %v198, %v198
  %v253 = vpack.c.bf16 %v200, %v200
  %v254 = vpack.c.bf16 %v203, %v203
  %v255 = vpack.c.bf16 %v205, %v205
  %vm256 = vcmask 125952
  %257 = vst.msk [vmem:[%s4] sm:$0xf] %vm256, %v240
  %258 = vst.msk [vmem:[%s4 + $0x4] sm:$0xf] %vm256, %v241
  %259 = vst.msk [vmem:[%s4 + $0x8] sm:$0xf] %vm256, %v242
  %260 = vst.msk [vmem:[%s4 + $0xc] sm:$0xf] %vm256, %v243
  %261 = vst.msk [vmem:[%s4 + $0x10] sm:$0xf] %vm256, %v244
  %262 = vst.msk [vmem:[%s4 + $0x14] sm:$0xf] %vm256, %v245
  %263 = vst.msk [vmem:[%s4 + $0x18] sm:$0xf] %vm256, %v246
  %264 = vst.msk [vmem:[%s4 + $0x1c] sm:$0xf] %vm256, %v247
  %265 = vst.msk [vmem:[%s4 + $0x20] sm:$0xf] %vm256, %v248
  %266 = vst.msk [vmem:[%s4 + $0x24] sm:$0xf] %vm256, %v249
  %267 = vst.msk [vmem:[%s4 + $0x28] sm:$0xf] %vm256, %v250
  %268 = vst.msk [vmem:[%s4 + $0x2c] sm:$0xf] %vm256, %v251
  %269 = vst.msk [vmem:[%s4 + $0x30] sm:$0xf] %vm256, %v252
  %270 = vst.msk [vmem:[%s4 + $0x34] sm:$0xf] %vm256, %v253
  %271 = vst.msk [vmem:[%s4 + $0x38] sm:$0xf] %vm256, %v254
  %272 = vst.msk [vmem:[%s4 + $0x3c] sm:$0xf] %vm256, %v255
  %vm273 = vcmask 64512
  %v274 = vsel %vm273, %v115, 0.0
  %v275 = vsel %vm273, %v117, 0.0
  %v276 = vadd.f32 %v274, %v275
  %v277 = vsel %vm273, %v120, 0.0
  %v278 = vadd.f32 %v276, %v277
  %v279 = vsel %vm273, %v122, 0.0
  %v280 = vadd.f32 %v278, %v279
  %v281 = vsel %vm273, %v125, 0.0
  %v282 = vadd.f32 %v280, %v281
  %v283 = vsel %vm273, %v127, 0.0
  %v284 = vadd.f32 %v282, %v283
  %v285 = vsel %vm273, %v130, 0.0
  %v286 = vadd.f32 %v284, %v285
  %v287 = vsel %vm273, %v132, 0.0
  %v288 = vadd.f32 %v286, %v287
  %v289 = vsel %vm273, %v135, 0.0
  %v290 = vadd.f32 %v288, %v289
  %v291 = vsel %vm273, %v137, 0.0
  %v292 = vadd.f32 %v290, %v291
  %v293 = vsel %vm273, %v140, 0.0
  %v294 = vadd.f32 %v292, %v293
  %v295 = vsel %vm273, %v142, 0.0
  %v296 = vadd.f32 %v294, %v295
  %v297 = vsel %vm273, %v145, 0.0
  %v298 = vadd.f32 %v296, %v297
  %v299 = vsel %vm273, %v147, 0.0
  %v300 = vadd.f32 %v298, %v299
  %v301 = vsel %vm273, %v150, 0.0
  %v302 = vadd.f32 %v300, %v301
  %v303 = vsel %vm273, %v152, 0.0
  %v304 = vadd.f32 %v302, %v303
  %v305 = vrot.slane %v304, 4
  %v306 = vadd.f32 %v304, %v305
  %v307 = vrot.slane %v306, 2
  %v308 = vadd.f32 %v306, %v307
  %v309 = vrot.slane %v308, 1
  %v310 = vadd.f32 %v308, %v309
  %vm311 = vcmask 57344
  %312 = vst.msk [vmem:[%s5] sm:$0x1] %vm311, %v310
  %v313 = vmul.f32 %v115, %v115
  %v314 = vmul.f32 %v117, %v117
  %v315 = vmul.f32 %v120, %v120
  %v316 = vmul.f32 %v122, %v122
  %v317 = vmul.f32 %v125, %v125
  %v318 = vmul.f32 %v127, %v127
  %v319 = vmul.f32 %v130, %v130
  %v320 = vmul.f32 %v132, %v132
  %v321 = vmul.f32 %v135, %v135
  %v322 = vmul.f32 %v137, %v137
  %v323 = vmul.f32 %v140, %v140
  %v324 = vmul.f32 %v142, %v142
  %v325 = vmul.f32 %v145, %v145
  %v326 = vmul.f32 %v147, %v147
  %v327 = vmul.f32 %v150, %v150
  %v328 = vmul.f32 %v152, %v152
  %v329 = vsel %vm273, %v313, 0.0
  %v330 = vsel %vm273, %v314, 0.0
  %v331 = vadd.f32 %v329, %v330
  %v332 = vsel %vm273, %v315, 0.0
  %v333 = vadd.f32 %v331, %v332
  %v334 = vsel %vm273, %v316, 0.0
  %v335 = vadd.f32 %v333, %v334
  %v336 = vsel %vm273, %v317, 0.0
  %v337 = vadd.f32 %v335, %v336
  %v338 = vsel %vm273, %v318, 0.0
  %v339 = vadd.f32 %v337, %v338
  %v340 = vsel %vm273, %v319, 0.0
  %v341 = vadd.f32 %v339, %v340
  %v342 = vsel %vm273, %v320, 0.0
  %v343 = vadd.f32 %v341, %v342
  %v344 = vsel %vm273, %v321, 0.0
  %v345 = vadd.f32 %v343, %v344
  %v346 = vsel %vm273, %v322, 0.0
  %v347 = vadd.f32 %v345, %v346
  %v348 = vsel %vm273, %v323, 0.0
  %v349 = vadd.f32 %v347, %v348
  %v350 = vsel %vm273, %v324, 0.0
  %v351 = vadd.f32 %v349, %v350
  %v352 = vsel %vm273, %v325, 0.0
  %v353 = vadd.f32 %v351, %v352
  %v354 = vsel %vm273, %v326, 0.0
  %v355 = vadd.f32 %v353, %v354
  %v356 = vsel %vm273, %v327, 0.0
  %v357 = vadd.f32 %v355, %v356
  %v358 = vsel %vm273, %v328, 0.0
  %v359 = vadd.f32 %v357, %v358
  %v360 = vrot.slane %v359, 4
  %v361 = vadd.f32 %v359, %v360
  %v362 = vrot.slane %v361, 2
  %v363 = vadd.f32 %v361, %v362
  %v364 = vrot.slane %v363, 1
  %v365 = vadd.f32 %v363, %v364
  %366 = vst.msk [vmem:[%s5 + $0x1] sm:$0x1] %vm311, %v365
  %vm367 = vcmask 130048
  %v368 = vsel %vm367, %v168, 0.0
  %v369 = vsel %vm367, %v170, 0.0
  %v370 = vadd.f32 %v368, %v369
  %v371 = vsel %vm367, %v173, 0.0
  %v372 = vadd.f32 %v370, %v371
  %v373 = vsel %vm367, %v175, 0.0
  %v374 = vadd.f32 %v372, %v373
  %v375 = vsel %vm367, %v178, 0.0
  %v376 = vadd.f32 %v374, %v375
  %v377 = vsel %vm367, %v180, 0.0
  %v378 = vadd.f32 %v376, %v377
  %v379 = vsel %vm367, %v183, 0.0
  %v380 = vadd.f32 %v378, %v379
  %v381 = vsel %vm367, %v185, 0.0
  %v382 = vadd.f32 %v380, %v381
  %v383 = vsel %vm367, %v188, 0.0
  %v384 = vadd.f32 %v382, %v383
  %v385 = vsel %vm367, %v190, 0.0
  %v386 = vadd.f32 %v384, %v385
  %v387 = vsel %vm367, %v193, 0.0
  %v388 = vadd.f32 %v386, %v387
  %v389 = vsel %vm367, %v195, 0.0
  %v390 = vadd.f32 %v388, %v389
  %v391 = vsel %vm367, %v198, 0.0
  %v392 = vadd.f32 %v390, %v391
  %v393 = vsel %vm367, %v200, 0.0
  %v394 = vadd.f32 %v392, %v393
  %v395 = vsel %vm367, %v203, 0.0
  %v396 = vadd.f32 %v394, %v395
  %v397 = vsel %vm367, %v205, 0.0
  %v398 = vadd.f32 %v396, %v397
  %v399 = vrot.slane %v398, 4
  %v400 = vadd.f32 %v398, %v399
  %v401 = vrot.slane %v400, 2
  %v402 = vadd.f32 %v400, %v401
  %v403 = vrot.slane %v402, 1
  %v404 = vadd.f32 %v402, %v403
  %vm405 = vcmask 122880
  %406 = vst.msk [vmem:[%s6] sm:$0x1] %vm405, %v404
  %v407 = vmul.f32 %v168, %v168
  %v408 = vmul.f32 %v170, %v170
  %v409 = vmul.f32 %v173, %v173
  %v410 = vmul.f32 %v175, %v175
  %v411 = vmul.f32 %v178, %v178
  %v412 = vmul.f32 %v180, %v180
  %v413 = vmul.f32 %v183, %v183
  %v414 = vmul.f32 %v185, %v185
  %v415 = vmul.f32 %v188, %v188
  %v416 = vmul.f32 %v190, %v190
  %v417 = vmul.f32 %v193, %v193
  %v418 = vmul.f32 %v195, %v195
  %v419 = vmul.f32 %v198, %v198
  %v420 = vmul.f32 %v200, %v200
  %v421 = vmul.f32 %v203, %v203
  %v422 = vmul.f32 %v205, %v205
  %v423 = vsel %vm367, %v407, 0.0
  %v424 = vsel %vm367, %v408, 0.0
  %v425 = vadd.f32 %v423, %v424
  %v426 = vsel %vm367, %v409, 0.0
  %v427 = vadd.f32 %v425, %v426
  %v428 = vsel %vm367, %v410, 0.0
  %v429 = vadd.f32 %v427, %v428
  %v430 = vsel %vm367, %v411, 0.0
  %v431 = vadd.f32 %v429, %v430
  %v432 = vsel %vm367, %v412, 0.0
  %v433 = vadd.f32 %v431, %v432
  %v434 = vsel %vm367, %v413, 0.0
  %v435 = vadd.f32 %v433, %v434
  %v436 = vsel %vm367, %v414, 0.0
  %v437 = vadd.f32 %v435, %v436
  %v438 = vsel %vm367, %v415, 0.0
  %v439 = vadd.f32 %v437, %v438
  %v440 = vsel %vm367, %v416, 0.0
  %v441 = vadd.f32 %v439, %v440
  %v442 = vsel %vm367, %v417, 0.0
  %v443 = vadd.f32 %v441, %v442
  %v444 = vsel %vm367, %v418, 0.0
  %v445 = vadd.f32 %v443, %v444
  %v446 = vsel %vm367, %v419, 0.0
  %v447 = vadd.f32 %v445, %v446
  %v448 = vsel %vm367, %v420, 0.0
  %v449 = vadd.f32 %v447, %v448
  %v450 = vsel %vm367, %v421, 0.0
  %v451 = vadd.f32 %v449, %v450
  %v452 = vsel %vm367, %v422, 0.0
  %v453 = vadd.f32 %v451, %v452
  %v454 = vrot.slane %v453, 4
  %v455 = vadd.f32 %v453, %v454
  %v456 = vrot.slane %v455, 2
  %v457 = vadd.f32 %v455, %v456
  %v458 = vrot.slane %v457, 1
  %v459 = vadd.f32 %v457, %v458
  %460 = vst.msk [vmem:[%s6 + $0x1] sm:$0x1] %vm405, %v459
  // Predicated region
  $region14: #{conv_block_forward.4} parent=0 // pred_check
    _
  $region15: #{conv_block_forward.4} parent=0 // pred_check_branch
    %462 = sbr.rel (0) target = $region17
  $region16: #{conv_block_forward.4} parent=0 // pred_region
    _
  $region17: #{conv_block_forward.4} parent=0 // pred_fallthru
    _
  // Predicated region
  $region18: #{conv_block_forward.4} parent=0 // pred_check
    _
  $region19: #{conv_block_forward.4} parent=0 // pred_check_branch
    %464 = sbr.rel (0) target = $region21
  $region20: #{conv_block_forward.4} parent=0 // pred_region
    _
  $region21: #{conv_block_forward.4} parent=0 // pred_fallthru
    _
  // Predicated region
  $region22: #{conv_block_forward.4} parent=0 // pred_check
    _
  $region23: #{conv_block_forward.4} parent=0 // pred_check_branch
    %466 = sbr.rel (0) target = $region25
  $region24: #{conv_block_forward.4} parent=0 // pred_region
    _
  $region25: #{conv_block_forward.4} parent=0 // pred_fallthru
    _
  // Predicated region
  $region26: #{conv_block_forward.4} parent=0 // pred_check
    _
  $region27: #{conv_block_forward.4} parent=0 // pred_check_branch
    %468 = sbr.rel (0) target = $region29
  $region28: #{conv_block_forward.4} parent=0 // pred_region
    _
  $region29: #{conv_block_forward.4} parent=0 // pred_fallthru
    _
  // Predicated region
  $region30: #{conv_block_forward.4} parent=0 // pred_check
    _
  $region31: #{conv_block_forward.4} parent=0 // pred_check_branch
    %470 = sbr.rel (0) target = $region33
  $region32: #{conv_block_forward.4} parent=0 // pred_region
    _
  $region33: #{conv_block_forward.4} parent=0 // pred_fallthru
    _
  // Predicated region
  $region34: #{conv_block_forward.4} parent=0 // pred_check
    _
  $region35: #{conv_block_forward.4} parent=0 // pred_check_branch
    %472 = sbr.rel (0) target = $region37
  $region36: #{conv_block_forward.4} parent=0 // pred_region
    _
  $region37: #{conv_block_forward.4} parent=0 // pred_fallthru
    _
  // Predicated region
  $region38: #{conv_block_forward.4} parent=0 // pred_check
    _
  $region39: #{conv_block_forward.4} parent=0 // pred_check_branch
    %474 = sbr.rel (0) target = $region41
  $region40: #{conv_block_forward.4} parent=0 // pred_region
    _
  $region41: #{conv_block_forward.4} parent=0 // pred_fallthru
    _
  // Predicated region
  $region42: #{conv_block_forward.4} parent=0 // pred_check
    _
  $region43: #{conv_block_forward.4} parent=0 // pred_check_branch
    %476 = sbr.rel (0) target = $region45
  $region44: #{conv_block_forward.4} parent=0 // pred_region
    _
  $region45: #{conv_block_forward.4} parent=0 // pred_fallthru
    _

// kernel: conv_block_forward.6
$region0: #{conv_block_forward.6}
  #allocation0 [shape = 'u32[]', space=smem, size = 0x4, offset = 0x4, fixed_abs, tag = 'smem constant byte address 0x4 - core index']
  #allocation1 [shape = 'u32[72,128]{1,0:T(1,128)}', space=vmem, size = 0x9000, scoped, tag = 'internal scratch']
  %s0 = inlined_call_operand.vmem [shape: bf16[128,8], index: 0, kind: input, shape index: {}]
  %s1 = inlined_call_operand.vmem [shape: f32[1,8], index: 1, kind: input, shape index: {}]
  %s2 = inlined_call_operand.vmem [shape: f32[1,8], index: 2, kind: input, shape index: {}]
  %s3 = inlined_call_operand.vmem [shape: bf16[8,16], index: 3, kind: input, shape index: {}]
  %s4 = inlined_call_operand.vmem [shape: bf16[128,16], index: 4, kind: output, shape index: {0}]
  %s5 = inlined_call_operand.vmem [shape: f32[1,2,16], index: 5, kind: output, shape index: {1}]
  %6 = xla_tuple %s4, %s5
  %s7 = sld [smem:[#allocation0]]
  $region34: #{conv_block_forward.6} parent=0
    _
  %s9 = ssub.s32 1, %s7
  %s10 = scalar_select 0, %s9, %s7
  // Predicated region
  $region2: #{conv_block_forward.6} parent=0 // pred_check
    _
  $region3: #{conv_block_forward.6} parent=0 // pred_check_branch
    %12 = sbr.rel (0) target = $region5
  $region4: #{conv_block_forward.6} parent=0 // pred_region
    _
  $region5: #{conv_block_forward.6} parent=0 // pred_fallthru
    _
  // Predicated region
  $region6: #{conv_block_forward.6} parent=0 // pred_check
    _
  $region7: #{conv_block_forward.6} parent=0 // pred_check_branch
    %14 = sbr.rel (0) target = $region9
  $region8: #{conv_block_forward.6} parent=0 // pred_region
    _
  $region9: #{conv_block_forward.6} parent=0 // pred_fallthru
    _
  // Predicated region
  $region10: #{conv_block_forward.6} parent=0 // pred_check
    _
  $region11: #{conv_block_forward.6} parent=0 // pred_check_branch
    %16 = sbr.rel (0) target = $region13
  $region12: #{conv_block_forward.6} parent=0 // pred_region
    _
  $region13: #{conv_block_forward.6} parent=0 // pred_fallthru
    _
  // Predicated region
  $region14: #{conv_block_forward.6} parent=0 // pred_check
    _
  $region15: #{conv_block_forward.6} parent=0 // pred_check_branch
    %18 = sbr.rel (0) target = $region17
  $region16: #{conv_block_forward.6} parent=0 // pred_region
    _
  $region17: #{conv_block_forward.6} parent=0 // pred_fallthru
    _
  %v20 = vld [vmem:[%s0] sm:$0xf]
  %v21 = vld [vmem:[%s0 + $0x4] sm:$0xf]
  %v22 = vld [vmem:[%s0 + $0x8] sm:$0xf]
  %v23 = vld [vmem:[%s0 + $0xc] sm:$0xf]
  %v24 = vld [vmem:[%s0 + $0x10] sm:$0xf]
  %v25 = vld [vmem:[%s0 + $0x14] sm:$0xf]
  %v26 = vld [vmem:[%s0 + $0x18] sm:$0xf]
  %v27 = vld [vmem:[%s0 + $0x1c] sm:$0xf]
  %v28 = vld [vmem:[%s0 + $0x20] sm:$0xf]
  %v29 = vld [vmem:[%s0 + $0x24] sm:$0xf]
  %v30 = vld [vmem:[%s0 + $0x28] sm:$0xf]
  %v31 = vld [vmem:[%s0 + $0x2c] sm:$0xf]
  %v32 = vld [vmem:[%s0 + $0x30] sm:$0xf]
  %v33 = vld [vmem:[%s0 + $0x34] sm:$0xf]
  %v34 = vld [vmem:[%s0 + $0x38] sm:$0xf]
  %v35 = vld [vmem:[%s0 + $0x3c] sm:$0xf]
  %v36 = vunpack.c.l.bf16 %v20
  %v37 = vunpack.c.l.bf16 %v21
  %v38 = vunpack.c.l.bf16 %v22
  %v39 = vunpack.c.l.bf16 %v23
  %v40 = vunpack.c.l.bf16 %v24
  %v41 = vunpack.c.l.bf16 %v25
  %v42 = vunpack.c.l.bf16 %v26
  %v43 = vunpack.c.l.bf16 %v27
  %v44 = vunpack.c.l.bf16 %v28
  %v45 = vunpack.c.l.bf16 %v29
  %v46 = vunpack.c.l.bf16 %v30
  %v47 = vunpack.c.l.bf16 %v31
  %v48 = vunpack.c.l.bf16 %v32
  %v49 = vunpack.c.l.bf16 %v33
  %v50 = vunpack.c.l.bf16 %v34
  %v51 = vunpack.c.l.bf16 %v35
  %v52 = vld [vmem:[%s1] sm:$0x1]
  %v54 = vperm.slane %v52, 0
  %v56 = vmul.f32 %v36, %v54
  %v57 = vmul.f32 %v37, %v54
  %v58 = vmul.f32 %v38, %v54
  %v59 = vmul.f32 %v39, %v54
  %v60 = vmul.f32 %v40, %v54
  %v61 = vmul.f32 %v41, %v54
  %v62 = vmul.f32 %v42, %v54
  %v63 = vmul.f32 %v43, %v54
  %v64 = vmul.f32 %v44, %v54
  %v65 = vmul.f32 %v45, %v54
  %v66 = vmul.f32 %v46, %v54
  %v67 = vmul.f32 %v47, %v54
  %v68 = vmul.f32 %v48, %v54
  %v69 = vmul.f32 %v49, %v54
  %v70 = vmul.f32 %v50, %v54
  %v71 = vmul.f32 %v51, %v54
  %v72 = vld [vmem:[%s2] sm:$0x1]
  %v74 = vperm.slane %v72, 0
  %v76 = vadd.f32 %v56, %v74
  %v77 = vadd.f32 %v57, %v74
  %v78 = vadd.f32 %v58, %v74
  %v79 = vadd.f32 %v59, %v74
  %v80 = vadd.f32 %v60, %v74
  %v81 = vadd.f32 %v61, %v74
  %v82 = vadd.f32 %v62, %v74
  %v83 = vadd.f32 %v63, %v74
  %v84 = vadd.f32 %v64, %v74
  %v85 = vadd.f32 %v65, %v74
  %v86 = vadd.f32 %v66, %v74
  %v87 = vadd.f32 %v67, %v74
  %v88 = vadd.f32 %v68, %v74
  %v89 = vadd.f32 %v69, %v74
  %v90 = vadd.f32 %v70, %v74
  %v91 = vadd.f32 %v71, %v74
  %v92 = vmax.f32 %v76, 0.0
  %v93 = vmax.f32 %v77, 0.0
  %v94 = vmax.f32 %v78, 0.0
  %v95 = vmax.f32 %v79, 0.0
  %v96 = vmax.f32 %v80, 0.0
  %v97 = vmax.f32 %v81, 0.0
  %v98 = vmax.f32 %v82, 0.0
  %v99 = vmax.f32 %v83, 0.0
  %v100 = vmax.f32 %v84, 0.0
  %v101 = vmax.f32 %v85, 0.0
  %v102 = vmax.f32 %v86, 0.0
  %v103 = vmax.f32 %v87, 0.0
  %v104 = vmax.f32 %v88, 0.0
  %v105 = vmax.f32 %v89, 0.0
  %v106 = vmax.f32 %v90, 0.0
  %v107 = vmax.f32 %v91, 0.0
  %v108 = vpack.c.bf16 %v93, %v92
  %v109 = vpack.c.bf16 %v95, %v94
  %v110 = vpack.c.bf16 %v97, %v96
  %v111 = vpack.c.bf16 %v99, %v98
  %v112 = vpack.c.bf16 %v101, %v100
  %v113 = vpack.c.bf16 %v103, %v102
  %v114 = vpack.c.bf16 %v105, %v104
  %v115 = vpack.c.bf16 %v107, %v106
  %v116 = vld [vmem:[%s3] sm:$0xf]
  %vm117 = vcmask 64512
  %v119 = vsel %vm117, %v108, 0
  %v122 = vsel %vm117, %v109, 0
  %v125 = vsel %vm117, %v110, 0
  %v128 = vsel %vm117, %v111, 0
  %v131 = vsel %vm117, %v112, 0
  %v134 = vsel %vm117, %v113, 0
  %v137 = vsel %vm117, %v114, 0
  %v140 = vsel %vm117, %v115, 0
  %vm142 = vcmask 1043456
  %v144 = vsel %vm142, %v116, 0
  %146 = vmatpush.bf16.msra.mxu0 0
  %147 = vmatpush.bf16.msra.mxu0 0
  %148 = vmatpush.bf16.msra.mxu0 0
  %149 = vmatpush.bf16.msra.mxu0 0
  %150 = vmatpush.bf16.msra.mxu0 0
  %151 = vmatpush.bf16.msra.mxu0 0
  %152 = vmatpush.bf16.msra.mxu0 0
  %153 = vmatpush.bf16.msra.mxu0 %v144
  %154 = vmatmul.bf16.gmra.mxu0 %v119
  %v155 = vpop.f32.mrf.mxu0
  %v156 = vadd.f32 0.0, %v155
  %v157 = vpop.f32.mrf.mxu0
  %v158 = vadd.f32 0.0, %v157
  %159 = vmatmul.bf16.gmra.mxu0 %v122
  %v160 = vpop.f32.mrf.mxu0
  %v161 = vadd.f32 0.0, %v160
  %v162 = vpop.f32.mrf.mxu0
  %v163 = vadd.f32 0.0, %v162
  %164 = vmatmul.bf16.gmra.mxu0 %v125
  %v165 = vpop.f32.mrf.mxu0
  %v166 = vadd.f32 0.0, %v165
  %v167 = vpop.f32.mrf.mxu0
  %v168 = vadd.f32 0.0, %v167
  %169 = vmatmul.bf16.gmra.mxu0 %v128
  %v170 = vpop.f32.mrf.mxu0
  %v171 = vadd.f32 0.0, %v170
  %v172 = vpop.f32.mrf.mxu0
  %v173 = vadd.f32 0.0, %v172
  %174 = vmatmul.bf16.gmra.mxu0 %v131
  %v175 = vpop.f32.mrf.mxu0
  %v176 = vadd.f32 0.0, %v175
  %v177 = vpop.f32.mrf.mxu0
  %v178 = vadd.f32 0.0, %v177
  %179 = vmatmul.bf16.gmra.mxu0 %v134
  %v180 = vpop.f32.mrf.mxu0
  %v181 = vadd.f32 0.0, %v180
  %v182 = vpop.f32.mrf.mxu0
  %v183 = vadd.f32 0.0, %v182
  %184 = vmatmul.bf16.gmra.mxu0 %v137
  %v185 = vpop.f32.mrf.mxu0
  %v186 = vadd.f32 0.0, %v185
  %v187 = vpop.f32.mrf.mxu0
  %v188 = vadd.f32 0.0, %v187
  %189 = vmatmul.bf16.gmra.mxu0 %v140
  %v190 = vpop.f32.mrf.mxu0
  %v191 = vadd.f32 0.0, %v190
  %v192 = vpop.f32.mrf.mxu0
  %v193 = vadd.f32 0.0, %v192
  %194 = vdwg.mxu0
  %v195 = vpack.c.bf16 %v156, %v156
  %v196 = vpack.c.bf16 %v158, %v158
  %v197 = vpack.c.bf16 %v161, %v161
  %v198 = vpack.c.bf16 %v163, %v163
  %v199 = vpack.c.bf16 %v166, %v166
  %v200 = vpack.c.bf16 %v168, %v168
  %v201 = vpack.c.bf16 %v171, %v171
  %v202 = vpack.c.bf16 %v173, %v173
  %v203 = vpack.c.bf16 %v176, %v176
  %v204 = vpack.c.bf16 %v178, %v178
  %v205 = vpack.c.bf16 %v181, %v181
  %v206 = vpack.c.bf16 %v183, %v183
  %v207 = vpack.c.bf16 %v186, %v186
  %v208 = vpack.c.bf16 %v188, %v188
  %v209 = vpack.c.bf16 %v191, %v191
  %v210 = vpack.c.bf16 %v193, %v193
  %vm211 = vcmask 125952
  %212 = vst.msk [vmem:[%s4] sm:$0xf] %vm211, %v195
  %213 = vst.msk [vmem:[%s4 + $0x4] sm:$0xf] %vm211, %v196
  %214 = vst.msk [vmem:[%s4 + $0x8] sm:$0xf] %vm211, %v197
  %215 = vst.msk [vmem:[%s4 + $0xc] sm:$0xf] %vm211, %v198
  %216 = vst.msk [vmem:[%s4 + $0x10] sm:$0xf] %vm211, %v199
  %217 = vst.msk [vmem:[%s4 + $0x14] sm:$0xf] %vm211, %v200
  %218 = vst.msk [vmem:[%s4 + $0x18] sm:$0xf] %vm211, %v201
  %219 = vst.msk [vmem:[%s4 + $0x1c] sm:$0xf] %vm211, %v202
  %220 = vst.msk [vmem:[%s4 + $0x20] sm:$0xf] %vm211, %v203
  %221 = vst.msk [vmem:[%s4 + $0x24] sm:$0xf] %vm211, %v204
  %222 = vst.msk [vmem:[%s4 + $0x28] sm:$0xf] %vm211, %v205
  %223 = vst.msk [vmem:[%s4 + $0x2c] sm:$0xf] %vm211, %v206
  %224 = vst.msk [vmem:[%s4 + $0x30] sm:$0xf] %vm211, %v207
  %225 = vst.msk [vmem:[%s4 + $0x34] sm:$0xf] %vm211, %v208
  %226 = vst.msk [vmem:[%s4 + $0x38] sm:$0xf] %vm211, %v209
  %227 = vst.msk [vmem:[%s4 + $0x3c] sm:$0xf] %vm211, %v210
  %vm228 = vcmask 130048
  %v229 = vsel %vm228, %v156, 0.0
  %v230 = vsel %vm228, %v158, 0.0
  %v231 = vadd.f32 %v229, %v230
  %v232 = vsel %vm228, %v161, 0.0
  %v233 = vadd.f32 %v231, %v232
  %v234 = vsel %vm228, %v163, 0.0
  %v235 = vadd.f32 %v233, %v234
  %v236 = vsel %vm228, %v166, 0.0
  %v237 = vadd.f32 %v235, %v236
  %v238 = vsel %vm228, %v168, 0.0
  %v239 = vadd.f32 %v237, %v238
  %v240 = vsel %vm228, %v171, 0.0
  %v241 = vadd.f32 %v239, %v240
  %v242 = vsel %vm228, %v173, 0.0
  %v243 = vadd.f32 %v241, %v242
  %v244 = vsel %vm228, %v176, 0.0
  %v245 = vadd.f32 %v243, %v244
  %v246 = vsel %vm228, %v178, 0.0
  %v247 = vadd.f32 %v245, %v246
  %v248 = vsel %vm228, %v181, 0.0
  %v249 = vadd.f32 %v247, %v248
  %v250 = vsel %vm228, %v183, 0.0
  %v251 = vadd.f32 %v249, %v250
  %v252 = vsel %vm228, %v186, 0.0
  %v253 = vadd.f32 %v251, %v252
  %v254 = vsel %vm228, %v188, 0.0
  %v255 = vadd.f32 %v253, %v254
  %v256 = vsel %vm228, %v191, 0.0
  %v257 = vadd.f32 %v255, %v256
  %v258 = vsel %vm228, %v193, 0.0
  %v259 = vadd.f32 %v257, %v258
  %v260 = vrot.slane %v259, 4
  %v261 = vadd.f32 %v259, %v260
  %v262 = vrot.slane %v261, 2
  %v263 = vadd.f32 %v261, %v262
  %v264 = vrot.slane %v263, 1
  %v265 = vadd.f32 %v263, %v264
  %vm266 = vcmask 122880
  %267 = vst.msk [vmem:[%s5] sm:$0x1] %vm266, %v265
  %v268 = vmul.f32 %v156, %v156
  %v269 = vmul.f32 %v158, %v158
  %v270 = vmul.f32 %v161, %v161
  %v271 = vmul.f32 %v163, %v163
  %v272 = vmul.f32 %v166, %v166
  %v273 = vmul.f32 %v168, %v168
  %v274 = vmul.f32 %v171, %v171
  %v275 = vmul.f32 %v173, %v173
  %v276 = vmul.f32 %v176, %v176
  %v277 = vmul.f32 %v178, %v178
  %v278 = vmul.f32 %v181, %v181
  %v279 = vmul.f32 %v183, %v183
  %v280 = vmul.f32 %v186, %v186
  %v281 = vmul.f32 %v188, %v188
  %v282 = vmul.f32 %v191, %v191
  %v283 = vmul.f32 %v193, %v193
  %v284 = vsel %vm228, %v268, 0.0
  %v285 = vsel %vm228, %v269, 0.0
  %v286 = vadd.f32 %v284, %v285
  %v287 = vsel %vm228, %v270, 0.0
  %v288 = vadd.f32 %v286, %v287
  %v289 = vsel %vm228, %v271, 0.0
  %v290 = vadd.f32 %v288, %v289
  %v291 = vsel %vm228, %v272, 0.0
  %v292 = vadd.f32 %v290, %v291
  %v293 = vsel %vm228, %v273, 0.0
  %v294 = vadd.f32 %v292, %v293
  %v295 = vsel %vm228, %v274, 0.0
  %v296 = vadd.f32 %v294, %v295
  %v297 = vsel %vm228, %v275, 0.0
  %v298 = vadd.f32 %v296, %v297
  %v299 = vsel %vm228, %v276, 0.0
  %v300 = vadd.f32 %v298, %v299
  %v301 = vsel %vm228, %v277, 0.0
  %v302 = vadd.f32 %v300, %v301
  %v303 = vsel %vm228, %v278, 0.0
  %v304 = vadd.f32 %v302, %v303
  %v305 = vsel %vm228, %v279, 0.0
  %v306 = vadd.f32 %v304, %v305
  %v307 = vsel %vm228, %v280, 0.0
  %v308 = vadd.f32 %v306, %v307
  %v309 = vsel %vm228, %v281, 0.0
  %v310 = vadd.f32 %v308, %v309
  %v311 = vsel %vm228, %v282, 0.0
  %v312 = vadd.f32 %v310, %v311
  %v313 = vsel %vm228, %v283, 0.0
  %v314 = vadd.f32 %v312, %v313
  %v315 = vrot.slane %v314, 4
  %v316 = vadd.f32 %v314, %v315
  %v317 = vrot.slane %v316, 2
  %v318 = vadd.f32 %v316, %v317
  %v319 = vrot.slane %v318, 1
  %v320 = vadd.f32 %v318, %v319
  %321 = vst.msk [vmem:[%s5 + $0x1] sm:$0x1] %vm266, %v320
  // Predicated region
  $region18: #{conv_block_forward.6} parent=0 // pred_check
    _
  $region19: #{conv_block_forward.6} parent=0 // pred_check_branch
    %323 = sbr.rel (0) target = $region21
  $region20: #{conv_block_forward.6} parent=0 // pred_region
    _
  $region21: #{conv_block_forward.6} parent=0 // pred_fallthru
    _
  // Predicated region
  $region22: #{conv_block_forward.6} parent=0 // pred_check
    _
  $region23: #{conv_block_forward.6} parent=0 // pred_check_branch
    %325 = sbr.rel (0) target = $region25
  $region24: #{conv_block_forward.6} parent=0 // pred_region
    _
  $region25: #{conv_block_forward.6} parent=0 // pred_fallthru
    _
  // Predicated region
  $region26: #{conv_block_forward.6} parent=0 // pred_check
    _
  $region27: #{conv_block_forward.6} parent=0 // pred_check_branch
    %327 = sbr.rel (0) target = $region29
  $region28: #{conv_block_forward.6} parent=0 // pred_region
    _
  $region29: #{conv_block_forward.6} parent=0 // pred_fallthru
    _
  // Predicated region
  $region30: #{conv_block_forward.6} parent=0 // pred_check
    _
  $region31: #{conv_block_forward.6} parent=0 // pred_check_branch
    %329 = sbr.rel (0) target = $region33
  $region32: #{conv_block_forward.6} parent=0 // pred_region
    _
  $region33: #{conv_block_forward.6} parent=0 // pred_fallthru
    _

// kernel: conv_block_forward.5
$region0: #{conv_block_forward.5}
  #allocation0 [shape = 'u32[]', space=smem, size = 0x4, offset = 0x4, fixed_abs, tag = 'smem constant byte address 0x4 - core index']
  #allocation1 [shape = 'u32[72,128]{1,0:T(1,128)}', space=vmem, size = 0x9000, scoped, tag = 'internal scratch']
  #allocation2 [shape = 'f32[10,8,8]{2,1,0:T(8,128)}', space=vmem, size = 0xa000, scoped, tag = 'scratch operand']
  %s0 = inlined_call_operand.vmem [shape: bf16[2,8,8,8], index: 0, kind: input, shape index: {}]
  %s1 = inlined_call_operand.vmem [shape: f32[1,8], index: 1, kind: input, shape index: {}]
  %s2 = inlined_call_operand.vmem [shape: f32[1,8], index: 2, kind: input, shape index: {}]
  %s3 = inlined_call_operand.vmem [shape: bf16[9,8,8], index: 3, kind: input, shape index: {}]
  %s4 = inlined_call_operand.vmem [shape: bf16[128,8], index: 4, kind: output, shape index: {0}]
  %s5 = inlined_call_operand.vmem [shape: f32[2,2,8], index: 5, kind: output, shape index: {1}]
  %6 = xla_tuple %s4, %s5
  %s7 = sld [smem:[#allocation0]]
  $region57: #{conv_block_forward.5} parent=0
    _
  %s9 = ssub.s32 1, %s7
  %s10 = scalar_select 0, %s9, %s7
  loop: start=0, step=1, limit=4
  $region2: #{conv_block_forward.5} parent=0 // loop_pre_header
    _
  $region3: #{conv_block_forward.5} parent=0 // loop_header
    %s12 = sphi 0, %s16
    %p13 = scmp.ge.s32.totalorder %s12, 4
    %s22 = sphi 0, %s24
    %s25 = sphi 0, %s22
    %s26 = sphi 0, %s25
    %s42 = sphi 0, %s26
    %s46 = sphi 0, %s46
    %s48 = sphi 0, %s46
    %s49 = sphi 0, %s48
    %s63 = sphi 0, %s49
    %s67 = sphi 0, %s67
    %s69 = sphi 0, %s67
    %s70 = sphi 0, %s69
    %s84 = sphi 0, %s70
    %s88 = sphi 0, %s88
    %s90 = sphi 0, %s88
    %s91 = sphi 0, %s90
    %s105 = sphi 0, %s91
    %s111 = sphi 0, %s113
    %s114 = sphi 0, %s111
    %s115 = sphi 0, %s114
    %s131 = sphi 0, %s115
    %s137 = sphi 0, %s139
    %s140 = sphi 0, %s137
    %s141 = sphi 0, %s140
    %s157 = sphi 0, %s141
  $region4: #{conv_block_forward.5} parent=0 // loop_header_branch
    %15 = sbr.rel (%p13) target = $region8
  $region5: #{conv_block_forward.5} parent=0 // loop_body
    %s17 = ssub.s32 %s12, 1
    %s18 = ssub.s32 %s12, 2
    %s19 = sadd.s32 %s12, 1
    %s20 = ssub.s32 %s12, %s19
    %p21 = scmp.eq.s32.totalorder %s20, 0
    %s23 = sadd.s32 %s22, 1
    %s24 = scalar_select %p21, %s22, %s23
    %p27 = pneg %p21
    %p28 = scmp.eq.s32.totalorder %s12, 1
    %p29 = por %p27, %p28
    %p30 = scmp.ne.s32.totalorder %s22, %s25
    %p31 = scmp.eq.s32.totalorder %s12, 0
    %p32 = por %p30, %p31
    %p33 = scmp.ne.s32.totalorder %s22, %s25
    %p34 = scmp.eq.s32.totalorder %s17, 1
    %p35 = por %p33, %p34
    %p36 = scmp.ne.s32.totalorder %s25, %s26
    %p37 = scmp.eq.s32.totalorder %s17, 0
    %p38 = por %p36, %p37
    %p39 = scmp.ne.s32.totalorder %s25, %s26
    %p40 = scmp.eq.s32.totalorder %s18, 1
    %p41 = por %p39, %p40
    %p43 = scmp.ne.s32.totalorder %s26, %s42
    %p44 = scmp.eq.s32.totalorder %s18, 0
    %p45 = por %p43, %p44
    %s47 = sadd.s32 %s46, 1
    %p50 = scmp.eq.s32.totalorder %s12, 1
    %p51 = scmp.ne.s32.totalorder %s46, %s48
    %p52 = scmp.eq.s32.totalorder %s12, 0
    %p53 = por %p51, %p52
    %p54 = scmp.ne.s32.totalorder %s46, %s48
    %p55 = scmp.eq.s32.totalorder %s17, 1
    %p56 = por %p54, %p55
    %p57 = scmp.ne.s32.totalorder %s48, %s49
    %p58 = scmp.eq.s32.totalorder %s17, 0
    %p59 = por %p57, %p58
    %p60 = scmp.ne.s32.totalorder %s48, %s49
    %p61 = scmp.eq.s32.totalorder %s18, 1
    %p62 = por %p60, %p61
    %p64 = scmp.ne.s32.totalorder %s49, %s63
    %p65 = scmp.eq.s32.totalorder %s18, 0
    %p66 = por %p64, %p65
    %s68 = sadd.s32 %s67, 1
    %p71 = scmp.eq.s32.totalorder %s12, 1
    %p72 = scmp.ne.s32.totalorder %s67, %s69
    %p73 = scmp.eq.s32.totalorder %s12, 0
    %p74 = por %p72, %p73
    %p75 = scmp.ne.s32.totalorder %s67, %s69
    %p76 = scmp.eq.s32.totalorder %s17, 1
    %p77 = por %p75, %p76
    %p78 = scmp.ne.s32.totalorder %s69, %s70
    %p79 = scmp.eq.s32.totalorder %s17, 0
    %p80 = por %p78, %p79
    %p81 = scmp.ne.s32.totalorder %s69, %s70
    %p82 = scmp.eq.s32.totalorder %s18, 1
    %p83 = por %p81, %p82
    %p85 = scmp.ne.s32.totalorder %s70, %s84
    %p86 = scmp.eq.s32.totalorder %s18, 0
    %p87 = por %p85, %p86
    %s89 = sadd.s32 %s88, 1
    %p92 = scmp.eq.s32.totalorder %s12, 1
    %p93 = scmp.ne.s32.totalorder %s88, %s90
    %p94 = scmp.eq.s32.totalorder %s12, 0
    %p95 = por %p93, %p94
    %p96 = scmp.ne.s32.totalorder %s88, %s90
    %p97 = scmp.eq.s32.totalorder %s17, 1
    %p98 = por %p96, %p97
    %p99 = scmp.ne.s32.totalorder %s90, %s91
    %p100 = scmp.eq.s32.totalorder %s17, 0
    %p101 = por %p99, %p100
    %p102 = scmp.ne.s32.totalorder %s90, %s91
    %p103 = scmp.eq.s32.totalorder %s18, 1
    %p104 = por %p102, %p103
    %p106 = scmp.ne.s32.totalorder %s91, %s105
    %p107 = scmp.eq.s32.totalorder %s18, 0
    %p108 = por %p106, %p107
    %s109 = ssub.s32 %s12, %s19
    %p110 = scmp.eq.s32.totalorder %s109, 0
    %s112 = sadd.s32 %s111, 1
    %s113 = scalar_select %p110, %s111, %s112
    %p116 = pneg %p110
    %p117 = scmp.eq.s32.totalorder %s12, 1
    %p118 = por %p116, %p117
    %p119 = scmp.ne.s32.totalorder %s111, %s114
    %p120 = scmp.eq.s32.totalorder %s12, 0
    %p121 = por %p119, %p120
    %p122 = scmp.ne.s32.totalorder %s111, %s114
    %p123 = scmp.eq.s32.totalorder %s17, 1
    %p124 = por %p122, %p123
    %p125 = scmp.ne.s32.totalorder %s114, %s115
    %p126 = scmp.eq.s32.totalorder %s17, 0
    %p127 = por %p125, %p126
    %p128 = scmp.ne.s32.totalorder %s114, %s115
    %p129 = scmp.eq.s32.totalorder %s18, 1
    %p130 = por %p128, %p129
    %p132 = scmp.ne.s32.totalorder %s115, %s131
    %p133 = scmp.eq.s32.totalorder %s18, 0
    %p134 = por %p132, %p133
    %s135 = ssub.s32 %s12, %s19
    %p136 = scmp.eq.s32.totalorder %s135, 0
    %s138 = sadd.s32 %s137, 1
    %s139 = scalar_select %p136, %s137, %s138
    %p142 = pneg %p136
    %p143 = scmp.eq.s32.totalorder %s12, 1
    %p144 = por %p142, %p143
    %p145 = scmp.ne.s32.totalorder %s137, %s140
    %p146 = scmp.eq.s32.totalorder %s12, 0
    %p147 = por %p145, %p146
    %p148 = scmp.ne.s32.totalorder %s137, %s140
    %p149 = scmp.eq.s32.totalorder %s17, 1
    %p150 = por %p148, %p149
    %p151 = scmp.ne.s32.totalorder %s140, %s141
    %p152 = scmp.eq.s32.totalorder %s17, 0
    %p153 = por %p151, %p152
    %p154 = scmp.ne.s32.totalorder %s140, %s141
    %p155 = scmp.eq.s32.totalorder %s18, 1
    %p156 = por %p154, %p155
    %p158 = scmp.ne.s32.totalorder %s141, %s157
    %p159 = scmp.eq.s32.totalorder %s18, 0
    %p160 = por %p158, %p159
    %p161 = scmp.le.s32.totalorder 1, %s12
    %p162 = scmp.lt.s32.totalorder %s12, 3
    %p163 = pnand %p161, %p162
    %p164 = pneg %p163
    // Predicated region
    $region9: #{conv_block_forward.5} parent=5 // pred_check
      _
    $region10: #{conv_block_forward.5} parent=5 // pred_check_branch
      %166 = sbr.rel (%p163) target = $region12
    $region11: #{conv_block_forward.5} parent=5 // pred_region
      %s167 = ssub.s32 %s12, 1
      // Predicated region
      $region13: #{conv_block_forward.5} parent=11 // pred_check
        %p168 = pneg %p59
      $region14: #{conv_block_forward.5} parent=11 // pred_check_branch
        %170 = sbr.rel (%p168) target = $region16
      $region15: #{conv_block_forward.5} parent=11 // pred_region
        _
      $region16: #{conv_block_forward.5} parent=11 // pred_fallthru
        _
      // Predicated region
      $region17: #{conv_block_forward.5} parent=11 // pred_check
        %p171 = pneg %p80
      $region18: #{conv_block_forward.5} parent=11 // pred_check_branch
        %173 = sbr.rel (%p171) target = $region20
      $region19: #{conv_block_forward.5} parent=11 // pred_region
        _
      $region20: #{conv_block_forward.5} parent=11 // pred_fallthru
        _
      // Predicated region
      $region21: #{conv_block_forward.5} parent=11 // pred_check
        %p174 = pneg %p101
      $region22: #{conv_block_forward.5} parent=11 // pred_check_branch
        %176 = sbr.rel (%p174) target = $region24
      $region23: #{conv_block_forward.5} parent=11 // pred_region
        _
      $region24: #{conv_block_forward.5} parent=11 // pred_fallthru
        _
    $region12: #{conv_block_forward.5} parent=5 // pred_fallthru
      _
    %p177 = scmp.lt.s32.totalorder %s12, 2
    // Predicated region
    $region25: #{conv_block_forward.5} parent=5 // pred_check
      %p178 = pneg %p177
    $region26: #{conv_block_forward.5} parent=5 // pred_check_branch
      %180 = sbr.rel (%p178) target = $region28
    $region27: #{conv_block_forward.5} parent=5 // pred_region
      // Predicated region
      $region29: #{conv_block_forward.5} parent=27 // pred_check
        %p181 = pneg %p32
      $region30: #{conv_block_forward.5} parent=27 // pred_check_branch
        %183 = sbr.rel (%p181) target = $region32
      $region31: #{conv_block_forward.5} parent=27 // pred_region
        %p184 = scmp.lt.s32.totalorder %s12, 1
        %s185 = scalar_select %p184, %s12, 1
        %s186 = smul.addr %s185, 8
        %s187 = smul.addr %s186, 4
        %s188 = scalar_lea.vmem %s0, %s187
      $region32: #{conv_block_forward.5} parent=27 // pred_fallthru
        _
    $region28: #{conv_block_forward.5} parent=5 // pred_fallthru
      _
    %p189 = scmp.le.s32.totalorder 1, %s12
    %p190 = scmp.lt.s32.totalorder %s12, 3
    %p191 = pnand %p189, %p190
    %p192 = pneg %p191
    // Predicated region
    $region33: #{conv_block_forward.5} parent=5 // pred_check
      _
    $region34: #{conv_block_forward.5} parent=5 // pred_check_branch
      %194 = sbr.rel (%p191) target = $region36
    $region35: #{conv_block_forward.5} parent=5 // pred_region
      %s195 = ssub.s32 %s12, 1
      %p196 = scmp.lt.s32.totalorder %s17, 1
      %s197 = scalar_select %p196, %s17, 1
      %s198 = smul.addr %s197, 8
      %s199 = smul.addr %s198, 4
      %s200 = scalar_lea.vmem %s0, %s199
      %p201 = pneg %p38
      %p202 = pneg %p35
      %p203 = pneg %p59
      %p204 = pneg %p56
      %p205 = pneg %p80
      %p206 = pneg %p77
      %p207 = pneg %p101
      %p208 = pneg %p98
      %p209 = pneg %p127
      %p210 = pneg %p124
      %s211 = smul.u32 8, %s17
      %p212 = scmp.lt.s32.totalorder %s211, 15
      %s213 = scalar_select %p212, %s211, 15
      %s214 = smul.addr %s213, 4
      %s215 = scalar_lea.vmem %s4, %s214
      %p216 = pneg %p153
      %p217 = pneg %p150
      %p218 = scmp.lt.s32.totalorder %s17, 1
      %s219 = scalar_select %p218, %s17, 1
      %s220 = smul.addr %s219, 2
      %s221 = scalar_lea.vmem %s5, %s220
      %p222 = scmp.lt.s32.totalorder %s17, 1
      %s223 = scalar_select %p222, %s17, 1
      %s224 = smul.addr %s223, 8
      %s225 = smul.addr %s224, 4
      %s226 = scalar_lea.vmem %s0, %s225
      %s227 = smul.u32 8, %s17
      %p228 = scmp.lt.s32.totalorder %s227, 15
      %s229 = scalar_select %p228, %s227, 15
      %s230 = smul.addr %s229, 4
      %s231 = scalar_lea.vmem %s4, %s230
      %s232 = smul.u32 8, %s17
      %p233 = scmp.lt.s32.totalorder %s17, 1
      %s234 = scalar_select %p233, %s17, 1
      %s235 = smul.addr %s234, 2
      %s236 = scalar_lea.vmem %s5, %s235
      %vm238 = vcmask 64512
      %239 = vst.msk [vmem:[#allocation2] sm:$0xff] %vm238, 0.0
      %s240 = scalar_lea.vmem [#allocation2], 72
      %241 = vst.msk [vmem:[%s240] sm:$0xff] %vm238, 0.0
      %v242 = vld [vmem:[%s226] sm:$0xf]
      %v243 = vld [vmem:[%s226 + $0x4] sm:$0xf]
      %v244 = vld [vmem:[%s226 + $0x8] sm:$0xf]
      %v245 = vld [vmem:[%s226 + $0xc] sm:$0xf]
      %v246 = vld [vmem:[%s226 + $0x10] sm:$0xf]
      %v247 = vld [vmem:[%s226 + $0x14] sm:$0xf]
      %v248 = vld [vmem:[%s226 + $0x18] sm:$0xf]
      %v249 = vld [vmem:[%s226 + $0x1c] sm:$0xf]
      %v250 = vunpack.c.l.bf16 %v242
      %v251 = vunpack.c.l.bf16 %v243
      %v252 = vunpack.c.l.bf16 %v244
      %v253 = vunpack.c.l.bf16 %v245
      %v254 = vunpack.c.l.bf16 %v246
      %v255 = vunpack.c.l.bf16 %v247
      %v256 = vunpack.c.l.bf16 %v248
      %v257 = vunpack.c.l.bf16 %v249
      %v258 = vld [vmem:[%s1] sm:$0x1]
      %v260 = vperm.slane %v258, 0
      %v262 = vmul.f32 %v250, %v260
      %v263 = vmul.f32 %v251, %v260
      %v264 = vmul.f32 %v252, %v260
      %v265 = vmul.f32 %v253, %v260
      %v266 = vmul.f32 %v254, %v260
      %v267 = vmul.f32 %v255, %v260
      %v268 = vmul.f32 %v256, %v260
      %v269 = vmul.f32 %v257, %v260
      %v270 = vld [vmem:[%s2] sm:$0x1]
      %v272 = vperm.slane %v270, 0
      %v274 = vadd.f32 %v262, %v272
      %v275 = vadd.f32 %v263, %v272
      %v276 = vadd.f32 %v264, %v272
      %v277 = vadd.f32 %v265, %v272
      %v278 = vadd.f32 %v266, %v272
      %v279 = vadd.f32 %v267, %v272
      %v280 = vadd.f32 %v268, %v272
      %v281 = vadd.f32 %v269, %v272
      %v282 = vmax.f32 %v274, 0.0
      %v283 = vmax.f32 %v275, 0.0
      %v284 = vmax.f32 %v276, 0.0
      %v285 = vmax.f32 %v277, 0.0
      %v286 = vmax.f32 %v278, 0.0
      %v287 = vmax.f32 %v279, 0.0
      %v288 = vmax.f32 %v280, 0.0
      %v289 = vmax.f32 %v281, 0.0
      %s290 = scalar_lea.vmem [#allocation2], 8
      %291 = vst.msk [vmem:[%s290] sm:$0xff] %vm238, %v282
      %292 = vst.msk [vmem:[%s290 + $0x8] sm:$0xff] %vm238, %v283
      %293 = vst.msk [vmem:[%s290 + $0x10] sm:$0xff] %vm238, %v284
      %294 = vst.msk [vmem:[%s290 + $0x18] sm:$0xff] %vm238, %v285
      %295 = vst.msk [vmem:[%s290 + $0x20] sm:$0xff] %vm238, %v286
      %296 = vst.msk [vmem:[%s290 + $0x28] sm:$0xff] %vm238, %v287
      %297 = vst.msk [vmem:[%s290 + $0x30] sm:$0xff] %vm238, %v288
      %298 = vst.msk [vmem:[%s290 + $0x38] sm:$0xff] %vm238, %v289
      %v299 = vlaneseq
      %v300 = vshrl.u32 %v299, 7
      %v301 = vadd.s32 %v300, 8
      %v302 = vadd.s32 %v300, 16
      %v303 = vadd.s32 %v300, 24
      %v304 = vadd.s32 %v300, 32
      %v305 = vadd.s32 %v300, 40
      %v306 = vadd.s32 %v300, 48
      %v307 = vadd.s32 %v300, 56
      %vm308 = vcmp.lt.s32.totalorder %v300, 0
      %v309 = vsub.s32 0, %v300
      %v310 = vsel %vm308, %v309, %v300
      %v311 = vshrl.u32 %v310, 3
      %v312 = vand.u32 %v310, 7
      %v313 = vsub.s32 0, %v312
      %v314 = vsel %vm308, %v313, %v312
      %vm315 = vcmp.lt.s32.totalorder %v301, 0
      %v316 = vsub.s32 0, %v301
      %v317 = vsel %vm315, %v316, %v301
      %v318 = vshrl.u32 %v317, 3
      %v319 = vand.u32 %v317, 7
      %v320 = vsub.s32 0, %v319
      %v321 = vsel %vm315, %v320, %v319
      %vm322 = vcmp.lt.s32.totalorder %v302, 0
      %v323 = vsub.s32 0, %v302
      %v324 = vsel %vm322, %v323, %v302
      %v325 = vshrl.u32 %v324, 3
      %v326 = vand.u32 %v324, 7
      %v327 = vsub.s32 0, %v326
      %v328 = vsel %vm322, %v327, %v326
      %vm329 = vcmp.lt.s32.totalorder %v303, 0
      %v330 = vsub.s32 0, %v303
      %v331 = vsel %vm329, %v330, %v303
      %v332 = vshrl.u32 %v331, 3
      %v333 = vand.u32 %v331, 7
      %v334 = vsub.s32 0, %v333
      %v335 = vsel %vm329, %v334, %v333
      %vm336 = vcmp.lt.s32.totalorder %v304, 0
      %v337 = vsub.s32 0, %v304
      %v338 = vsel %vm336, %v337, %v304
      %v339 = vshrl.u32 %v338, 3
      %v340 = vand.u32 %v338, 7
      %v341 = vsub.s32 0, %v340
      %v342 = vsel %vm336, %v341, %v340
      %vm343 = vcmp.lt.s32.totalorder %v305, 0
      %v344 = vsub.s32 0, %v305
      %v345 = vsel %vm343, %v344, %v305
      %v346 = vshrl.u32 %v345, 3
      %v347 = vand.u32 %v345, 7
      %v348 = vsub.s32 0, %v347
      %v349 = vsel %vm343, %v348, %v347
      %vm350 = vcmp.lt.s32.totalorder %v306, 0
      %v351 = vsub.s32 0, %v306
      %v352 = vsel %vm350, %v351, %v306
      %v353 = vshrl.u32 %v352, 3
      %v354 = vand.u32 %v352, 7
      %v355 = vsub.s32 0, %v354
      %v356 = vsel %vm350, %v355, %v354
      %vm357 = vcmp.lt.s32.totalorder %v307, 0
      %v358 = vsub.s32 0, %v307
      %v359 = vsel %vm357, %v358, %v307
      %v360 = vshrl.u32 %v359, 3
      %v361 = vand.u32 %v359, 7
      %v362 = vsub.s32 0, %v361
      %v363 = vsel %vm357, %v362, %v361
      %vm364 = vcmp.ne.s32.totalorder %v314, 0
      %vm365 = vcmp.ne.s32.totalorder %v321, 0
      %vm366 = vcmp.ne.s32.totalorder %v328, 0
      %vm367 = vcmp.ne.s32.totalorder %v335, 0
      %vm368 = vcmp.ne.s32.totalorder %v342, 0
      %vm369 = vcmp.ne.s32.totalorder %v349, 0
      %vm370 = vcmp.ne.s32.totalorder %v356, 0
      %vm371 = vcmp.ne.s32.totalorder %v363, 0
      %vm372 = vcmp.lt.s32.totalorder %v314, 0
      %vm373 = vcmp.lt.s32.totalorder %v321, 0
      %vm374 = vcmp.lt.s32.totalorder %v328, 0
      %vm375 = vcmp.lt.s32.totalorder %v335, 0
      %vm376 = vcmp.lt.s32.totalorder %v342, 0
      %vm377 = vcmp.lt.s32.totalorder %v349, 0
      %vm378 = vcmp.lt.s32.totalorder %v356, 0
      %vm379 = vcmp.lt.s32.totalorder %v363, 0
      %vm380 = vmand %vm372, %vm364
      %vm381 = vmand %vm373, %vm365
      %vm382 = vmand %vm374, %vm366
      %vm383 = vmand %vm375, %vm367
      %vm384 = vmand %vm376, %vm368
      %vm385 = vmand %vm377, %vm369
      %vm386 = vmand %vm378, %vm370
      %vm387 = vmand %vm379, %vm371
      %v388 = vadd.s32 %v314, 8
      %v389 = vadd.s32 %v321, 8
      %v390 = vadd.s32 %v328, 8
      %v391 = vadd.s32 %v335, 8
      %v392 = vadd.s32 %v342, 8
      %v393 = vadd.s32 %v349, 8
      %v394 = vadd.s32 %v356, 8
      %v395 = vadd.s32 %v363, 8
      %v396 = vsel %vm380, %v388, %v314
      %v397 = vsel %vm381, %v389, %v321
      %v398 = vsel %vm382, %v390, %v328
      %v399 = vsel %vm383, %v391, %v335
      %v400 = vsel %vm384, %v392, %v342
      %v401 = vsel %vm385, %v393, %v349
      %v402 = vsel %vm386, %v394, %v356
      %v403 = vsel %vm387, %v395, %v363
      %v404 = vld [vmem:[#allocation2] sm:$0xff]
      %v405 = vld [vmem:[#allocation2 + $0x8] sm:$0xff]
      %v406 = vld [vmem:[#allocation2 + $0x10] sm:$0xff]
      %v407 = vld [vmem:[#allocation2 + $0x18] sm:$0xff]
      %v408 = vld [vmem:[#allocation2 + $0x20] sm:$0xff]
      %v409 = vld [vmem:[#allocation2 + $0x28] sm:$0xff]
      %v410 = vld [vmem:[#allocation2 + $0x30] sm:$0xff]
      %v411 = vld [vmem:[#allocation2 + $0x38] sm:$0xff]
      %vm412 = vcmp.eq.s32.totalorder %v396, 0
      %vm413 = vcmp.eq.s32.totalorder %v397, 0
      %vm414 = vcmp.eq.s32.totalorder %v398, 0
      %vm415 = vcmp.eq.s32.totalorder %v399, 0
      %vm416 = vcmp.eq.s32.totalorder %v400, 0
      %vm417 = vcmp.eq.s32.totalorder %v401, 0
      %vm418 = vcmp.eq.s32.totalorder %v402, 0
      %vm419 = vcmp.eq.s32.totalorder %v403, 0
      %vm428 = vcmask 1040384
      %v429 = vrot.slane %v404, 7
      %v430 = vrot.slane %v405, 7
      %v431 = vsel %vm428, %v429, %v430
      %v432 = vrot.slane %v406, 7
      %v433 = vsel %vm428, %v430, %v432
      %v434 = vrot.slane %v407, 7
      %v435 = vsel %vm428, %v432, %v434
      %v436 = vrot.slane %v408, 7
      %v437 = vsel %vm428, %v434, %v436
      %v438 = vrot.slane %v409, 7
      %v439 = vsel %vm428, %v436, %v438
      %v440 = vrot.slane %v410, 7
      %v441 = vsel %vm428, %v438, %v440
      %v442 = vrot.slane %v411, 7
      %v443 = vsel %vm428, %v440, %v442
      %v452 = vsel %vm428, 0.0, %v429
      %v453 = vsel %vm412, 1, 0
      %v454 = vsel %vm413, 1, 0
      %v455 = vsel %vm414, 1, 0
      %v456 = vsel %vm415, 1, 0
      %v457 = vsel %vm416, 1, 0
      %v458 = vsel %vm417, 1, 0
      %v459 = vsel %vm418, 1, 0
      %v460 = vsel %vm419, 1, 0
      %vm461 = vcmp.eq.s32.totalorder %v453, 1
      %vm462 = vcmp.eq.s32.totalorder %v454, 1
      %vm463 = vcmp.eq.s32.totalorder %v455, 1
      %vm464 = vcmp.eq.s32.totalorder %v456, 1
      %vm465 = vcmp.eq.s32.totalorder %v457, 1
      %vm466 = vcmp.eq.s32.totalorder %v458, 1
      %vm467 = vcmp.eq.s32.totalorder %v459, 1
      %vm468 = vcmp.eq.s32.totalorder %v460, 1
      %v469 = vsel %vm461, 0.0, %v452
      %v470 = vsel %vm462, 0.0, %v431
      %v471 = vsel %vm463, 0.0, %v433
      %v472 = vsel %vm464, 0.0, %v435
      %v473 = vsel %vm465, 0.0, %v437
      %v474 = vsel %vm466, 0.0, %v439
      %v475 = vsel %vm467, 0.0, %v441
      %v476 = vsel %vm468, 0.0, %v443
      %vm477 = vcmp.eq.s32.totalorder %v396, 7
      %vm478 = vcmp.eq.s32.totalorder %v397, 7
      %vm479 = vcmp.eq.s32.totalorder %v398, 7
      %vm480 = vcmp.eq.s32.totalorder %v399, 7
      %vm481 = vcmp.eq.s32.totalorder %v400, 7
      %vm482 = vcmp.eq.s32.totalorder %v401, 7
      %vm483 = vcmp.eq.s32.totalorder %v402, 7
      %vm484 = vcmp.eq.s32.totalorder %v403, 7
      %vm485 = vcmask 1046528
      %v486 = vrot.slane %v404, 1
      %v487 = vrot.slane %v405, 1
      %v488 = vsel %vm485, %v486, %v487
      %v489 = vrot.slane %v406, 1
      %v490 = vsel %vm485, %v487, %v489
      %v491 = vrot.slane %v407, 1
      %v492 = vsel %vm485, %v489, %v491
      %v493 = vrot.slane %v408, 1
      %v494 = vsel %vm485, %v491, %v493
      %v495 = vrot.slane %v409, 1
      %v496 = vsel %vm485, %v493, %v495
      %v497 = vrot.slane %v410, 1
      %v498 = vsel %vm485, %v495, %v497
      %v499 = vrot.slane %v411, 1
      %v500 = vsel %vm485, %v497, %v499
      %v509 = vsel %vm485, %v499, 0.0
      %v510 = vsel %vm477, 1, 0
      %v511 = vsel %vm478, 1, 0
      %v512 = vsel %vm479, 1, 0
      %v513 = vsel %vm480, 1, 0
      %v514 = vsel %vm481, 1, 0
      %v515 = vsel %vm482, 1, 0
      %v516 = vsel %vm483, 1, 0
      %v517 = vsel %vm484, 1, 0
      %vm518 = vcmp.eq.s32.totalorder %v510, 1
      %vm519 = vcmp.eq.s32.totalorder %v511, 1
      %vm520 = vcmp.eq.s32.totalorder %v512, 1
      %vm521 = vcmp.eq.s32.totalorder %v513, 1
      %vm522 = vcmp.eq.s32.totalorder %v514, 1
      %vm523 = vcmp.eq.s32.totalorder %v515, 1
      %vm524 = vcmp.eq.s32.totalorder %v516, 1
      %vm525 = vcmp.eq.s32.totalorder %v517, 1
      %v526 = vsel %vm518, 0.0, %v488
      %v527 = vsel %vm519, 0.0, %v490
      %v528 = vsel %vm520, 0.0, %v492
      %v529 = vsel %vm521, 0.0, %v494
      %v530 = vsel %vm522, 0.0, %v496
      %v531 = vsel %vm523, 0.0, %v498
      %v532 = vsel %vm524, 0.0, %v500
      %v533 = vsel %vm525, 0.0, %v509
      %v534 = vpack.c.bf16 %v470, %v469
      %v535 = vpack.c.bf16 %v472, %v471
      %v536 = vpack.c.bf16 %v474, %v473
      %v537 = vpack.c.bf16 %v476, %v475
      %v538 = vld [vmem:[%s3] sm:$0xf]
      %v539 = vpack.c.bf16 %v405, %v404
      %v540 = vpack.c.bf16 %v407, %v406
      %v541 = vpack.c.bf16 %v409, %v408
      %v542 = vpack.c.bf16 %v411, %v410
      %s543 = scalar_lea.vmem %s3, 4
      %v544 = vld [vmem:[%s543] sm:$0xf]
      %v546 = vsel %vm238, %v539, 0
      %v549 = vsel %vm238, %v540, 0
      %v552 = vsel %vm238, %v541, 0
      %v555 = vsel %vm238, %v542, 0
      %vm557 = vcmask 1043456
      %v559 = vsel %vm557, %v544, 0
      %561 = vmatpush.bf16.msra.mxu0 0
      %562 = vmatpush.bf16.msra.mxu0 0
      %563 = vmatpush.bf16.msra.mxu0 0
      %564 = vmatpush.bf16.msra.mxu0 0
      %565 = vmatpush.bf16.msra.mxu0 0
      %566 = vmatpush.bf16.msra.mxu0 0
      %567 = vmatpush.bf16.msra.mxu0 0
      %568 = vmatpush.bf16.msra.mxu0 %v559
      %569 = vmatmul.bf16.gmra.mxu0 %v546
      %v570 = vpop.f32.mrf.mxu0
      %v571 = vadd.f32 0.0, %v570
      %v572 = vpop.f32.mrf.mxu0
      %v573 = vadd.f32 0.0, %v572
      %574 = vmatmul.bf16.gmra.mxu0 %v549
      %v575 = vpop.f32.mrf.mxu0
      %v576 = vadd.f32 0.0, %v575
      %v577 = vpop.f32.mrf.mxu0
      %v578 = vadd.f32 0.0, %v577
      %579 = vmatmul.bf16.gmra.mxu0 %v552
      %v580 = vpop.f32.mrf.mxu0
      %v581 = vadd.f32 0.0, %v580
      %v582 = vpop.f32.mrf.mxu0
      %v583 = vadd.f32 0.0, %v582
      %584 = vmatmul.bf16.gmra.mxu0 %v555
      %v585 = vpop.f32.mrf.mxu0
      %v586 = vadd.f32 0.0, %v585
      %v587 = vpop.f32.mrf.mxu0
      %v588 = vadd.f32 0.0, %v587
      %589 = vdwg.mxu0
      %v591 = vsel %vm238, %v534, 0
      %v594 = vsel %vm238, %v535, 0
      %v597 = vsel %vm238, %v536, 0
      %v600 = vsel %vm238, %v537, 0
      %v603 = vsel %vm557, %v538, 0
      %605 = vmatpush.bf16.msra.mxu0 0
      %606 = vmatpush.bf16.msra.mxu0 0
      %607 = vmatpush.bf16.msra.mxu0 0
      %608 = vmatpush.bf16.msra.mxu0 0
      %609 = vmatpush.bf16.msra.mxu0 0
      %610 = vmatpush.bf16.msra.mxu0 0
      %611 = vmatpush.bf16.msra.mxu0 0
      %612 = vmatpush.bf16.msra.mxu0 %v603
      %613 = vmatmul.bf16.gmra.mxu0 %v591
      %v614 = vpop.f32.mrf.mxu0
      %v615 = vadd.f32 %v571, %v614
      %v616 = vpop.f32.mrf.mxu0
      %v617 = vadd.f32 %v573, %v616
      %618 = vmatmul.bf16.gmra.mxu0 %v594
      %v619 = vpop.f32.mrf.mxu0
      %v620 = vadd.f32 %v576, %v619
      %v621 = vpop.f32.mrf.mxu0
      %v622 = vadd.f32 %v578, %v621
      %623 = vmatmul.bf16.gmra.mxu0 %v597
      %v624 = vpop.f32.mrf.mxu0
      %v625 = vadd.f32 %v581, %v624
      %v626 = vpop.f32.mrf.mxu0
      %v627 = vadd.f32 %v583, %v626
      %628 = vmatmul.bf16.gmra.mxu0 %v600
      %v629 = vpop.f32.mrf.mxu0
      %v630 = vadd.f32 %v586, %v629
      %v631 = vpop.f32.mrf.mxu0
      %v632 = vadd.f32 %v588, %v631
      %633 = vdwg.mxu0
      %v634 = vpack.c.bf16 %v527, %v526
      %v635 = vpack.c.bf16 %v529, %v528
      %v636 = vpack.c.bf16 %v531, %v530
      %v637 = vpack.c.bf16 %v533, %v532
      %s638 = scalar_lea.vmem %s3, 8
      %v639 = vld [vmem:[%s638] sm:$0xf]
      %v641 = vsel %vm238, %v634, 0
      %v644 = vsel %vm238, %v635, 0
      %v647 = vsel %vm238, %v636, 0
      %v650 = vsel %vm238, %v637, 0
      %v653 = vsel %vm557, %v639, 0
      %655 = vmatpush.bf16.msra.mxu0 0
      %656 = vmatpush.bf16.msra.mxu0 0
      %657 = vmatpush.bf16.msra.mxu0 0
      %658 = vmatpush.bf16.msra.mxu0 0
      %659 = vmatpush.bf16.msra.mxu0 0
      %660 = vmatpush.bf16.msra.mxu0 0
      %661 = vmatpush.bf16.msra.mxu0 0
      %662 = vmatpush.bf16.msra.mxu0 %v653
      %663 = vmatmul.bf16.gmra.mxu0 %v641
      %v664 = vpop.f32.mrf.mxu0
      %v665 = vadd.f32 0.0, %v664
      %v666 = vpop.f32.mrf.mxu0
      %v667 = vadd.f32 0.0, %v666
      %668 = vmatmul.bf16.gmra.mxu0 %v644
      %v669 = vpop.f32.mrf.mxu0
      %v670 = vadd.f32 0.0, %v669
      %v671 = vpop.f32.mrf.mxu0
      %v672 = vadd.f32 0.0, %v671
      %673 = vmatmul.bf16.gmra.mxu0 %v647
      %v674 = vpop.f32.mrf.mxu0
      %v675 = vadd.f32 0.0, %v674
      %v676 = vpop.f32.mrf.mxu0
      %v677 = vadd.f32 0.0, %v676
      %678 = vmatmul.bf16.gmra.mxu0 %v650
      %v679 = vpop.f32.mrf.mxu0
      %v680 = vadd.f32 0.0, %v679
      %v681 = vpop.f32.mrf.mxu0
      %v682 = vadd.f32 0.0, %v681
      %683 = vdwg.mxu0
      %v684 = vadd.f32 %v615, %v665
      %v685 = vadd.f32 %v617, %v667
      %v686 = vadd.f32 %v620, %v670
      %v687 = vadd.f32 %v622, %v672
      %v688 = vadd.f32 %v625, %v675
      %v689 = vadd.f32 %v627, %v677
      %v690 = vadd.f32 %v630, %v680
      %v691 = vadd.f32 %v632, %v682
      %v692 = vld [vmem:[%s290] sm:$0xff]
      %v693 = vld [vmem:[%s290 + $0x8] sm:$0xff]
      %v694 = vld [vmem:[%s290 + $0x10] sm:$0xff]
      %v695 = vld [vmem:[%s290 + $0x18] sm:$0xff]
      %v696 = vld [vmem:[%s290 + $0x20] sm:$0xff]
      %v697 = vld [vmem:[%s290 + $0x28] sm:$0xff]
      %v698 = vld [vmem:[%s290 + $0x30] sm:$0xff]
      %v699 = vld [vmem:[%s290 + $0x38] sm:$0xff]
      %v708 = vrot.slane %v692, 7
      %v709 = vrot.slane %v693, 7
      %v710 = vsel %vm428, %v708, %v709
      %v711 = vrot.slane %v694, 7
      %v712 = vsel %vm428, %v709, %v711
      %v713 = vrot.slane %v695, 7
      %v714 = vsel %vm428, %v711, %v713
      %v715 = vrot.slane %v696, 7
      %v716 = vsel %vm428, %v713, %v715
      %v717 = vrot.slane %v697, 7
      %v718 = vsel %vm428, %v715, %v717
      %v719 = vrot.slane %v698, 7
      %v720 = vsel %vm428, %v717, %v719
      %v721 = vrot.slane %v699, 7
      %v722 = vsel %vm428, %v719, %v721
      %v731 = vsel %vm428, 0.0, %v708
      %v732 = vsel %vm461, 0.0, %v731
      %v733 = vsel %vm462, 0.0, %v710
      %v734 = vsel %vm463, 0.0, %v712
      %v735 = vsel %vm464, 0.0, %v714
      %v736 = vsel %vm465, 0.0, %v716
      %v737 = vsel %vm466, 0.0, %v718
      %v738 = vsel %vm467, 0.0, %v720
      %v739 = vsel %vm468, 0.0, %v722
      %v740 = vrot.slane %v692, 1
      %v741 = vrot.slane %v693, 1
      %v742 = vsel %vm485, %v740, %v741
      %v743 = vrot.slane %v694, 1
      %v744 = vsel %vm485, %v741, %v743
      %v745 = vrot.slane %v695, 1
      %v746 = vsel %vm485, %v743, %v745
      %v747 = vrot.slane %v696, 1
      %v748 = vsel %vm485, %v745, %v747
      %v749 = vrot.slane %v697, 1
      %v750 = vsel %vm485, %v747, %v749
      %v751 = vrot.slane %v698, 1
      %v752 = vsel %vm485, %v749, %v751
      %v753 = vrot.slane %v699, 1
      %v754 = vsel %vm485, %v751, %v753
      %v763 = vsel %vm485, %v753, 0.0
      %v764 = vsel %vm518, 0.0, %v742
      %v765 = vsel %vm519, 0.0, %v744
      %v766 = vsel %vm520, 0.0, %v746
      %v767 = vsel %vm521, 0.0, %v748
      %v768 = vsel %vm522, 0.0, %v750
      %v769 = vsel %vm523, 0.0, %v752
      %v770 = vsel %vm524, 0.0, %v754
      %v771 = vsel %vm525, 0.0, %v763
      %v772 = vpack.c.bf16 %v733, %v732
      %v773 = vpack.c.bf16 %v735, %v734
      %v774 = vpack.c.bf16 %v737, %v736
      %v775 = vpack.c.bf16 %v739, %v738
      %s776 = scalar_lea.vmem %s3, 12
      %v777 = vld [vmem:[%s776] sm:$0xf]
      %v779 = vsel %vm238, %v772, 0
      %v782 = vsel %vm238, %v773, 0
      %v785 = vsel %vm238, %v774, 0
      %v788 = vsel %vm238, %v775, 0
      %v791 = vsel %vm557, %v777, 0
      %793 = vmatpush.bf16.msra.mxu0 0
      %794 = vmatpush.bf16.msra.mxu0 0
      %795 = vmatpush.bf16.msra.mxu0 0
      %796 = vmatpush.bf16.msra.mxu0 0
      %797 = vmatpush.bf16.msra.mxu0 0
      %798 = vmatpush.bf16.msra.mxu0 0
      %799 = vmatpush.bf16.msra.mxu0 0
      %800 = vmatpush.bf16.msra.mxu0 %v791
      %801 = vmatmul.bf16.gmra.mxu0 %v779
      %v802 = vpop.f32.mrf.mxu0
      %v803 = vadd.f32 0.0, %v802
      %v804 = vpop.f32.mrf.mxu0
      %v805 = vadd.f32 0.0, %v804
      %806 = vmatmul.bf16.gmra.mxu0 %v782
      %v807 = vpop.f32.mrf.mxu0
      %v808 = vadd.f32 0.0, %v807
      %v809 = vpop.f32.mrf.mxu0
      %v810 = vadd.f32 0.0, %v809
      %811 = vmatmul.bf16.gmra.mxu0 %v785
      %v812 = vpop.f32.mrf.mxu0
      %v813 = vadd.f32 0.0, %v812
      %v814 = vpop.f32.mrf.mxu0
      %v815 = vadd.f32 0.0, %v814
      %816 = vmatmul.bf16.gmra.mxu0 %v788
      %v817 = vpop.f32.mrf.mxu0
      %v818 = vadd.f32 0.0, %v817
      %v819 = vpop.f32.mrf.mxu0
      %v820 = vadd.f32 0.0, %v819
      %821 = vdwg.mxu0
      %v822 = vadd.f32 %v684, %v803
      %v823 = vadd.f32 %v685, %v805
      %v824 = vadd.f32 %v686, %v808
      %v825 = vadd.f32 %v687, %v810
      %v826 = vadd.f32 %v688, %v813
      %v827 = vadd.f32 %v689, %v815
      %v828 = vadd.f32 %v690, %v818
      %v829 = vadd.f32 %v691, %v820
      %v830 = vpack.c.bf16 %v693, %v692
      %v831 = vpack.c.bf16 %v695, %v694
      %v832 = vpack.c.bf16 %v697, %v696
      %v833 = vpack.c.bf16 %v699, %v698
      %s834 = scalar_lea.vmem %s3, 16
      %v835 = vld [vmem:[%s834] sm:$0xf]
      %v837 = vsel %vm238, %v830, 0
      %v840 = vsel %vm238, %v831, 0
      %v843 = vsel %vm238, %v832, 0
      %v846 = vsel %vm238, %v833, 0
      %v849 = vsel %vm557, %v835, 0
      %851 = vmatpush.bf16.msra.mxu0 0
      %852 = vmatpush.bf16.msra.mxu0 0
      %853 = vmatpush.bf16.msra.mxu0 0
      %854 = vmatpush.bf16.msra.mxu0 0
      %855 = vmatpush.bf16.msra.mxu0 0
      %856 = vmatpush.bf16.msra.mxu0 0
      %857 = vmatpush.bf16.msra.mxu0 0
      %858 = vmatpush.bf16.msra.mxu0 %v849
      %859 = vmatmul.bf16.gmra.mxu0 %v837
      %v860 = vpop.f32.mrf.mxu0
      %v861 = vadd.f32 0.0, %v860
      %v862 = vpop.f32.mrf.mxu0
      %v863 = vadd.f32 0.0, %v862
      %864 = vmatmul.bf16.gmra.mxu0 %v840
      %v865 = vpop.f32.mrf.mxu0
      %v866 = vadd.f32 0.0, %v865
      %v867 = vpop.f32.mrf.mxu0
      %v868 = vadd.f32 0.0, %v867
      %869 = vmatmul.bf16.gmra.mxu0 %v843
      %v870 = vpop.f32.mrf.mxu0
      %v871 = vadd.f32 0.0, %v870
      %v872 = vpop.f32.mrf.mxu0
      %v873 = vadd.f32 0.0, %v872
      %874 = vmatmul.bf16.gmra.mxu0 %v846
      %v875 = vpop.f32.mrf.mxu0
      %v876 = vadd.f32 0.0, %v875
      %v877 = vpop.f32.mrf.mxu0
      %v878 = vadd.f32 0.0, %v877
      %879 = vdwg.mxu0
      %v880 = vadd.f32 %v822, %v861
      %v881 = vadd.f32 %v823, %v863
      %v882 = vadd.f32 %v824, %v866
      %v883 = vadd.f32 %v825, %v868
      %v884 = vadd.f32 %v826, %v871
      %v885 = vadd.f32 %v827, %v873
      %v886 = vadd.f32 %v828, %v876
      %v887 = vadd.f32 %v829, %v878
      %v888 = vpack.c.bf16 %v765, %v764
      %v889 = vpack.c.bf16 %v767, %v766
      %v890 = vpack.c.bf16 %v769, %v768
      %v891 = vpack.c.bf16 %v771, %v770
      %s892 = scalar_lea.vmem %s3, 20
      %v893 = vld [vmem:[%s892] sm:$0xf]
      %v895 = vsel %vm238, %v888, 0
      %v898 = vsel %vm238, %v889, 0
      %v901 = vsel %vm238, %v890, 0
      %v904 = vsel %vm238, %v891, 0
      %v907 = vsel %vm557, %v893, 0
      %909 = vmatpush.bf16.msra.mxu0 0
      %910 = vmatpush.bf16.msra.mxu0 0
      %911 = vmatpush.bf16.msra.mxu0 0
      %912 = vmatpush.bf16.msra.mxu0 0
      %913 = vmatpush.bf16.msra.mxu0 0
      %914 = vmatpush.bf16.msra.mxu0 0
      %915 = vmatpush.bf16.msra.mxu0 0
      %916 = vmatpush.bf16.msra.mxu0 %v907
      %917 = vmatmul.bf16.gmra.mxu0 %v895
      %v918 = vpop.f32.mrf.mxu0
      %v919 = vadd.f32 0.0, %v918
      %v920 = vpop.f32.mrf.mxu0
      %v921 = vadd.f32 0.0, %v920
      %922 = vmatmul.bf16.gmra.mxu0 %v898
      %v923 = vpop.f32.mrf.mxu0
      %v924 = vadd.f32 0.0, %v923
      %v925 = vpop.f32.mrf.mxu0
      %v926 = vadd.f32 0.0, %v925
      %927 = vmatmul.bf16.gmra.mxu0 %v901
      %v928 = vpop.f32.mrf.mxu0
      %v929 = vadd.f32 0.0, %v928
      %v930 = vpop.f32.mrf.mxu0
      %v931 = vadd.f32 0.0, %v930
      %932 = vmatmul.bf16.gmra.mxu0 %v904
      %v933 = vpop.f32.mrf.mxu0
      %v934 = vadd.f32 0.0, %v933
      %v935 = vpop.f32.mrf.mxu0
      %v936 = vadd.f32 0.0, %v935
      %937 = vdwg.mxu0
      %v938 = vadd.f32 %v880, %v919
      %v939 = vadd.f32 %v881, %v921
      %v940 = vadd.f32 %v882, %v924
      %v941 = vadd.f32 %v883, %v926
      %v942 = vadd.f32 %v884, %v929
      %v943 = vadd.f32 %v885, %v931
      %v944 = vadd.f32 %v886, %v934
      %v945 = vadd.f32 %v887, %v936
      %s946 = scalar_lea.vmem [#allocation2], 16
      %v947 = vld [vmem:[%s946] sm:$0xff]
      %v948 = vld [vmem:[%s946 + $0x8] sm:$0xff]
      %v949 = vld [vmem:[%s946 + $0x10] sm:$0xff]
      %v950 = vld [vmem:[%s946 + $0x18] sm:$0xff]
      %v951 = vld [vmem:[%s946 + $0x20] sm:$0xff]
      %v952 = vld [vmem:[%s946 + $0x28] sm:$0xff]
      %v953 = vld [vmem:[%s946 + $0x30] sm:$0xff]
      %v954 = vld [vmem:[%s946 + $0x38] sm:$0xff]
      %v963 = vrot.slane %v947, 7
      %v964 = vrot.slane %v948, 7
      %v965 = vsel %vm428, %v963, %v964
      %v966 = vrot.slane %v949, 7
      %v967 = vsel %vm428, %v964, %v966
      %v968 = vrot.slane %v950, 7
      %v969 = vsel %vm428, %v966, %v968
      %v970 = vrot.slane %v951, 7
      %v971 = vsel %vm428, %v968, %v970
      %v972 = vrot.slane %v952, 7
      %v973 = vsel %vm428, %v970, %v972
      %v974 = vrot.slane %v953, 7
      %v975 = vsel %vm428, %v972, %v974
      %v976 = vrot.slane %v954, 7
      %v977 = vsel %vm428, %v974, %v976
      %v986 = vsel %vm428, 0.0, %v963
      %v987 = vsel %vm461, 0.0, %v986
      %v988 = vsel %vm462, 0.0, %v965
      %v989 = vsel %vm463, 0.0, %v967
      %v990 = vsel %vm464, 0.0, %v969
      %v991 = vsel %vm465, 0.0, %v971
      %v992 = vsel %vm466, 0.0, %v973
      %v993 = vsel %vm467, 0.0, %v975
      %v994 = vsel %vm468, 0.0, %v977
      %v995 = vrot.slane %v947, 1
      %v996 = vrot.slane %v948, 1
      %v997 = vsel %vm485, %v995, %v996
      %v998 = vrot.slane %v949, 1
      %v999 = vsel %vm485, %v996, %v998
      %v1000 = vrot.slane %v950, 1
      %v1001 = vsel %vm485, %v998, %v1000
      %v1002 = vrot.slane %v951, 1
      %v1003 = vsel %vm485, %v1000, %v1002
      %v1004 = vrot.slane %v952, 1
      %v1005 = vsel %vm485, %v1002, %v1004
      %v1006 = vrot.slane %v953, 1
      %v1007 = vsel %vm485, %v1004, %v1006
      %v1008 = vrot.slane %v954, 1
      %v1009 = vsel %vm485, %v1006, %v1008
      %v1018 = vsel %vm485, %v1008, 0.0
      %v1019 = vsel %vm518, 0.0, %v997
      %v1020 = vsel %vm519, 0.0, %v999
      %v1021 = vsel %vm520, 0.0, %v1001
      %v1022 = vsel %vm521, 0.0, %v1003
      %v1023 = vsel %vm522, 0.0, %v1005
      %v1024 = vsel %vm523, 0.0, %v1007
      %v1025 = vsel %vm524, 0.0, %v1009
      %v1026 = vsel %vm525, 0.0, %v1018
      %v1027 = vpack.c.bf16 %v988, %v987
      %v1028 = vpack.c.bf16 %v990, %v989
      %v1029 = vpack.c.bf16 %v992, %v991
      %v1030 = vpack.c.bf16 %v994, %v993
      %s1031 = scalar_lea.vmem %s3, 24
      %v1032 = vld [vmem:[%s1031] sm:$0xf]
      %v1034 = vsel %vm238, %v1027, 0
      %v1037 = vsel %vm238, %v1028, 0
      %v1040 = vsel %vm238, %v1029, 0
      %v1043 = vsel %vm238, %v1030, 0
      %v1046 = vsel %vm557, %v1032, 0
      %1048 = vmatpush.bf16.msra.mxu0 0
      %1049 = vmatpush.bf16.msra.mxu0 0
      %1050 = vmatpush.bf16.msra.mxu0 0
      %1051 = vmatpush.bf16.msra.mxu0 0
      %1052 = vmatpush.bf16.msra.mxu0 0
      %1053 = vmatpush.bf16.msra.mxu0 0
      %1054 = vmatpush.bf16.msra.mxu0 0
      %1055 = vmatpush.bf16.msra.mxu0 %v1046
      %1056 = vmatmul.bf16.gmra.mxu0 %v1034
      %v1057 = vpop.f32.mrf.mxu0
      %v1058 = vadd.f32 0.0, %v1057
      %v1059 = vpop.f32.mrf.mxu0
      %v1060 = vadd.f32 0.0, %v1059
      %1061 = vmatmul.bf16.gmra.mxu0 %v1037
      %v1062 = vpop.f32.mrf.mxu0
      %v1063 = vadd.f32 0.0, %v1062
      %v1064 = vpop.f32.mrf.mxu0
      %v1065 = vadd.f32 0.0, %v1064
      %1066 = vmatmul.bf16.gmra.mxu0 %v1040
      %v1067 = vpop.f32.mrf.mxu0
      %v1068 = vadd.f32 0.0, %v1067
      %v1069 = vpop.f32.mrf.mxu0
      %v1070 = vadd.f32 0.0, %v1069
      %1071 = vmatmul.bf16.gmra.mxu0 %v1043
      %v1072 = vpop.f32.mrf.mxu0
      %v1073 = vadd.f32 0.0, %v1072
      %v1074 = vpop.f32.mrf.mxu0
      %v1075 = vadd.f32 0.0, %v1074
      %1076 = vdwg.mxu0
      %v1077 = vadd.f32 %v938, %v1058
      %v1078 = vadd.f32 %v939, %v1060
      %v1079 = vadd.f32 %v940, %v1063
      %v1080 = vadd.f32 %v941, %v1065
      %v1081 = vadd.f32 %v942, %v1068
      %v1082 = vadd.f32 %v943, %v1070
      %v1083 = vadd.f32 %v944, %v1073
      %v1084 = vadd.f32 %v945, %v1075
      %v1085 = vpack.c.bf16 %v948, %v947
      %v1086 = vpack.c.bf16 %v950, %v949
      %v1087 = vpack.c.bf16 %v952, %v951
      %v1088 = vpack.c.bf16 %v954, %v953
      %s1089 = scalar_lea.vmem %s3, 28
      %v1090 = vld [vmem:[%s1089] sm:$0xf]
      %v1092 = vsel %vm238, %v1085, 0
      %v1095 = vsel %vm238, %v1086, 0
      %v1098 = vsel %vm238, %v1087, 0
      %v1101 = vsel %vm238, %v1088, 0
      %v1104 = vsel %vm557, %v1090, 0
      %1106 = vmatpush.bf16.msra.mxu0 0
      %1107 = vmatpush.bf16.msra.mxu0 0
      %1108 = vmatpush.bf16.msra.mxu0 0
      %1109 = vmatpush.bf16.msra.mxu0 0
      %1110 = vmatpush.bf16.msra.mxu0 0
      %1111 = vmatpush.bf16.msra.mxu0 0
      %1112 = vmatpush.bf16.msra.mxu0 0
      %1113 = vmatpush.bf16.msra.mxu0 %v1104
      %1114 = vmatmul.bf16.gmra.mxu0 %v1092
      %v1115 = vpop.f32.mrf.mxu0
      %v1116 = vadd.f32 0.0, %v1115
      %v1117 = vpop.f32.mrf.mxu0
      %v1118 = vadd.f32 0.0, %v1117
      %1119 = vmatmul.bf16.gmra.mxu0 %v1095
      %v1120 = vpop.f32.mrf.mxu0
      %v1121 = vadd.f32 0.0, %v1120
      %v1122 = vpop.f32.mrf.mxu0
      %v1123 = vadd.f32 0.0, %v1122
      %1124 = vmatmul.bf16.gmra.mxu0 %v1098
      %v1125 = vpop.f32.mrf.mxu0
      %v1126 = vadd.f32 0.0, %v1125
      %v1127 = vpop.f32.mrf.mxu0
      %v1128 = vadd.f32 0.0, %v1127
      %1129 = vmatmul.bf16.gmra.mxu0 %v1101
      %v1130 = vpop.f32.mrf.mxu0
      %v1131 = vadd.f32 0.0, %v1130
      %v1132 = vpop.f32.mrf.mxu0
      %v1133 = vadd.f32 0.0, %v1132
      %1134 = vdwg.mxu0
      %v1135 = vadd.f32 %v1077, %v1116
      %v1136 = vadd.f32 %v1078, %v1118
      %v1137 = vadd.f32 %v1079, %v1121
      %v1138 = vadd.f32 %v1080, %v1123
      %v1139 = vadd.f32 %v1081, %v1126
      %v1140 = vadd.f32 %v1082, %v1128
      %v1141 = vadd.f32 %v1083, %v1131
      %v1142 = vadd.f32 %v1084, %v1133
      %v1143 = vpack.c.bf16 %v1020, %v1019
      %v1144 = vpack.c.bf16 %v1022, %v1021
      %v1145 = vpack.c.bf16 %v1024, %v1023
      %v1146 = vpack.c.bf16 %v1026, %v1025
      %s1147 = scalar_lea.vmem %s3, 32
      %v1148 = vld [vmem:[%s1147] sm:$0xf]
      %v1150 = vsel %vm238, %v1143, 0
      %v1153 = vsel %vm238, %v1144, 0
      %v1156 = vsel %vm238, %v1145, 0
      %v1159 = vsel %vm238, %v1146, 0
      %v1162 = vsel %vm557, %v1148, 0
      %1164 = vmatpush.bf16.msra.mxu0 0
      %1165 = vmatpush.bf16.msra.mxu0 0
      %1166 = vmatpush.bf16.msra.mxu0 0
      %1167 = vmatpush.bf16.msra.mxu0 0
      %1168 = vmatpush.bf16.msra.mxu0 0
      %1169 = vmatpush.bf16.msra.mxu0 0
      %1170 = vmatpush.bf16.msra.mxu0 0
      %1171 = vmatpush.bf16.msra.mxu0 %v1162
      %1172 = vmatmul.bf16.gmra.mxu0 %v1150
      %v1173 = vpop.f32.mrf.mxu0
      %v1174 = vadd.f32 0.0, %v1173
      %v1175 = vpop.f32.mrf.mxu0
      %v1176 = vadd.f32 0.0, %v1175
      %1177 = vmatmul.bf16.gmra.mxu0 %v1153
      %v1178 = vpop.f32.mrf.mxu0
      %v1179 = vadd.f32 0.0, %v1178
      %v1180 = vpop.f32.mrf.mxu0
      %v1181 = vadd.f32 0.0, %v1180
      %1182 = vmatmul.bf16.gmra.mxu0 %v1156
      %v1183 = vpop.f32.mrf.mxu0
      %v1184 = vadd.f32 0.0, %v1183
      %v1185 = vpop.f32.mrf.mxu0
      %v1186 = vadd.f32 0.0, %v1185
      %1187 = vmatmul.bf16.gmra.mxu0 %v1159
      %v1188 = vpop.f32.mrf.mxu0
      %v1189 = vadd.f32 0.0, %v1188
      %v1190 = vpop.f32.mrf.mxu0
      %v1191 = vadd.f32 0.0, %v1190
      %1192 = vdwg.mxu0
      %v1193 = vadd.f32 %v1135, %v1174
      %v1194 = vadd.f32 %v1136, %v1176
      %v1195 = vadd.f32 %v1137, %v1179
      %v1196 = vadd.f32 %v1138, %v1181
      %v1197 = vadd.f32 %v1139, %v1184
      %v1198 = vadd.f32 %v1140, %v1186
      %v1199 = vadd.f32 %v1141, %v1189
      %v1200 = vadd.f32 %v1142, %v1191
      %v1201 = vpack.c.bf16 %v1193, %v1193
      %v1202 = vpack.c.bf16 %v1194, %v1194
      %v1203 = vpack.c.bf16 %v1195, %v1195
      %v1204 = vpack.c.bf16 %v1196, %v1196
      %v1205 = vpack.c.bf16 %v1197, %v1197
      %v1206 = vpack.c.bf16 %v1198, %v1198
      %v1207 = vpack.c.bf16 %v1199, %v1199
      %v1208 = vpack.c.bf16 %v1200, %v1200
      %vm1209 = vcmask 60416
      %1210 = vst.msk [vmem:[%s231] sm:$0xf] %vm1209, %v1201
      %1211 = vst.msk [vmem:[%s231 + $0x4] sm:$0xf] %vm1209, %v1202
      %1212 = vst.msk [vmem:[%s231 + $0x8] sm:$0xf] %vm1209, %v1203
      %1213 = vst.msk [vmem:[%s231 + $0xc] sm:$0xf] %vm1209, %v1204
      %1214 = vst.msk [vmem:[%s231 + $0x10] sm:$0xf] %vm1209, %v1205
      %1215 = vst.msk [vmem:[%s231 + $0x14] sm:$0xf] %vm1209, %v1206
      %1216 = vst.msk [vmem:[%s231 + $0x18] sm:$0xf] %vm1209, %v1207
      %1217 = vst.msk [vmem:[%s231 + $0x1c] sm:$0xf] %vm1209, %v1208
      %v1218 = vsel %vm238, %v1193, 0.0
      %v1219 = vsel %vm238, %v1194, 0.0
      %v1220 = vadd.f32 %v1218, %v1219
      %v1221 = vsel %vm238, %v1195, 0.0
      %v1222 = vadd.f32 %v1220, %v1221
      %v1223 = vsel %vm238, %v1196, 0.0
      %v1224 = vadd.f32 %v1222, %v1223
      %v1225 = vsel %vm238, %v1197, 0.0
      %v1226 = vadd.f32 %v1224, %v1225
      %v1227 = vsel %vm238, %v1198, 0.0
      %v1228 = vadd.f32 %v1226, %v1227
      %v1229 = vsel %vm238, %v1199, 0.0
      %v1230 = vadd.f32 %v1228, %v1229
      %v1231 = vsel %vm238, %v1200, 0.0
      %v1232 = vadd.f32 %v1230, %v1231
      %v1233 = vrot.slane %v1232, 4
      %v1234 = vadd.f32 %v1232, %v1233
      %v1235 = vrot.slane %v1234, 2
      %v1236 = vadd.f32 %v1234, %v1235
      %v1237 = vrot.slane %v1236, 1
      %v1238 = vadd.f32 %v1236, %v1237
      %vm1239 = vcmask 57344
      %1240 = vst.msk [vmem:[%s236] sm:$0x1] %vm1239, %v1238
      %v1241 = vmul.f32 %v1193, %v1193
      %v1242 = vmul.f32 %v1194, %v1194
      %v1243 = vmul.f32 %v1195, %v1195
      %v1244 = vmul.f32 %v1196, %v1196
      %v1245 = vmul.f32 %v1197, %v1197
      %v1246 = vmul.f32 %v1198, %v1198
      %v1247 = vmul.f32 %v1199, %v1199
      %v1248 = vmul.f32 %v1200, %v1200
      %v1249 = vsel %vm238, %v1241, 0.0
      %v1250 = vsel %vm238, %v1242, 0.0
      %v1251 = vadd.f32 %v1249, %v1250
      %v1252 = vsel %vm238, %v1243, 0.0
      %v1253 = vadd.f32 %v1251, %v1252
      %v1254 = vsel %vm238, %v1244, 0.0
      %v1255 = vadd.f32 %v1253, %v1254
      %v1256 = vsel %vm238, %v1245, 0.0
      %v1257 = vadd.f32 %v1255, %v1256
      %v1258 = vsel %vm238, %v1246, 0.0
      %v1259 = vadd.f32 %v1257, %v1258
      %v1260 = vsel %vm238, %v1247, 0.0
      %v1261 = vadd.f32 %v1259, %v1260
      %v1262 = vsel %vm238, %v1248, 0.0
      %v1263 = vadd.f32 %v1261, %v1262
      %v1264 = vrot.slane %v1263, 4
      %v1265 = vadd.f32 %v1263, %v1264
      %v1266 = vrot.slane %v1265, 2
      %v1267 = vadd.f32 %v1265, %v1266
      %v1268 = vrot.slane %v1267, 1
      %v1269 = vadd.f32 %v1267, %v1268
      %1270 = vst.msk [vmem:[%s236 + $0x1] sm:$0x1] %vm1239, %v1269
      %s1271 = smul.u32 8, %s17
      %p1272 = scmp.lt.s32.totalorder %s1271, 15
      %s1273 = scalar_select %p1272, %s1271, 15
      %s1274 = smul.addr %s1273, 4
      %s1275 = scalar_lea.vmem %s4, %s1274
      %p1276 = scmp.lt.s32.totalorder %s17, 1
      %s1277 = scalar_select %p1276, %s17, 1
      %s1278 = smul.addr %s1277, 2
      %s1279 = scalar_lea.vmem %s5, %s1278
      // Predicated region
      $region37: #{conv_block_forward.5} parent=35 // pred_check
        %p1280 = pneg %p124
      $region38: #{conv_block_forward.5} parent=35 // pred_check_branch
        %1282 = sbr.rel (%p1280) target = $region40
      $region39: #{conv_block_forward.5} parent=35 // pred_region
        %s1283 = smul.u32 8, %s17
      $region40: #{conv_block_forward.5} parent=35 // pred_fallthru
        _
      // Predicated region
      $region41: #{conv_block_forward.5} parent=35 // pred_check
        %p1284 = pneg %p150
      $region42: #{conv_block_forward.5} parent=35 // pred_check_branch
        %1286 = sbr.rel (%p1284) target = $region44
      $region43: #{conv_block_forward.5} parent=35 // pred_region
        _
      $region44: #{conv_block_forward.5} parent=35 // pred_fallthru
        _
    $region36: #{conv_block_forward.5} parent=5 // pred_fallthru
      _
    %p1287 = scmp.le.s32.totalorder 2, %s12
    // Predicated region
    $region45: #{conv_block_forward.5} parent=5 // pred_check
      %p1288 = pneg %p1287
    $region46: #{conv_block_forward.5} parent=5 // pred_check_branch
      %1290 = sbr.rel (%p1288) target = $region48
    $region47: #{conv_block_forward.5} parent=5 // pred_region
      %s1291 = ssub.s32 %s12, 2
      // Predicated region
      $region49: #{conv_block_forward.5} parent=47 // pred_check
        %p1292 = pneg %p130
      $region50: #{conv_block_forward.5} parent=47 // pred_check_branch
        %1294 = sbr.rel (%p1292) target = $region52
      $region51: #{conv_block_forward.5} parent=47 // pred_region
        %s1295 = smul.u32 8, %s18
        %p1296 = scmp.lt.s32.totalorder %s1295, 15
        %s1297 = scalar_select %p1296, %s1295, 15
        %s1298 = smul.addr %s1297, 4
        %s1299 = scalar_lea.vmem %s4, %s1298
      $region52: #{conv_block_forward.5} parent=47 // pred_fallthru
        _
      // Predicated region
      $region53: #{conv_block_forward.5} parent=47 // pred_check
        %p1300 = pneg %p156
      $region54: #{conv_block_forward.5} parent=47 // pred_check_branch
        %1302 = sbr.rel (%p1300) target = $region56
      $region55: #{conv_block_forward.5} parent=47 // pred_region
        %p1303 = scmp.lt.s32.totalorder %s18, 1
        %s1304 = scalar_select %p1303, %s18, 1
        %s1305 = smul.addr %s1304, 2
        %s1306 = scalar_lea.vmem %s5, %s1305
      $region56: #{conv_block_forward.5} parent=47 // pred_fallthru
        _
    $region48: #{conv_block_forward.5} parent=5 // pred_fallthru
      _
  $region6: #{conv_block_forward.5} parent=0 // loop_footer
    %s16 = sadd.s32 1, %s12
  $region7: #{conv_block_forward.5} parent=0 // loop_footer_branch
    %11 = sbr.rel target = $region3
  $region8: #{conv_block_forward.5} parent=0 // loop_exit
    _

</llo_original>
